<compile_context>
chip_gen: v5e
topology: v5e:2x2
jax: 0.10.0
libtpu: 0.0.40
codegen_flags: <defaults>
</compile_context>

<pallas_src>
import functools

import jax
import jax.numpy as jnp
import numpy as np
from jax.experimental import pallas as pl
from jax.experimental.pallas import tpu as pltpu

NUM_HEADS = 2


# ----------------------------------------------------------------------------
# Fused Pallas kernel: one grid step == one past step p.
# ----------------------------------------------------------------------------
def _fused_charnet_kernel(
    board_ref, order_ref, msg_ref, other_ref, me_ref,
    fcb1_w, fcb1_b, fcb2_w, fcb2_b, fcb3_w, fcb3_b,
    fco1_w, fco1_b, fco2_w, fco2_b,
    fcm1_w, fcm1_b, fcm2_w, fcm2_b,
    wq, bq, wk, bk, wv, bv, wo, bo,
    fc1_wx, fc1_wother, fc1_wme, fc1_b,
    fc2_w, fc2_b,
    echar_ref, wts_ref,
    *, batch, seq, heads):
    B, S, H = batch, seq, heads

    def dense(x, w_ref, b_ref, relu=False):
        # bf16 operands on the MXU, f32 accumulation, f32 bias / ReLU.
        y = jnp.dot(x.astype(jnp.bfloat16), w_ref[...],
                    preferred_element_type=jnp.float32) + b_ref[...]
        return jnp.maximum(y, 0.0) if relu else y

    # ---- board / order / message MLP branches on flattened (B*S, .) rows ----
    qfeat = dense(dense(dense(board_ref[0], fcb1_w, fcb1_b, True),
                        fcb2_w, fcb2_b, True),
                  fcb3_w, fcb3_b, True)                        # (M, E) query
    vfeat = dense(dense(order_ref[0], fco1_w, fco1_b, True),
                  fco2_w, fco2_b, True)                        # (M, E) value
    kfeat = dense(dense(msg_ref[0], fcm1_w, fcm1_b, True),
                  fcm2_w, fcm2_b, True)                        # (M, E) key

    E = qfeat.shape[-1]
    D = E // H
    scale = 1.0 / float(np.sqrt(D))

    # ---- Q/K/V projections: full (M,E)x(E,E) matmuls (no per-head einsums) ----
    qp = dense(qfeat, wq, bq)
    kp = dense(kfeat, wk, bk)
    vp = dense(vfeat, wv, bv)

    attn_sum = None   # sum over heads of (sum over seq of ctx_h) @ Wo[h-slice]
    wts_acc = None    # sum over heads of softmax probabilities
    for h in range(H):                       # static loop, H == 2
        lo, hi = h * D, (h + 1) * D
        qh = qp[:, lo:hi].reshape(B, S, D)
        kh = kp[:, lo:hi].reshape(B, S, D)
        vh = vp[:, lo:hi].reshape(B, S, D)
        s = jnp.einsum('bsd,btd->bst',
                       qh.astype(jnp.bfloat16), kh.astype(jnp.bfloat16),
                       preferred_element_type=jnp.float32) * scale
        s = s - jnp.max(s, axis=-1, keepdims=True)             # f32 softmax
        p = jnp.exp(s)
        p = p * pl.reciprocal(jnp.sum(p, axis=-1, keepdims=True), approx=True)
        wts_acc = p if wts_acc is None else wts_acc + p
        ctx = jnp.einsum('bst,btd->bsd',
                         p.astype(jnp.bfloat16), vh.astype(jnp.bfloat16),
                         preferred_element_type=jnp.float32)   # (B, S, D)
        # Sum over the sequence BEFORE the (linear) output projection; the
        # per-head static slice of Wo is identical to concat-heads + one matmul.
        ctx_sum = jnp.sum(ctx, axis=1)                          # (B, D)
        oh = jnp.dot(ctx_sum.astype(jnp.bfloat16), wo[lo:hi, :],
                     preferred_element_type=jnp.float32)        # (B, E)
        attn_sum = oh if attn_sum is None else attn_sum + oh

    x = attn_sum + float(S) * bo[...]                           # (B, E)

    # ---- fused concat([x, other, me]) @ fc1_w  as a split matmul ----
    other = other_ref[0]
    me = me_ref[0]
    hdn = (jnp.dot(x.astype(jnp.bfloat16), fc1_wx[...],
                   preferred_element_type=jnp.float32)
           + jnp.dot(other.astype(jnp.bfloat16), fc1_wother[...],
                     preferred_element_type=jnp.float32)
           + jnp.dot(me.astype(jnp.bfloat16), fc1_wme[...],
                     preferred_element_type=jnp.float32)
           + fc1_b[...])
    hdn = jnp.maximum(hdn, 0.0)
    e = jnp.dot(hdn.astype(jnp.bfloat16), fc2_w[...],
                preferred_element_type=jnp.float32) + fc2_b[...]

    echar_ref[0] = e                                            # (B, C)
    wts_ref[0] = wts_acc * (1.0 / H)                            # (B, S, S)


# ----------------------------------------------------------------------------
# One-time parameter packing (bf16 weights, (1,N) f32 biases, fc1 split).
# ----------------------------------------------------------------------------
def pack_params(params):
    wcast = lambda w: jnp.asarray(w, jnp.bfloat16)
    bcast = lambda b: jnp.asarray(b, jnp.float32).reshape(1, -1)
    a = params['attn']
    E = a['wq'].shape[0]
    A = (params['fc1_w'].shape[0] - E) // 2
    return (
        wcast(params['fcb1_w']), bcast(params['fcb1_b']),
        wcast(params['fcb2_w']), bcast(params['fcb2_b']),
        wcast(params['fcb3_w']), bcast(params['fcb3_b']),
        wcast(params['fco1_w']), bcast(params['fco1_b']),
        wcast(params['fco2_w']), bcast(params['fco2_b']),
        wcast(params['fcm1_w']), bcast(params['fcm1_b']),
        wcast(params['fcm2_w']), bcast(params['fcm2_b']),
        wcast(a['wq']), bcast(a['bq']),
        wcast(a['wk']), bcast(a['bk']),
        wcast(a['wv']), bcast(a['bv']),
        wcast(a['wo']), bcast(a['bo']),
        wcast(params['fc1_w'][:E]), wcast(params['fc1_w'][E:E + A]),
        wcast(params['fc1_w'][E + A:]), bcast(params['fc1_b']),
        wcast(params['fc2_w']), bcast(params['fc2_b']),
    )


# ----------------------------------------------------------------------------
# Forward: one fused pallas_call over a (num_past,) parallel grid.
# ----------------------------------------------------------------------------
@jax.jit
def fc_charnet_forward(packed, board, order, message, other_ind, me_ind):
    b, P, S, L, F = board.shape
    M = b * S
    C = packed[-1].shape[-1]          # fc2 bias: (1, char_output_dim)

    # Layout plumbing (tiny, fused by XLA inside the jit).
    board_r = board.transpose(1, 0, 2, 3, 4).reshape(P, M, L * F)
    order_r = order.transpose(1, 0, 2, 3).reshape(P, M, order.shape[-1])
    msg_r = message.transpose(1, 0, 2, 3).reshape(P, M, message.shape[-1])
    other_r = other_ind.transpose(1, 0, 2)          # (P, B, A)
    me_r = me_ind.transpose(1, 0, 2)                # (P, B, A)

    data_specs = [
        pl.BlockSpec((1, M, board_r.shape[-1]), lambda p: (p, 0, 0)),
        pl.BlockSpec((1, M, order_r.shape[-1]), lambda p: (p, 0, 0)),
        pl.BlockSpec((1, M, msg_r.shape[-1]), lambda p: (p, 0, 0)),
        pl.BlockSpec((1, b, other_r.shape[-1]), lambda p: (p, 0, 0)),
        pl.BlockSpec((1, b, me_r.shape[-1]), lambda p: (p, 0, 0)),
    ]
    # Weights/biases: whole-array blocks, constant index_map -> DMA'd once and
    # kept resident in VMEM across the num_past grid axis.
    param_specs = [pl.BlockSpec(w.shape, lambda p: (0, 0)) for w in packed]

    kernel = functools.partial(_fused_charnet_kernel,
                               batch=b, seq=S, heads=NUM_HEADS)
    e_char_total, wts_all = pl.pallas_call(
        kernel,
        grid=(P,),
        out_shape=(jax.ShapeDtypeStruct((P, b, C), jnp.float32),
                   jax.ShapeDtypeStruct((P, b, S, S), jnp.float32)),
        in_specs=data_specs + param_specs,
        out_specs=(pl.BlockSpec((1, b, C), lambda p: (p, 0, 0)),
                   pl.BlockSpec((1, b, S, S), lambda p: (p, 0, 0, 0))),
        compiler_params=pltpu.CompilerParams(
            dimension_semantics=("parallel",)),   # past steps shard across v7x TCs
    )(board_r, order_r, msg_r, other_r, me_r, *packed)

    final_e_char = e_char_total.sum(axis=0)
    weights = wts_all[-1]     # torch returns only the last past step's weights
    return final_e_char, weights, e_char_total


# ----------------------------------------------------------------------------
# Pure-JAX f32 reference (for correctness check).
# ----------------------------------------------------------------------------
def ref_forward(params, board, order, message, other_ind, me_ind, num_heads=NUM_HEADS):
    def lin(x, w, bb, relu=False):
        y = x @ w + bb
        return jnp.maximum(y, 0.0) if relu else y

    def ref_mha(q, k, v, ap):
        B, S, E = q.shape
        H = num_heads
        D = E // H
        qp = (q @ ap['wq'] + ap['bq']).reshape(B, S, H, D).transpose(0, 2, 1, 3)
        kp = (k @ ap['wk'] + ap['bk']).reshape(B, S, H, D).transpose(0, 2, 1, 3)
        vp = (v @ ap['wv'] + ap['bv']).reshape(B, S, H, D).transpose(0, 2, 1, 3)
        s = jnp.einsum('bhsd,bhtd->bhst', qp * (1.0 / np.sqrt(D)), kp)
        p = jax.nn.softmax(s, axis=-1)
        ctx = jnp.einsum('bhst,bhtd->bhsd', p, vp)
        ctx = ctx.transpose(0, 2, 1, 3).reshape(B, S, E)
        out = ctx @ ap['wo'] + ap['bo']
        return out.sum(axis=1), p.mean(axis=1)

    b, num_past, num_step, num_loc, nbf = board.shape
    outs = []
    weights = None
    for p in range(num_past):
        bd = board[:, p].reshape(b * num_step, num_loc * nbf)
        bf = lin(lin(lin(bd, params['fcb1_w'], params['fcb1_b'], True),
                     params['fcb2_w'], params['fcb2_b'], True),
                 params['fcb3_w'], params['fcb3_b'], True).reshape(b, num_step, -1)
        od = order[:, p].reshape(b * num_step, -1)
        of = lin(lin(od, params['fco1_w'], params['fco1_b'], True),
                 params['fco2_w'], params['fco2_b'], True).reshape(b, num_step, -1)
        mg = message[:, p].reshape(b * num_step, -1)
        mf = lin(lin(mg, params['fcm1_w'], params['fcm1_b'], True),
                 params['fcm2_w'], params['fcm2_b'], True).reshape(b, num_step, -1)
        x, weights = ref_mha(bf, mf, of, params['attn'])
        x = jnp.concatenate([x, other_ind[:, p], me_ind[:, p]], axis=-1)
        x = lin(x, params['fc1_w'], params['fc1_b'], True)
        x = lin(x, params['fc2_w'], params['fc2_b'], False)
        outs.append(x)
    tot = jnp.stack(outs)
    return tot.sum(axis=0), weights, tot


# ----------------------------------------------------------------------------
# Deterministic parameter init (shapes from FC_CharNet.__init__; weights stored
# transposed w.r.t. torch, i.e. (in_features, out_features)).
# ----------------------------------------------------------------------------
def init_params(key, cfg):
    E = cfg['message_output_dim']
    keys = iter(jax.random.split(key, 32))

    def lin_init(fan_in, fan_out):
        bound = 1.0 / float(np.sqrt(fan_in))
        w = jax.random.uniform(next(keys), (fan_in, fan_out), jnp.float32, -bound, bound)
        b = jax.random.uniform(next(keys), (fan_out,), jnp.float32, -bound, bound)
        return w, b

    p = {}
    p['fcb1_w'], p['fcb1_b'] = lin_init(cfg['num_loc'] * cfg['board_feat'], 1024)
    p['fcb2_w'], p['fcb2_b'] = lin_init(1024, 256)
    p['fcb3_w'], p['fcb3_b'] = lin_init(256, cfg['board_output_dim'])
    p['fco1_w'], p['fco1_b'] = lin_init(cfg['order_feat'], 128)
    p['fco2_w'], p['fco2_b'] = lin_init(128, cfg['order_output_dim'])
    p['fcm1_w'], p['fcm1_b'] = lin_init(2 * cfg['msg_feat'], 64)
    p['fcm2_w'], p['fcm2_b'] = lin_init(64, cfg['message_output_dim'])
    p['fc1_w'], p['fc1_b'] = lin_init(E + 2 * cfg['num_agent'], cfg['char_output_dim'])
    p['fc2_w'], p['fc2_b'] = lin_init(cfg['char_output_dim'], cfg['char_output_dim'])
    attn = {}
    attn['wq'], attn['bq'] = lin_init(E, E)
    attn['wk'], attn['bk'] = lin_init(E, E)
    attn['wv'], attn['bv'] = lin_init(E, E)
    attn['wo'], attn['bo'] = lin_init(E, E)
    p['attn'] = attn
    return p


# ----------------------------------------------------------------------------
if __name__ == "__main__":
    cfg = dict(
        num_loc=4, board_feat=8,
        order_feat=8, msg_feat=8,
        board_output_dim=32, order_output_dim=32, message_output_dim=32,
        num_agent=4, char_output_dim=16,
    )
    B, P, S = 2, 2, 8   # batch, num_past, num_step

    key = jax.random.PRNGKey(0)
    kp, kb, ko, km, k1, k2 = jax.random.split(key, 6)
    params = init_params(kp, cfg)
    packed = pack_params(params)     # one-time packing (bf16 weights, split fc1)

    board = jax.random.normal(kb, (B, P, S, cfg['num_loc'], cfg['board_feat']), jnp.float32)
    order = jax.random.normal(ko, (B, P, S, cfg['order_feat']), jnp.float32)
    message = jax.random.normal(km, (B, P, S, 2 * cfg['msg_feat']), jnp.float32)
    other_ind = jax.random.normal(k1, (B, P, cfg['num_agent']), jnp.float32)
    me_ind = jax.random.normal(k2, (B, P, cfg['num_agent']), jnp.float32)

    final_e, weights, e_total = fc_charnet_forward(
        packed, board, order, message, other_ind, me_ind)
    jax.block_until_ready((final_e, weights, e_total))

    # sanity check against pure-JAX f32 reference (bf16 matmuls are within 5e-2)
    rf, rw, rt = ref_forward(params, board, order, message, other_ind, me_ind)
    np.testing.assert_allclose(np.asarray(final_e), np.asarray(rf), rtol=5e-2, atol=5e-2)
    np.testing.assert_allclose(np.asarray(weights), np.asarray(rw), rtol=5e-2, atol=5e-2)
    np.testing.assert_allclose(np.asarray(e_total), np.asarray(rt), rtol=5e-2, atol=5e-2)

    print("KERNEL_OK")
</pallas_src>

<mosaic_0001>
module attributes {stable_mosaic.version = 11 : i64} {
  func.func @_fused_charnet_kernel(%arg0: i32, %arg1: memref<1x16x32xf32, #tpu.memory_space<vmem>>, %arg2: memref<1x16x8xf32, #tpu.memory_space<vmem>>, %arg3: memref<1x16x16xf32, #tpu.memory_space<vmem>>, %arg4: memref<1x2x4xf32, #tpu.memory_space<vmem>>, %arg5: memref<1x2x4xf32, #tpu.memory_space<vmem>>, %arg6: memref<32x1024xbf16, #tpu.memory_space<vmem>>, %arg7: memref<1x1024xf32, #tpu.memory_space<vmem>>, %arg8: memref<1024x256xbf16, #tpu.memory_space<vmem>>, %arg9: memref<1x256xf32, #tpu.memory_space<vmem>>, %arg10: memref<256x32xbf16, #tpu.memory_space<vmem>>, %arg11: memref<1x32xf32, #tpu.memory_space<vmem>>, %arg12: memref<8x128xbf16, #tpu.memory_space<vmem>>, %arg13: memref<1x128xf32, #tpu.memory_space<vmem>>, %arg14: memref<128x32xbf16, #tpu.memory_space<vmem>>, %arg15: memref<1x32xf32, #tpu.memory_space<vmem>>, %arg16: memref<16x64xbf16, #tpu.memory_space<vmem>>, %arg17: memref<1x64xf32, #tpu.memory_space<vmem>>, %arg18: memref<64x32xbf16, #tpu.memory_space<vmem>>, %arg19: memref<1x32xf32, #tpu.memory_space<vmem>>, %arg20: memref<32x32xbf16, #tpu.memory_space<vmem>>, %arg21: memref<1x32xf32, #tpu.memory_space<vmem>>, %arg22: memref<32x32xbf16, #tpu.memory_space<vmem>>, %arg23: memref<1x32xf32, #tpu.memory_space<vmem>>, %arg24: memref<32x32xbf16, #tpu.memory_space<vmem>>, %arg25: memref<1x32xf32, #tpu.memory_space<vmem>>, %arg26: memref<32x32xbf16, #tpu.memory_space<vmem>>, %arg27: memref<1x32xf32, #tpu.memory_space<vmem>>, %arg28: memref<32x16xbf16, #tpu.memory_space<vmem>>, %arg29: memref<4x16xbf16, #tpu.memory_space<vmem>>, %arg30: memref<4x16xbf16, #tpu.memory_space<vmem>>, %arg31: memref<1x16xf32, #tpu.memory_space<vmem>>, %arg32: memref<16x16xbf16, #tpu.memory_space<vmem>>, %arg33: memref<1x16xf32, #tpu.memory_space<vmem>>, %arg34: memref<1x2x16xf32, #tpu.memory_space<vmem>>, %arg35: memref<1x2x8x8xf32, #tpu.memory_space<vmem>>) attributes {dimension_semantics = [#tpu.dimension_semantics<parallel>], iteration_bounds = array<i64: 2>, scalar_prefetch = 0 : i64, scratch_operands = 0 : i64, tpu.core_type = #tpu.core_type<tc>, window_params = [{transform_indices = @transform_0, window_bounds = array<i64: 1, 16, 32>}, {transform_indices = @transform_1, window_bounds = array<i64: 1, 16, 8>}, {transform_indices = @transform_2, window_bounds = array<i64: 1, 16, 16>}, {transform_indices = @transform_3, window_bounds = array<i64: 1, 2, 4>}, {transform_indices = @transform_4, window_bounds = array<i64: 1, 2, 4>}, {pipeline_mode = #tpu.pipeline_mode<synchronous>, transform_indices = @transform_5, window_bounds = array<i64: 32, 1024>}, {pipeline_mode = #tpu.pipeline_mode<synchronous>, transform_indices = @transform_6, window_bounds = array<i64: 1, 1024>}, {pipeline_mode = #tpu.pipeline_mode<synchronous>, transform_indices = @transform_7, window_bounds = array<i64: 1024, 256>}, {pipeline_mode = #tpu.pipeline_mode<synchronous>, transform_indices = @transform_8, window_bounds = array<i64: 1, 256>}, {pipeline_mode = #tpu.pipeline_mode<synchronous>, transform_indices = @transform_9, window_bounds = array<i64: 256, 32>}, {pipeline_mode = #tpu.pipeline_mode<synchronous>, transform_indices = @transform_10, window_bounds = array<i64: 1, 32>}, {pipeline_mode = #tpu.pipeline_mode<synchronous>, transform_indices = @transform_11, window_bounds = array<i64: 8, 128>}, {pipeline_mode = #tpu.pipeline_mode<synchronous>, transform_indices = @transform_12, window_bounds = array<i64: 1, 128>}, {pipeline_mode = #tpu.pipeline_mode<synchronous>, transform_indices = @transform_13, window_bounds = array<i64: 128, 32>}, {pipeline_mode = #tpu.pipeline_mode<synchronous>, transform_indices = @transform_14, window_bounds = array<i64: 1, 32>}, {pipeline_mode = #tpu.pipeline_mode<synchronous>, transform_indices = @transform_15, window_bounds = array<i64: 16, 64>}, {pipeline_mode = #tpu.pipeline_mode<synchronous>, transform_indices = @transform_16, window_bounds = array<i64: 1, 64>}, {pipeline_mode = #tpu.pipeline_mode<synchronous>, transform_indices = @transform_17, window_bounds = array<i64: 64, 32>}, {pipeline_mode = #tpu.pipeline_mode<synchronous>, transform_indices = @transform_18, window_bounds = array<i64: 1, 32>}, {pipeline_mode = #tpu.pipeline_mode<synchronous>, transform_indices = @transform_19, window_bounds = array<i64: 32, 32>}, {pipeline_mode = #tpu.pipeline_mode<synchronous>, transform_indices = @transform_20, window_bounds = array<i64: 1, 32>}, {pipeline_mode = #tpu.pipeline_mode<synchronous>, transform_indices = @transform_21, window_bounds = array<i64: 32, 32>}, {pipeline_mode = #tpu.pipeline_mode<synchronous>, transform_indices = @transform_22, window_bounds = array<i64: 1, 32>}, {pipeline_mode = #tpu.pipeline_mode<synchronous>, transform_indices = @transform_23, window_bounds = array<i64: 32, 32>}, {pipeline_mode = #tpu.pipeline_mode<synchronous>, transform_indices = @transform_24, window_bounds = array<i64: 1, 32>}, {pipeline_mode = #tpu.pipeline_mode<synchronous>, transform_indices = @transform_25, window_bounds = array<i64: 32, 32>}, {pipeline_mode = #tpu.pipeline_mode<synchronous>, transform_indices = @transform_26, window_bounds = array<i64: 1, 32>}, {pipeline_mode = #tpu.pipeline_mode<synchronous>, transform_indices = @transform_27, window_bounds = array<i64: 32, 16>}, {pipeline_mode = #tpu.pipeline_mode<synchronous>, transform_indices = @transform_28, window_bounds = array<i64: 4, 16>}, {pipeline_mode = #tpu.pipeline_mode<synchronous>, transform_indices = @transform_29, window_bounds = array<i64: 4, 16>}, {pipeline_mode = #tpu.pipeline_mode<synchronous>, transform_indices = @transform_30, window_bounds = array<i64: 1, 16>}, {pipeline_mode = #tpu.pipeline_mode<synchronous>, transform_indices = @transform_31, window_bounds = array<i64: 16, 16>}, {pipeline_mode = #tpu.pipeline_mode<synchronous>, transform_indices = @transform_32, window_bounds = array<i64: 1, 16>}, {transform_indices = @transform_33, window_bounds = array<i64: 1, 2, 16>}, {transform_indices = @transform_34, window_bounds = array<i64: 1, 2, 8, 8>}]} {
    %c0 = arith.constant 0 : index
    %c0_0 = arith.constant 0 : index
    %c0_1 = arith.constant 0 : index
    %0 = vector.load %arg1[%c0, %c0_0, %c0_1] : memref<1x16x32xf32, #tpu.memory_space<vmem>>, vector<1x16x32xf32>
    %1 = vector.shape_cast %0 : vector<1x16x32xf32> to vector<16x32xf32>
    %2 = arith.truncf %1 : vector<16x32xf32> to vector<16x32xbf16>
    %c0_2 = arith.constant 0 : index
    %c0_3 = arith.constant 0 : index
    %3 = vector.load %arg6[%c0_2, %c0_3] : memref<32x1024xbf16, #tpu.memory_space<vmem>>, vector<32x1024xbf16>
    %cst = arith.constant dense<0.000000e+00> : vector<16x1024xf32>
    %4 = tpu.matmul %2, %3, %cst {dimension_numbers = #tpu.dot_dimension_numbers<[1], [0], [0], [1], [0, 0, 1, 1], [], []>} : vector<16x32xbf16>, vector<32x1024xbf16>, vector<16x1024xf32> -> vector<16x1024xf32>
    %c0_4 = arith.constant 0 : index
    %c0_5 = arith.constant 0 : index
    %5 = vector.load %arg7[%c0_4, %c0_5] : memref<1x1024xf32, #tpu.memory_space<vmem>>, vector<1x1024xf32>
    %6 = vector.broadcast %5 : vector<1x1024xf32> to vector<16x1024xf32>
    %7 = arith.addf %4, %6 : vector<16x1024xf32>
    %cst_6 = arith.constant 0.000000e+00 : f32
    %8 = vector.broadcast %cst_6 : f32 to vector<16x1024xf32>
    %9 = arith.maximumf %7, %8 : vector<16x1024xf32>
    %10 = arith.truncf %9 : vector<16x1024xf32> to vector<16x1024xbf16>
    %c0_7 = arith.constant 0 : index
    %c0_8 = arith.constant 0 : index
    %11 = vector.load %arg8[%c0_7, %c0_8] : memref<1024x256xbf16, #tpu.memory_space<vmem>>, vector<1024x256xbf16>
    %cst_9 = arith.constant dense<0.000000e+00> : vector<16x256xf32>
    %12 = tpu.matmul %10, %11, %cst_9 {dimension_numbers = #tpu.dot_dimension_numbers<[1], [0], [0], [1], [0, 0, 1, 1], [], []>} : vector<16x1024xbf16>, vector<1024x256xbf16>, vector<16x256xf32> -> vector<16x256xf32>
    %c0_10 = arith.constant 0 : index
    %c0_11 = arith.constant 0 : index
    %13 = vector.load %arg9[%c0_10, %c0_11] : memref<1x256xf32, #tpu.memory_space<vmem>>, vector<1x256xf32>
    %14 = vector.broadcast %13 : vector<1x256xf32> to vector<16x256xf32>
    %15 = arith.addf %12, %14 : vector<16x256xf32>
    %cst_12 = arith.constant 0.000000e+00 : f32
    %16 = vector.broadcast %cst_12 : f32 to vector<16x256xf32>
    %17 = arith.maximumf %15, %16 : vector<16x256xf32>
    %18 = arith.truncf %17 : vector<16x256xf32> to vector<16x256xbf16>
    %c0_13 = arith.constant 0 : index
    %c0_14 = arith.constant 0 : index
    %19 = vector.load %arg10[%c0_13, %c0_14] : memref<256x32xbf16, #tpu.memory_space<vmem>>, vector<256x32xbf16>
    %cst_15 = arith.constant dense<0.000000e+00> : vector<16x32xf32>
    %20 = tpu.matmul %18, %19, %cst_15 {dimension_numbers = #tpu.dot_dimension_numbers<[1], [0], [0], [1], [0, 0, 1, 1], [], []>} : vector<16x256xbf16>, vector<256x32xbf16>, vector<16x32xf32> -> vector<16x32xf32>
    %c0_16 = arith.constant 0 : index
    %c0_17 = arith.constant 0 : index
    %21 = vector.load %arg11[%c0_16, %c0_17] : memref<1x32xf32, #tpu.memory_space<vmem>>, vector<1x32xf32>
    %22 = vector.broadcast %21 : vector<1x32xf32> to vector<16x32xf32>
    %23 = arith.addf %20, %22 : vector<16x32xf32>
    %cst_18 = arith.constant 0.000000e+00 : f32
    %24 = vector.broadcast %cst_18 : f32 to vector<16x32xf32>
    %25 = arith.maximumf %23, %24 : vector<16x32xf32>
    %c0_19 = arith.constant 0 : index
    %c0_20 = arith.constant 0 : index
    %c0_21 = arith.constant 0 : index
    %26 = vector.load %arg2[%c0_19, %c0_20, %c0_21] : memref<1x16x8xf32, #tpu.memory_space<vmem>>, vector<1x16x8xf32>
    %27 = vector.shape_cast %26 : vector<1x16x8xf32> to vector<16x8xf32>
    %28 = arith.truncf %27 : vector<16x8xf32> to vector<16x8xbf16>
    %c0_22 = arith.constant 0 : index
    %c0_23 = arith.constant 0 : index
    %29 = vector.load %arg12[%c0_22, %c0_23] : memref<8x128xbf16, #tpu.memory_space<vmem>>, vector<8x128xbf16>
    %cst_24 = arith.constant dense<0.000000e+00> : vector<16x128xf32>
    %30 = tpu.matmul %28, %29, %cst_24 {dimension_numbers = #tpu.dot_dimension_numbers<[1], [0], [0], [1], [0, 0, 1, 1], [], []>} : vector<16x8xbf16>, vector<8x128xbf16>, vector<16x128xf32> -> vector<16x128xf32>
    %c0_25 = arith.constant 0 : index
    %c0_26 = arith.constant 0 : index
    %31 = vector.load %arg13[%c0_25, %c0_26] : memref<1x128xf32, #tpu.memory_space<vmem>>, vector<1x128xf32>
    %32 = vector.broadcast %31 : vector<1x128xf32> to vector<16x128xf32>
    %33 = arith.addf %30, %32 : vector<16x128xf32>
    %cst_27 = arith.constant 0.000000e+00 : f32
    %34 = vector.broadcast %cst_27 : f32 to vector<16x128xf32>
    %35 = arith.maximumf %33, %34 : vector<16x128xf32>
    %36 = arith.truncf %35 : vector<16x128xf32> to vector<16x128xbf16>
    %c0_28 = arith.constant 0 : index
    %c0_29 = arith.constant 0 : index
    %37 = vector.load %arg14[%c0_28, %c0_29] : memref<128x32xbf16, #tpu.memory_space<vmem>>, vector<128x32xbf16>
    %cst_30 = arith.constant dense<0.000000e+00> : vector<16x32xf32>
    %38 = tpu.matmul %36, %37, %cst_30 {dimension_numbers = #tpu.dot_dimension_numbers<[1], [0], [0], [1], [0, 0, 1, 1], [], []>} : vector<16x128xbf16>, vector<128x32xbf16>, vector<16x32xf32> -> vector<16x32xf32>
    %c0_31 = arith.constant 0 : index
    %c0_32 = arith.constant 0 : index
    %39 = vector.load %arg15[%c0_31, %c0_32] : memref<1x32xf32, #tpu.memory_space<vmem>>, vector<1x32xf32>
    %40 = vector.broadcast %39 : vector<1x32xf32> to vector<16x32xf32>
    %41 = arith.addf %38, %40 : vector<16x32xf32>
    %cst_33 = arith.constant 0.000000e+00 : f32
    %42 = vector.broadcast %cst_33 : f32 to vector<16x32xf32>
    %43 = arith.maximumf %41, %42 : vector<16x32xf32>
    %c0_34 = arith.constant 0 : index
    %c0_35 = arith.constant 0 : index
    %c0_36 = arith.constant 0 : index
    %44 = vector.load %arg3[%c0_34, %c0_35, %c0_36] : memref<1x16x16xf32, #tpu.memory_space<vmem>>, vector<1x16x16xf32>
    %45 = vector.shape_cast %44 : vector<1x16x16xf32> to vector<16x16xf32>
    %46 = arith.truncf %45 : vector<16x16xf32> to vector<16x16xbf16>
    %c0_37 = arith.constant 0 : index
    %c0_38 = arith.constant 0 : index
    %47 = vector.load %arg16[%c0_37, %c0_38] : memref<16x64xbf16, #tpu.memory_space<vmem>>, vector<16x64xbf16>
    %cst_39 = arith.constant dense<0.000000e+00> : vector<16x64xf32>
    %48 = tpu.matmul %46, %47, %cst_39 {dimension_numbers = #tpu.dot_dimension_numbers<[1], [0], [0], [1], [0, 0, 1, 1], [], []>} : vector<16x16xbf16>, vector<16x64xbf16>, vector<16x64xf32> -> vector<16x64xf32>
    %c0_40 = arith.constant 0 : index
    %c0_41 = arith.constant 0 : index
    %49 = vector.load %arg17[%c0_40, %c0_41] : memref<1x64xf32, #tpu.memory_space<vmem>>, vector<1x64xf32>
    %50 = vector.broadcast %49 : vector<1x64xf32> to vector<16x64xf32>
    %51 = arith.addf %48, %50 : vector<16x64xf32>
    %cst_42 = arith.constant 0.000000e+00 : f32
    %52 = vector.broadcast %cst_42 : f32 to vector<16x64xf32>
    %53 = arith.maximumf %51, %52 : vector<16x64xf32>
    %54 = arith.truncf %53 : vector<16x64xf32> to vector<16x64xbf16>
    %c0_43 = arith.constant 0 : index
    %c0_44 = arith.constant 0 : index
    %55 = vector.load %arg18[%c0_43, %c0_44] : memref<64x32xbf16, #tpu.memory_space<vmem>>, vector<64x32xbf16>
    %cst_45 = arith.constant dense<0.000000e+00> : vector<16x32xf32>
    %56 = tpu.matmul %54, %55, %cst_45 {dimension_numbers = #tpu.dot_dimension_numbers<[1], [0], [0], [1], [0, 0, 1, 1], [], []>} : vector<16x64xbf16>, vector<64x32xbf16>, vector<16x32xf32> -> vector<16x32xf32>
    %c0_46 = arith.constant 0 : index
    %c0_47 = arith.constant 0 : index
    %57 = vector.load %arg19[%c0_46, %c0_47] : memref<1x32xf32, #tpu.memory_space<vmem>>, vector<1x32xf32>
    %58 = vector.broadcast %57 : vector<1x32xf32> to vector<16x32xf32>
    %59 = arith.addf %56, %58 : vector<16x32xf32>
    %cst_48 = arith.constant 0.000000e+00 : f32
    %60 = vector.broadcast %cst_48 : f32 to vector<16x32xf32>
    %61 = arith.maximumf %59, %60 : vector<16x32xf32>
    %62 = arith.truncf %25 : vector<16x32xf32> to vector<16x32xbf16>
    %c0_49 = arith.constant 0 : index
    %c0_50 = arith.constant 0 : index
    %63 = vector.load %arg20[%c0_49, %c0_50] : memref<32x32xbf16, #tpu.memory_space<vmem>>, vector<32x32xbf16>
    %cst_51 = arith.constant dense<0.000000e+00> : vector<16x32xf32>
    %64 = tpu.matmul %62, %63, %cst_51 {dimension_numbers = #tpu.dot_dimension_numbers<[1], [0], [0], [1], [0, 0, 1, 1], [], []>} : vector<16x32xbf16>, vector<32x32xbf16>, vector<16x32xf32> -> vector<16x32xf32>
    %c0_52 = arith.constant 0 : index
    %c0_53 = arith.constant 0 : index
    %65 = vector.load %arg21[%c0_52, %c0_53] : memref<1x32xf32, #tpu.memory_space<vmem>>, vector<1x32xf32>
    %66 = vector.broadcast %65 : vector<1x32xf32> to vector<16x32xf32>
    %67 = arith.addf %64, %66 : vector<16x32xf32>
    %68 = arith.truncf %61 : vector<16x32xf32> to vector<16x32xbf16>
    %c0_54 = arith.constant 0 : index
    %c0_55 = arith.constant 0 : index
    %69 = vector.load %arg22[%c0_54, %c0_55] : memref<32x32xbf16, #tpu.memory_space<vmem>>, vector<32x32xbf16>
    %cst_56 = arith.constant dense<0.000000e+00> : vector<16x32xf32>
    %70 = tpu.matmul %68, %69, %cst_56 {dimension_numbers = #tpu.dot_dimension_numbers<[1], [0], [0], [1], [0, 0, 1, 1], [], []>} : vector<16x32xbf16>, vector<32x32xbf16>, vector<16x32xf32> -> vector<16x32xf32>
    %c0_57 = arith.constant 0 : index
    %c0_58 = arith.constant 0 : index
    %71 = vector.load %arg23[%c0_57, %c0_58] : memref<1x32xf32, #tpu.memory_space<vmem>>, vector<1x32xf32>
    %72 = vector.broadcast %71 : vector<1x32xf32> to vector<16x32xf32>
    %73 = arith.addf %70, %72 : vector<16x32xf32>
    %74 = arith.truncf %43 : vector<16x32xf32> to vector<16x32xbf16>
    %c0_59 = arith.constant 0 : index
    %c0_60 = arith.constant 0 : index
    %75 = vector.load %arg24[%c0_59, %c0_60] : memref<32x32xbf16, #tpu.memory_space<vmem>>, vector<32x32xbf16>
    %cst_61 = arith.constant dense<0.000000e+00> : vector<16x32xf32>
    %76 = tpu.matmul %74, %75, %cst_61 {dimension_numbers = #tpu.dot_dimension_numbers<[1], [0], [0], [1], [0, 0, 1, 1], [], []>} : vector<16x32xbf16>, vector<32x32xbf16>, vector<16x32xf32> -> vector<16x32xf32>
    %c0_62 = arith.constant 0 : index
    %c0_63 = arith.constant 0 : index
    %77 = vector.load %arg25[%c0_62, %c0_63] : memref<1x32xf32, #tpu.memory_space<vmem>>, vector<1x32xf32>
    %78 = vector.broadcast %77 : vector<1x32xf32> to vector<16x32xf32>
    %79 = arith.addf %76, %78 : vector<16x32xf32>
    %80 = vector.extract_strided_slice %67 {offsets = [0, 0], sizes = [16, 16], strides = [1, 1]} : vector<16x32xf32> to vector<16x16xf32>
    %81 = vector.shape_cast %80 : vector<16x16xf32> to vector<2x8x16xf32>
    %82 = vector.extract_strided_slice %73 {offsets = [0, 0], sizes = [16, 16], strides = [1, 1]} : vector<16x32xf32> to vector<16x16xf32>
    %83 = vector.shape_cast %82 : vector<16x16xf32> to vector<2x8x16xf32>
    %84 = vector.extract_strided_slice %79 {offsets = [0, 0], sizes = [16, 16], strides = [1, 1]} : vector<16x32xf32> to vector<16x16xf32>
    %85 = vector.shape_cast %84 : vector<16x16xf32> to vector<2x8x16xf32>
    %86 = arith.truncf %81 : vector<2x8x16xf32> to vector<2x8x16xbf16>
    %87 = arith.truncf %83 : vector<2x8x16xf32> to vector<2x8x16xbf16>
    "tpu.trace_start"() <{level = 10 : i32, message = "bsd,btd->bst"}> : () -> ()
    %cst_64 = arith.constant dense<0.000000e+00> : vector<2x8x8xf32>
    %88 = tpu.matmul %86, %87, %cst_64 {dimension_numbers = #tpu.dot_dimension_numbers<[2], [2], [1], [1], [0, 0, 0, 1, 1, 1], [0], [0]>} : vector<2x8x16xbf16>, vector<2x8x16xbf16>, vector<2x8x8xf32> -> vector<2x8x8xf32>
    "tpu.trace_stop"() : () -> ()
    %cst_65 = arith.constant 2.500000e-01 : f32
    %89 = vector.broadcast %cst_65 : f32 to vector<2x8x8xf32>
    %90 = arith.mulf %88, %89 : vector<2x8x8xf32>
    %cst_66 = arith.constant dense<0xFF800000> : vector<2x8xf32>
    %91 = vector.multi_reduction <maximumf>, %90, %cst_66 [2] : vector<2x8x8xf32> to vector<2x8xf32>
    %92 = vector.shape_cast %91 : vector<2x8xf32> to vector<2x8x1xf32>
    %93 = vector.broadcast %92 : vector<2x8x1xf32> to vector<2x8x8xf32>
    %94 = arith.subf %90, %93 : vector<2x8x8xf32>
    %95 = math.exp %94 : vector<2x8x8xf32>
    %cst_67 = arith.constant dense<0.000000e+00> : vector<2x8xf32>
    %96 = vector.multi_reduction <add>, %95, %cst_67 [2] : vector<2x8x8xf32> to vector<2x8xf32>
    %97 = vector.shape_cast %96 : vector<2x8xf32> to vector<2x8x1xf32>
    %98 = tpu.reciprocal %97 {approx = true} : vector<2x8x1xf32> -> vector<2x8x1xf32>
    %99 = vector.broadcast %98 : vector<2x8x1xf32> to vector<2x8x8xf32>
    %100 = arith.mulf %95, %99 : vector<2x8x8xf32>
    %101 = arith.truncf %100 : vector<2x8x8xf32> to vector<2x8x8xbf16>
    %102 = arith.truncf %85 : vector<2x8x16xf32> to vector<2x8x16xbf16>
    "tpu.trace_start"() <{level = 10 : i32, message = "bst,btd->bsd"}> : () -> ()
    %cst_68 = arith.constant dense<0.000000e+00> : vector<2x8x16xf32>
    %103 = tpu.matmul %101, %102, %cst_68 {dimension_numbers = #tpu.dot_dimension_numbers<[2], [1], [1], [2], [0, 0, 0, 1, 1, 2], [0], [0]>} : vector<2x8x8xbf16>, vector<2x8x16xbf16>, vector<2x8x16xf32> -> vector<2x8x16xf32>
    "tpu.trace_stop"() : () -> ()
    %cst_69 = arith.constant dense<0.000000e+00> : vector<2x16xf32>
    %104 = vector.multi_reduction <add>, %103, %cst_69 [1] : vector<2x8x16xf32> to vector<2x16xf32>
    %105 = arith.truncf %104 : vector<2x16xf32> to vector<2x16xbf16>
    %c0_70 = arith.constant 0 : index
    %c0_71 = arith.constant 0 : index
    %106 = vector.load %arg26[%c0_70, %c0_71] : memref<32x32xbf16, #tpu.memory_space<vmem>>, vector<16x32xbf16>
    %cst_72 = arith.constant dense<0.000000e+00> : vector<2x32xf32>
    %107 = tpu.matmul %105, %106, %cst_72 {dimension_numbers = #tpu.dot_dimension_numbers<[1], [0], [0], [1], [0, 0, 1, 1], [], []>} : vector<2x16xbf16>, vector<16x32xbf16>, vector<2x32xf32> -> vector<2x32xf32>
    %108 = vector.extract_strided_slice %67 {offsets = [0, 16], sizes = [16, 16], strides = [1, 1]} : vector<16x32xf32> to vector<16x16xf32>
    %109 = vector.shape_cast %108 : vector<16x16xf32> to vector<2x8x16xf32>
    %110 = vector.extract_strided_slice %73 {offsets = [0, 16], sizes = [16, 16], strides = [1, 1]} : vector<16x32xf32> to vector<16x16xf32>
    %111 = vector.shape_cast %110 : vector<16x16xf32> to vector<2x8x16xf32>
    %112 = vector.extract_strided_slice %79 {offsets = [0, 16], sizes = [16, 16], strides = [1, 1]} : vector<16x32xf32> to vector<16x16xf32>
    %113 = vector.shape_cast %112 : vector<16x16xf32> to vector<2x8x16xf32>
    %114 = arith.truncf %109 : vector<2x8x16xf32> to vector<2x8x16xbf16>
    %115 = arith.truncf %111 : vector<2x8x16xf32> to vector<2x8x16xbf16>
    "tpu.trace_start"() <{level = 10 : i32, message = "bsd,btd->bst"}> : () -> ()
    %cst_73 = arith.constant dense<0.000000e+00> : vector<2x8x8xf32>
    %116 = tpu.matmul %114, %115, %cst_73 {dimension_numbers = #tpu.dot_dimension_numbers<[2], [2], [1], [1], [0, 0, 0, 1, 1, 1], [0], [0]>} : vector<2x8x16xbf16>, vector<2x8x16xbf16>, vector<2x8x8xf32> -> vector<2x8x8xf32>
    "tpu.trace_stop"() : () -> ()
    %cst_74 = arith.constant 2.500000e-01 : f32
    %117 = vector.broadcast %cst_74 : f32 to vector<2x8x8xf32>
    %118 = arith.mulf %116, %117 : vector<2x8x8xf32>
    %cst_75 = arith.constant dense<0xFF800000> : vector<2x8xf32>
    %119 = vector.multi_reduction <maximumf>, %118, %cst_75 [2] : vector<2x8x8xf32> to vector<2x8xf32>
    %120 = vector.shape_cast %119 : vector<2x8xf32> to vector<2x8x1xf32>
    %121 = vector.broadcast %120 : vector<2x8x1xf32> to vector<2x8x8xf32>
    %122 = arith.subf %118, %121 : vector<2x8x8xf32>
    %123 = math.exp %122 : vector<2x8x8xf32>
    %cst_76 = arith.constant dense<0.000000e+00> : vector<2x8xf32>
    %124 = vector.multi_reduction <add>, %123, %cst_76 [2] : vector<2x8x8xf32> to vector<2x8xf32>
    %125 = vector.shape_cast %124 : vector<2x8xf32> to vector<2x8x1xf32>
    %126 = tpu.reciprocal %125 {approx = true} : vector<2x8x1xf32> -> vector<2x8x1xf32>
    %127 = vector.broadcast %126 : vector<2x8x1xf32> to vector<2x8x8xf32>
    %128 = arith.mulf %123, %127 : vector<2x8x8xf32>
    %129 = arith.addf %100, %128 : vector<2x8x8xf32>
    %130 = arith.truncf %128 : vector<2x8x8xf32> to vector<2x8x8xbf16>
    %131 = arith.truncf %113 : vector<2x8x16xf32> to vector<2x8x16xbf16>
    "tpu.trace_start"() <{level = 10 : i32, message = "bst,btd->bsd"}> : () -> ()
    %cst_77 = arith.constant dense<0.000000e+00> : vector<2x8x16xf32>
    %132 = tpu.matmul %130, %131, %cst_77 {dimension_numbers = #tpu.dot_dimension_numbers<[2], [1], [1], [2], [0, 0, 0, 1, 1, 2], [0], [0]>} : vector<2x8x8xbf16>, vector<2x8x16xbf16>, vector<2x8x16xf32> -> vector<2x8x16xf32>
    "tpu.trace_stop"() : () -> ()
    %cst_78 = arith.constant dense<0.000000e+00> : vector<2x16xf32>
    %133 = vector.multi_reduction <add>, %132, %cst_78 [1] : vector<2x8x16xf32> to vector<2x16xf32>
    %134 = arith.truncf %133 : vector<2x16xf32> to vector<2x16xbf16>
    %c16 = arith.constant 16 : index
    %c0_79 = arith.constant 0 : index
    %135 = vector.load %arg26[%c16, %c0_79] : memref<32x32xbf16, #tpu.memory_space<vmem>>, vector<16x32xbf16>
    %cst_80 = arith.constant dense<0.000000e+00> : vector<2x32xf32>
    %136 = tpu.matmul %134, %135, %cst_80 {dimension_numbers = #tpu.dot_dimension_numbers<[1], [0], [0], [1], [0, 0, 1, 1], [], []>} : vector<2x16xbf16>, vector<16x32xbf16>, vector<2x32xf32> -> vector<2x32xf32>
    %137 = arith.addf %107, %136 : vector<2x32xf32>
    %c0_81 = arith.constant 0 : index
    %c0_82 = arith.constant 0 : index
    %138 = vector.load %arg27[%c0_81, %c0_82] : memref<1x32xf32, #tpu.memory_space<vmem>>, vector<1x32xf32>
    %cst_83 = arith.constant 8.000000e+00 : f32
    %139 = vector.broadcast %cst_83 : f32 to vector<1x32xf32>
    %140 = arith.mulf %139, %138 : vector<1x32xf32>
    %141 = vector.broadcast %140 : vector<1x32xf32> to vector<2x32xf32>
    %142 = arith.addf %137, %141 : vector<2x32xf32>
    %c0_84 = arith.constant 0 : index
    %c0_85 = arith.constant 0 : index
    %c0_86 = arith.constant 0 : index
    %143 = vector.load %arg4[%c0_84, %c0_85, %c0_86] : memref<1x2x4xf32, #tpu.memory_space<vmem>>, vector<1x2x4xf32>
    %144 = vector.shape_cast %143 : vector<1x2x4xf32> to vector<2x4xf32>
    %c0_87 = arith.constant 0 : index
    %c0_88 = arith.constant 0 : index
    %c0_89 = arith.constant 0 : index
    %145 = vector.load %arg5[%c0_87, %c0_88, %c0_89] : memref<1x2x4xf32, #tpu.memory_space<vmem>>, vector<1x2x4xf32>
    %146 = vector.shape_cast %145 : vector<1x2x4xf32> to vector<2x4xf32>
    %147 = arith.truncf %142 : vector<2x32xf32> to vector<2x32xbf16>
    %c0_90 = arith.constant 0 : index
    %c0_91 = arith.constant 0 : index
    %148 = vector.load %arg28[%c0_90, %c0_91] : memref<32x16xbf16, #tpu.memory_space<vmem>>, vector<32x16xbf16>
    %cst_92 = arith.constant dense<0.000000e+00> : vector<2x16xf32>
    %149 = tpu.matmul %147, %148, %cst_92 {dimension_numbers = #tpu.dot_dimension_numbers<[1], [0], [0], [1], [0, 0, 1, 1], [], []>} : vector<2x32xbf16>, vector<32x16xbf16>, vector<2x16xf32> -> vector<2x16xf32>
    %150 = arith.truncf %144 : vector<2x4xf32> to vector<2x4xbf16>
    %c0_93 = arith.constant 0 : index
    %c0_94 = arith.constant 0 : index
    %151 = vector.load %arg29[%c0_93, %c0_94] : memref<4x16xbf16, #tpu.memory_space<vmem>>, vector<4x16xbf16>
    %cst_95 = arith.constant dense<0.000000e+00> : vector<2x16xf32>
    %152 = tpu.matmul %150, %151, %cst_95 {dimension_numbers = #tpu.dot_dimension_numbers<[1], [0], [0], [1], [0, 0, 1, 1], [], []>} : vector<2x4xbf16>, vector<4x16xbf16>, vector<2x16xf32> -> vector<2x16xf32>
    %153 = arith.addf %149, %152 : vector<2x16xf32>
    %154 = arith.truncf %146 : vector<2x4xf32> to vector<2x4xbf16>
    %c0_96 = arith.constant 0 : index
    %c0_97 = arith.constant 0 : index
    %155 = vector.load %arg30[%c0_96, %c0_97] : memref<4x16xbf16, #tpu.memory_space<vmem>>, vector<4x16xbf16>
    %cst_98 = arith.constant dense<0.000000e+00> : vector<2x16xf32>
    %156 = tpu.matmul %154, %155, %cst_98 {dimension_numbers = #tpu.dot_dimension_numbers<[1], [0], [0], [1], [0, 0, 1, 1], [], []>} : vector<2x4xbf16>, vector<4x16xbf16>, vector<2x16xf32> -> vector<2x16xf32>
    %157 = arith.addf %153, %156 : vector<2x16xf32>
    %c0_99 = arith.constant 0 : index
    %c0_100 = arith.constant 0 : index
    %158 = vector.load %arg31[%c0_99, %c0_100] : memref<1x16xf32, #tpu.memory_space<vmem>>, vector<1x16xf32>
    %159 = vector.broadcast %158 : vector<1x16xf32> to vector<2x16xf32>
    %160 = arith.addf %157, %159 : vector<2x16xf32>
    %cst_101 = arith.constant 0.000000e+00 : f32
    %161 = vector.broadcast %cst_101 : f32 to vector<2x16xf32>
    %162 = arith.maximumf %160, %161 : vector<2x16xf32>
    %163 = arith.truncf %162 : vector<2x16xf32> to vector<2x16xbf16>
    %c0_102 = arith.constant 0 : index
    %c0_103 = arith.constant 0 : index
    %164 = vector.load %arg32[%c0_102, %c0_103] : memref<16x16xbf16, #tpu.memory_space<vmem>>, vector<16x16xbf16>
    %cst_104 = arith.constant dense<0.000000e+00> : vector<2x16xf32>
    %165 = tpu.matmul %163, %164, %cst_104 {dimension_numbers = #tpu.dot_dimension_numbers<[1], [0], [0], [1], [0, 0, 1, 1], [], []>} : vector<2x16xbf16>, vector<16x16xbf16>, vector<2x16xf32> -> vector<2x16xf32>
    %c0_105 = arith.constant 0 : index
    %c0_106 = arith.constant 0 : index
    %166 = vector.load %arg33[%c0_105, %c0_106] : memref<1x16xf32, #tpu.memory_space<vmem>>, vector<1x16xf32>
    %167 = vector.broadcast %166 : vector<1x16xf32> to vector<2x16xf32>
    %168 = arith.addf %165, %167 : vector<2x16xf32>
    %c0_107 = arith.constant 0 : index
    %c0_108 = arith.constant 0 : index
    %c0_109 = arith.constant 0 : index
    %169 = vector.load %arg34[%c0_107, %c0_108, %c0_109] : memref<1x2x16xf32, #tpu.memory_space<vmem>>, vector<1x2x16xf32>
    %170 = vector.shape_cast %169 : vector<1x2x16xf32> to vector<2x16xf32>
    %171 = vector.shape_cast %168 : vector<2x16xf32> to vector<1x2x16xf32>
    tpu.vector_store %arg34[%c0_107, %c0_108, %c0_109], %171 {strides = array<i32>} : memref<1x2x16xf32, #tpu.memory_space<vmem>>, vector<1x2x16xf32>,
    %cst_110 = arith.constant 5.000000e-01 : f32
    %172 = vector.broadcast %cst_110 : f32 to vector<2x8x8xf32>
    %173 = arith.mulf %129, %172 : vector<2x8x8xf32>
    %c0_111 = arith.constant 0 : index
    %c0_112 = arith.constant 0 : index
    %c0_113 = arith.constant 0 : index
    %c0_114 = arith.constant 0 : index
    %174 = vector.load %arg35[%c0_111, %c0_112, %c0_113, %c0_114] : memref<1x2x8x8xf32, #tpu.memory_space<vmem>>, vector<1x2x8x8xf32>
    %175 = vector.shape_cast %174 : vector<1x2x8x8xf32> to vector<2x8x8xf32>
    %176 = vector.shape_cast %173 : vector<2x8x8xf32> to vector<1x2x8x8xf32>
    tpu.vector_store %arg35[%c0_111, %c0_112, %c0_113, %c0_114], %176 {strides = array<i32>} : memref<1x2x8x8xf32, #tpu.memory_space<vmem>>, vector<1x2x8x8xf32>,
    return
  }
  func.func @transform_0(%arg0: i32) -> (i32, i32, i32) {
    %c0_i32 = arith.constant 0 : i32
    %c0_i32_0 = arith.constant 0 : i32
    %c0_i32_1 = arith.constant 0 : i32
    return %arg0, %c0_i32, %c0_i32_0 : i32, i32, i32
  }
  func.func @transform_1(%arg0: i32) -> (i32, i32, i32) {
    %c0_i32 = arith.constant 0 : i32
    %c0_i32_0 = arith.constant 0 : i32
    %c0_i32_1 = arith.constant 0 : i32
    return %arg0, %c0_i32, %c0_i32_0 : i32, i32, i32
  }
  func.func @transform_2(%arg0: i32) -> (i32, i32, i32) {
    %c0_i32 = arith.constant 0 : i32
    %c0_i32_0 = arith.constant 0 : i32
    %c0_i32_1 = arith.constant 0 : i32
    return %arg0, %c0_i32, %c0_i32_0 : i32, i32, i32
  }
  func.func @transform_3(%arg0: i32) -> (i32, i32, i32) {
    %c0_i32 = arith.constant 0 : i32
    %c0_i32_0 = arith.constant 0 : i32
    %c0_i32_1 = arith.constant 0 : i32
    return %arg0, %c0_i32, %c0_i32_0 : i32, i32, i32
  }
  func.func @transform_4(%arg0: i32) -> (i32, i32, i32) {
    %c0_i32 = arith.constant 0 : i32
    %c0_i32_0 = arith.constant 0 : i32
    %c0_i32_1 = arith.constant 0 : i32
    return %arg0, %c0_i32, %c0_i32_0 : i32, i32, i32
  }
  func.func @transform_5(%arg0: i32) -> (i32, i32) {
    %c0_i32 = arith.constant 0 : i32
    %c0_i32_0 = arith.constant 0 : i32
    %c0_i32_1 = arith.constant 0 : i32
    return %c0_i32, %c0_i32_0 : i32, i32
  }
  func.func @transform_6(%arg0: i32) -> (i32, i32) {
    %c0_i32 = arith.constant 0 : i32
    %c0_i32_0 = arith.constant 0 : i32
    %c0_i32_1 = arith.constant 0 : i32
    return %c0_i32, %c0_i32_0 : i32, i32
  }
  func.func @transform_7(%arg0: i32) -> (i32, i32) {
    %c0_i32 = arith.constant 0 : i32
    %c0_i32_0 = arith.constant 0 : i32
    %c0_i32_1 = arith.constant 0 : i32
    return %c0_i32, %c0_i32_0 : i32, i32
  }
  func.func @transform_8(%arg0: i32) -> (i32, i32) {
    %c0_i32 = arith.constant 0 : i32
    %c0_i32_0 = arith.constant 0 : i32
    %c0_i32_1 = arith.constant 0 : i32
    return %c0_i32, %c0_i32_0 : i32, i32
  }
  func.func @transform_9(%arg0: i32) -> (i32, i32) {
    %c0_i32 = arith.constant 0 : i32
    %c0_i32_0 = arith.constant 0 : i32
    %c0_i32_1 = arith.constant 0 : i32
    return %c0_i32, %c0_i32_0 : i32, i32
  }
  func.func @transform_10(%arg0: i32) -> (i32, i32) {
    %c0_i32 = arith.constant 0 : i32
    %c0_i32_0 = arith.constant 0 : i32
    %c0_i32_1 = arith.constant 0 : i32
    return %c0_i32, %c0_i32_0 : i32, i32
  }
  func.func @transform_11(%arg0: i32) -> (i32, i32) {
    %c0_i32 = arith.constant 0 : i32
    %c0_i32_0 = arith.constant 0 : i32
    %c0_i32_1 = arith.constant 0 : i32
    return %c0_i32, %c0_i32_0 : i32, i32
  }
  func.func @transform_12(%arg0: i32) -> (i32, i32) {
    %c0_i32 = arith.constant 0 : i32
    %c0_i32_0 = arith.constant 0 : i32
    %c0_i32_1 = arith.constant 0 : i32
    return %c0_i32, %c0_i32_0 : i32, i32
  }
  func.func @transform_13(%arg0: i32) -> (i32, i32) {
    %c0_i32 = arith.constant 0 : i32
    %c0_i32_0 = arith.constant 0 : i32
    %c0_i32_1 = arith.constant 0 : i32
    return %c0_i32, %c0_i32_0 : i32, i32
  }
  func.func @transform_14(%arg0: i32) -> (i32, i32) {
    %c0_i32 = arith.constant 0 : i32
    %c0_i32_0 = arith.constant 0 : i32
    %c0_i32_1 = arith.constant 0 : i32
    return %c0_i32, %c0_i32_0 : i32, i32
  }
  func.func @transform_15(%arg0: i32) -> (i32, i32) {
    %c0_i32 = arith.constant 0 : i32
    %c0_i32_0 = arith.constant 0 : i32
    %c0_i32_1 = arith.constant 0 : i32
    return %c0_i32, %c0_i32_0 : i32, i32
  }
  func.func @transform_16(%arg0: i32) -> (i32, i32) {
    %c0_i32 = arith.constant 0 : i32
    %c0_i32_0 = arith.constant 0 : i32
    %c0_i32_1 = arith.constant 0 : i32
    return %c0_i32, %c0_i32_0 : i32, i32
  }
  func.func @transform_17(%arg0: i32) -> (i32, i32) {
    %c0_i32 = arith.constant 0 : i32
    %c0_i32_0 = arith.constant 0 : i32
    %c0_i32_1 = arith.constant 0 : i32
    return %c0_i32, %c0_i32_0 : i32, i32
  }
  func.func @transform_18(%arg0: i32) -> (i32, i32) {
    %c0_i32 = arith.constant 0 : i32
    %c0_i32_0 = arith.constant 0 : i32
    %c0_i32_1 = arith.constant 0 : i32
    return %c0_i32, %c0_i32_0 : i32, i32
  }
  func.func @transform_19(%arg0: i32) -> (i32, i32) {
    %c0_i32 = arith.constant 0 : i32
    %c0_i32_0 = arith.constant 0 : i32
    %c0_i32_1 = arith.constant 0 : i32
    return %c0_i32, %c0_i32_0 : i32, i32
  }
  func.func @transform_20(%arg0: i32) -> (i32, i32) {
    %c0_i32 = arith.constant 0 : i32
    %c0_i32_0 = arith.constant 0 : i32
    %c0_i32_1 = arith.constant 0 : i32
    return %c0_i32, %c0_i32_0 : i32, i32
  }
  func.func @transform_21(%arg0: i32) -> (i32, i32) {
    %c0_i32 = arith.constant 0 : i32
    %c0_i32_0 = arith.constant 0 : i32
    %c0_i32_1 = arith.constant 0 : i32
    return %c0_i32, %c0_i32_0 : i32, i32
  }
  func.func @transform_22(%arg0: i32) -> (i32, i32) {
    %c0_i32 = arith.constant 0 : i32
    %c0_i32_0 = arith.constant 0 : i32
    %c0_i32_1 = arith.constant 0 : i32
    return %c0_i32, %c0_i32_0 : i32, i32
  }
  func.func @transform_23(%arg0: i32) -> (i32, i32) {
    %c0_i32 = arith.constant 0 : i32
    %c0_i32_0 = arith.constant 0 : i32
    %c0_i32_1 = arith.constant 0 : i32
    return %c0_i32, %c0_i32_0 : i32, i32
  }
  func.func @transform_24(%arg0: i32) -> (i32, i32) {
    %c0_i32 = arith.constant 0 : i32
    %c0_i32_0 = arith.constant 0 : i32
    %c0_i32_1 = arith.constant 0 : i32
    return %c0_i32, %c0_i32_0 : i32, i32
  }
  func.func @transform_25(%arg0: i32) -> (i32, i32) {
    %c0_i32 = arith.constant 0 : i32
    %c0_i32_0 = arith.constant 0 : i32
    %c0_i32_1 = arith.constant 0 : i32
    return %c0_i32, %c0_i32_0 : i32, i32
  }
  func.func @transform_26(%arg0: i32) -> (i32, i32) {
    %c0_i32 = arith.constant 0 : i32
    %c0_i32_0 = arith.constant 0 : i32
    %c0_i32_1 = arith.constant 0 : i32
    return %c0_i32, %c0_i32_0 : i32, i32
  }
  func.func @transform_27(%arg0: i32) -> (i32, i32) {
    %c0_i32 = arith.constant 0 : i32
    %c0_i32_0 = arith.constant 0 : i32
    %c0_i32_1 = arith.constant 0 : i32
    return %c0_i32, %c0_i32_0 : i32, i32
  }
  func.func @transform_28(%arg0: i32) -> (i32, i32) {
    %c0_i32 = arith.constant 0 : i32
    %c0_i32_0 = arith.constant 0 : i32
    %c0_i32_1 = arith.constant 0 : i32
    return %c0_i32, %c0_i32_0 : i32, i32
  }
  func.func @transform_29(%arg0: i32) -> (i32, i32) {
    %c0_i32 = arith.constant 0 : i32
    %c0_i32_0 = arith.constant 0 : i32
    %c0_i32_1 = arith.constant 0 : i32
    return %c0_i32, %c0_i32_0 : i32, i32
  }
  func.func @transform_30(%arg0: i32) -> (i32, i32) {
    %c0_i32 = arith.constant 0 : i32
    %c0_i32_0 = arith.constant 0 : i32
    %c0_i32_1 = arith.constant 0 : i32
    return %c0_i32, %c0_i32_0 : i32, i32
  }
  func.func @transform_31(%arg0: i32) -> (i32, i32) {
    %c0_i32 = arith.constant 0 : i32
    %c0_i32_0 = arith.constant 0 : i32
    %c0_i32_1 = arith.constant 0 : i32
    return %c0_i32, %c0_i32_0 : i32, i32
  }
  func.func @transform_32(%arg0: i32) -> (i32, i32) {
    %c0_i32 = arith.constant 0 : i32
    %c0_i32_0 = arith.constant 0 : i32
    %c0_i32_1 = arith.constant 0 : i32
    return %c0_i32, %c0_i32_0 : i32, i32
  }
  func.func @transform_33(%arg0: i32) -> (i32, i32, i32) {
    %c0_i32 = arith.constant 0 : i32
    %c0_i32_0 = arith.constant 0 : i32
    %c0_i32_1 = arith.constant 0 : i32
    return %arg0, %c0_i32, %c0_i32_0 : i32, i32, i32
  }
  func.func @transform_34(%arg0: i32) -> (i32, i32, i32, i32) {
    %c0_i32 = arith.constant 0 : i32
    %c0_i32_0 = arith.constant 0 : i32
    %c0_i32_1 = arith.constant 0 : i32
    %c0_i32_2 = arith.constant 0 : i32
    return %arg0, %c0_i32, %c0_i32_0, %c0_i32_1 : i32, i32, i32, i32
  }
}

</mosaic_0001>

<llo_original>
// kernel: fc_charnet_forward.1
$region0: #{fc_charnet_forward.1}
  #allocation0 [shape = 'u32[]', space=smem, size = 0x4, offset = 0x4, fixed_abs, tag = 'smem constant byte address 0x4 - core index']
  #allocation1 [shape = 'u32[72,128]{1,0:T(1,128)}', space=vmem, size = 0x9000, scoped, tag = 'internal scratch']
  %s0 = inlined_call_operand.smem [shape: u32[35], index: -1, kind: input, shape index: {}]
  %s1 = sld [smem:[%s0]]
  %s2 = scalar_lea.smem %s0, 1
  %s3 = sld [smem:[%s2]]
  %s4 = scalar_lea.smem %s0, 2
  %s5 = sld [smem:[%s4]]
  %s6 = scalar_lea.smem %s0, 3
  %s7 = sld [smem:[%s6]]
  %s8 = scalar_lea.smem %s0, 4
  %s9 = sld [smem:[%s8]]
  %s10 = scalar_lea.smem %s0, 5
  %s11 = sld [smem:[%s10]]
  %s12 = scalar_lea.smem %s0, 6
  %s13 = sld [smem:[%s12]]
  %s14 = scalar_lea.smem %s0, 7
  %s15 = sld [smem:[%s14]]
  %s16 = scalar_lea.smem %s0, 8
  %s17 = sld [smem:[%s16]]
  %s18 = scalar_lea.smem %s0, 9
  %s19 = sld [smem:[%s18]]
  %s20 = scalar_lea.smem %s0, 10
  %s21 = sld [smem:[%s20]]
  %s22 = scalar_lea.smem %s0, 11
  %s23 = sld [smem:[%s22]]
  %s24 = scalar_lea.smem %s0, 12
  %s25 = sld [smem:[%s24]]
  %s26 = scalar_lea.smem %s0, 13
  %s27 = sld [smem:[%s26]]
  %s28 = scalar_lea.smem %s0, 14
  %s29 = sld [smem:[%s28]]
  %s30 = scalar_lea.smem %s0, 15
  %s31 = sld [smem:[%s30]]
  %s32 = scalar_lea.smem %s0, 16
  %s33 = sld [smem:[%s32]]
  %s34 = scalar_lea.smem %s0, 17
  %s35 = sld [smem:[%s34]]
  %s36 = scalar_lea.smem %s0, 18
  %s37 = sld [smem:[%s36]]
  %s38 = scalar_lea.smem %s0, 19
  %s39 = sld [smem:[%s38]]
  %s40 = scalar_lea.smem %s0, 20
  %s41 = sld [smem:[%s40]]
  %s42 = scalar_lea.smem %s0, 21
  %s43 = sld [smem:[%s42]]
  %s44 = scalar_lea.smem %s0, 22
  %s45 = sld [smem:[%s44]]
  %s46 = scalar_lea.smem %s0, 23
  %s47 = sld [smem:[%s46]]
  %s48 = scalar_lea.smem %s0, 24
  %s49 = sld [smem:[%s48]]
  %s50 = scalar_lea.smem %s0, 25
  %s51 = sld [smem:[%s50]]
  %s52 = scalar_lea.smem %s0, 26
  %s53 = sld [smem:[%s52]]
  %s54 = scalar_lea.smem %s0, 27
  %s55 = sld [smem:[%s54]]
  %s56 = scalar_lea.smem %s0, 28
  %s57 = sld [smem:[%s56]]
  %s58 = scalar_lea.smem %s0, 29
  %s59 = sld [smem:[%s58]]
  %s60 = scalar_lea.smem %s0, 30
  %s61 = sld [smem:[%s60]]
  %s62 = scalar_lea.smem %s0, 31
  %s63 = sld [smem:[%s62]]
  %s64 = scalar_lea.smem %s0, 32
  %s65 = sld [smem:[%s64]]
  %s66 = scalar_lea.smem %s0, 33
  %s67 = sld [smem:[%s66]]
  %s68 = scalar_lea.smem %s0, 34
  %s69 = sld [smem:[%s68]]
  %70 = xla_tuple %s67, %s69
  %s71 = sld [smem:[#allocation0]]
  $region177: #{fc_charnet_forward.1} parent=0
    _
  %s73 = ssub.s32 1, %s71
  %s74 = scalar_select 0, %s73, %s71
  $region1: #{fc_charnet_forward.1} parent=0
    #allocation2 [shape = 'u8[524288]{0}', space=vmem, size = 0x80000, scoped, tag = 'input window, operand 7, single buffered']
    #allocation3 [shape = 's32[2]{0}', space=sflag, size = 0x8, scoped, tag = 'scoped memory for fc_charnet_forward.1']
    %75 = vsyncpa [#allocation3], 0
    loop: start=0, step=1, limit=4
    $region2: #{fc_charnet_forward.1} parent=1 // loop_pre_header
      _
    $region3: #{fc_charnet_forward.1} parent=1 // loop_header
      %s77 = sphi 0, %s81
      %p78 = scmp.ge.s32.totalorder %s77, 4
      %s87 = sphi 0, %s89
      %s90 = sphi 0, %s87
      %s91 = sphi 0, %s90
      %s107 = sphi 0, %s91
      %s113 = sphi 0, %s115
      %s116 = sphi 0, %s113
      %s117 = sphi 0, %s116
      %s133 = sphi 0, %s117
      %s139 = sphi 0, %s141
      %s142 = sphi 0, %s139
      %s143 = sphi 0, %s142
      %s159 = sphi 0, %s143
      %s165 = sphi 0, %s167
      %s168 = sphi 0, %s165
      %s169 = sphi 0, %s168
      %s185 = sphi 0, %s169
      %s191 = sphi 0, %s193
      %s194 = sphi 0, %s191
      %s195 = sphi 0, %s194
      %s211 = sphi 0, %s195
      %s215 = sphi 0, %s215
      %s217 = sphi 0, %s215
      %s218 = sphi 0, %s217
      %s232 = sphi 0, %s218
      %s236 = sphi 0, %s236
      %s238 = sphi 0, %s236
      %s239 = sphi 0, %s238
      %s253 = sphi 0, %s239
      %s257 = sphi 0, %s257
      %s259 = sphi 0, %s257
      %s260 = sphi 0, %s259
      %s274 = sphi 0, %s260
      %s278 = sphi 0, %s278
      %s280 = sphi 0, %s278
      %s281 = sphi 0, %s280
      %s295 = sphi 0, %s281
      %s299 = sphi 0, %s299
      %s301 = sphi 0, %s299
      %s302 = sphi 0, %s301
      %s316 = sphi 0, %s302
      %s320 = sphi 0, %s320
      %s322 = sphi 0, %s320
      %s323 = sphi 0, %s322
      %s337 = sphi 0, %s323
      %s341 = sphi 0, %s341
      %s343 = sphi 0, %s341
      %s344 = sphi 0, %s343
      %s358 = sphi 0, %s344
      %s362 = sphi 0, %s362
      %s364 = sphi 0, %s362
      %s365 = sphi 0, %s364
      %s379 = sphi 0, %s365
      %s383 = sphi 0, %s383
      %s385 = sphi 0, %s383
      %s386 = sphi 0, %s385
      %s400 = sphi 0, %s386
      %s404 = sphi 0, %s404
      %s406 = sphi 0, %s404
      %s407 = sphi 0, %s406
      %s421 = sphi 0, %s407
      %s425 = sphi 0, %s425
      %s427 = sphi 0, %s425
      %s428 = sphi 0, %s427
      %s442 = sphi 0, %s428
      %s446 = sphi 0, %s446
      %s448 = sphi 0, %s446
      %s449 = sphi 0, %s448
      %s463 = sphi 0, %s449
      %s467 = sphi 0, %s467
      %s469 = sphi 0, %s467
      %s470 = sphi 0, %s469
      %s484 = sphi 0, %s470
      %s488 = sphi 0, %s488
      %s490 = sphi 0, %s488
      %s491 = sphi 0, %s490
      %s505 = sphi 0, %s491
      %s509 = sphi 0, %s509
      %s511 = sphi 0, %s509
      %s512 = sphi 0, %s511
      %s526 = sphi 0, %s512
      %s530 = sphi 0, %s530
      %s532 = sphi 0, %s530
      %s533 = sphi 0, %s532
      %s547 = sphi 0, %s533
      %s551 = sphi 0, %s551
      %s553 = sphi 0, %s551
      %s554 = sphi 0, %s553
      %s568 = sphi 0, %s554
      %s572 = sphi 0, %s572
      %s574 = sphi 0, %s572
      %s575 = sphi 0, %s574
      %s589 = sphi 0, %s575
      %s593 = sphi 0, %s593
      %s595 = sphi 0, %s593
      %s596 = sphi 0, %s595
      %s610 = sphi 0, %s596
      %s614 = sphi 0, %s614
      %s616 = sphi 0, %s614
      %s617 = sphi 0, %s616
      %s631 = sphi 0, %s617
      %s635 = sphi 0, %s635
      %s637 = sphi 0, %s635
      %s638 = sphi 0, %s637
      %s652 = sphi 0, %s638
      %s656 = sphi 0, %s656
      %s658 = sphi 0, %s656
      %s659 = sphi 0, %s658
      %s673 = sphi 0, %s659
      %s677 = sphi 0, %s677
      %s679 = sphi 0, %s677
      %s680 = sphi 0, %s679
      %s694 = sphi 0, %s680
      %s698 = sphi 0, %s698
      %s700 = sphi 0, %s698
      %s701 = sphi 0, %s700
      %s715 = sphi 0, %s701
      %s719 = sphi 0, %s719
      %s721 = sphi 0, %s719
      %s722 = sphi 0, %s721
      %s736 = sphi 0, %s722
      %s740 = sphi 0, %s740
      %s742 = sphi 0, %s740
      %s743 = sphi 0, %s742
      %s757 = sphi 0, %s743
      %s761 = sphi 0, %s761
      %s763 = sphi 0, %s761
      %s764 = sphi 0, %s763
      %s778 = sphi 0, %s764
      %s782 = sphi 0, %s782
      %s784 = sphi 0, %s782
      %s785 = sphi 0, %s784
      %s799 = sphi 0, %s785
      %s805 = sphi 0, %s807
      %s808 = sphi 0, %s805
      %s809 = sphi 0, %s808
      %s825 = sphi 0, %s809
      %s831 = sphi 0, %s833
      %s834 = sphi 0, %s831
      %s835 = sphi 0, %s834
      %s851 = sphi 0, %s835
    $region4: #{fc_charnet_forward.1} parent=1 // loop_header_branch
      %80 = sbr.rel (%p78) target = $region8
    $region5: #{fc_charnet_forward.1} parent=1 // loop_body
      %s82 = ssub.s32 %s77, 1
      %s83 = ssub.s32 %s77, 2
      %s84 = sadd.s32 %s77, 1
      %s85 = ssub.s32 %s77, %s84
      %p86 = scmp.eq.s32.totalorder %s85, 0
      %s88 = sadd.s32 %s87, 1
      %s89 = scalar_select %p86, %s87, %s88
      %p92 = pneg %p86
      %p93 = scmp.eq.s32.totalorder %s77, 1
      %p94 = por %p92, %p93
      %p95 = scmp.ne.s32.totalorder %s87, %s90
      %p96 = scmp.eq.s32.totalorder %s77, 0
      %p97 = por %p95, %p96
      %p98 = scmp.ne.s32.totalorder %s87, %s90
      %p99 = scmp.eq.s32.totalorder %s82, 1
      %p100 = por %p98, %p99
      %p101 = scmp.ne.s32.totalorder %s90, %s91
      %p102 = scmp.eq.s32.totalorder %s82, 0
      %p103 = por %p101, %p102
      %p104 = scmp.ne.s32.totalorder %s90, %s91
      %p105 = scmp.eq.s32.totalorder %s83, 1
      %p106 = por %p104, %p105
      %p108 = scmp.ne.s32.totalorder %s91, %s107
      %p109 = scmp.eq.s32.totalorder %s83, 0
      %p110 = por %p108, %p109
      %s111 = ssub.s32 %s77, %s84
      %p112 = scmp.eq.s32.totalorder %s111, 0
      %s114 = sadd.s32 %s113, 1
      %s115 = scalar_select %p112, %s113, %s114
      %p118 = pneg %p112
      %p119 = scmp.eq.s32.totalorder %s77, 1
      %p120 = por %p118, %p119
      %p121 = scmp.ne.s32.totalorder %s113, %s116
      %p122 = scmp.eq.s32.totalorder %s77, 0
      %p123 = por %p121, %p122
      %p124 = scmp.ne.s32.totalorder %s113, %s116
      %p125 = scmp.eq.s32.totalorder %s82, 1
      %p126 = por %p124, %p125
      %p127 = scmp.ne.s32.totalorder %s116, %s117
      %p128 = scmp.eq.s32.totalorder %s82, 0
      %p129 = por %p127, %p128
      %p130 = scmp.ne.s32.totalorder %s116, %s117
      %p131 = scmp.eq.s32.totalorder %s83, 1
      %p132 = por %p130, %p131
      %p134 = scmp.ne.s32.totalorder %s117, %s133
      %p135 = scmp.eq.s32.totalorder %s83, 0
      %p136 = por %p134, %p135
      %s137 = ssub.s32 %s77, %s84
      %p138 = scmp.eq.s32.totalorder %s137, 0
      %s140 = sadd.s32 %s139, 1
      %s141 = scalar_select %p138, %s139, %s140
      %p144 = pneg %p138
      %p145 = scmp.eq.s32.totalorder %s77, 1
      %p146 = por %p144, %p145
      %p147 = scmp.ne.s32.totalorder %s139, %s142
      %p148 = scmp.eq.s32.totalorder %s77, 0
      %p149 = por %p147, %p148
      %p150 = scmp.ne.s32.totalorder %s139, %s142
      %p151 = scmp.eq.s32.totalorder %s82, 1
      %p152 = por %p150, %p151
      %p153 = scmp.ne.s32.totalorder %s142, %s143
      %p154 = scmp.eq.s32.totalorder %s82, 0
      %p155 = por %p153, %p154
      %p156 = scmp.ne.s32.totalorder %s142, %s143
      %p157 = scmp.eq.s32.totalorder %s83, 1
      %p158 = por %p156, %p157
      %p160 = scmp.ne.s32.totalorder %s143, %s159
      %p161 = scmp.eq.s32.totalorder %s83, 0
      %p162 = por %p160, %p161
      %s163 = ssub.s32 %s77, %s84
      %p164 = scmp.eq.s32.totalorder %s163, 0
      %s166 = sadd.s32 %s165, 1
      %s167 = scalar_select %p164, %s165, %s166
      %p170 = pneg %p164
      %p171 = scmp.eq.s32.totalorder %s77, 1
      %p172 = por %p170, %p171
      %p173 = scmp.ne.s32.totalorder %s165, %s168
      %p174 = scmp.eq.s32.totalorder %s77, 0
      %p175 = por %p173, %p174
      %p176 = scmp.ne.s32.totalorder %s165, %s168
      %p177 = scmp.eq.s32.totalorder %s82, 1
      %p178 = por %p176, %p177
      %p179 = scmp.ne.s32.totalorder %s168, %s169
      %p180 = scmp.eq.s32.totalorder %s82, 0
      %p181 = por %p179, %p180
      %p182 = scmp.ne.s32.totalorder %s168, %s169
      %p183 = scmp.eq.s32.totalorder %s83, 1
      %p184 = por %p182, %p183
      %p186 = scmp.ne.s32.totalorder %s169, %s185
      %p187 = scmp.eq.s32.totalorder %s83, 0
      %p188 = por %p186, %p187
      %s189 = ssub.s32 %s77, %s84
      %p190 = scmp.eq.s32.totalorder %s189, 0
      %s192 = sadd.s32 %s191, 1
      %s193 = scalar_select %p190, %s191, %s192
      %p196 = pneg %p190
      %p197 = scmp.eq.s32.totalorder %s77, 1
      %p198 = por %p196, %p197
      %p199 = scmp.ne.s32.totalorder %s191, %s194
      %p200 = scmp.eq.s32.totalorder %s77, 0
      %p201 = por %p199, %p200
      %p202 = scmp.ne.s32.totalorder %s191, %s194
      %p203 = scmp.eq.s32.totalorder %s82, 1
      %p204 = por %p202, %p203
      %p205 = scmp.ne.s32.totalorder %s194, %s195
      %p206 = scmp.eq.s32.totalorder %s82, 0
      %p207 = por %p205, %p206
      %p208 = scmp.ne.s32.totalorder %s194, %s195
      %p209 = scmp.eq.s32.totalorder %s83, 1
      %p210 = por %p208, %p209
      %p212 = scmp.ne.s32.totalorder %s195, %s211
      %p213 = scmp.eq.s32.totalorder %s83, 0
      %p214 = por %p212, %p213
      %s216 = sadd.s32 %s215, 1
      %p219 = scmp.eq.s32.totalorder %s77, 1
      %p220 = scmp.ne.s32.totalorder %s215, %s217
      %p221 = scmp.eq.s32.totalorder %s77, 0
      %p222 = por %p220, %p221
      %p223 = scmp.ne.s32.totalorder %s215, %s217
      %p224 = scmp.eq.s32.totalorder %s82, 1
      %p225 = por %p223, %p224
      %p226 = scmp.ne.s32.totalorder %s217, %s218
      %p227 = scmp.eq.s32.totalorder %s82, 0
      %p228 = por %p226, %p227
      %p229 = scmp.ne.s32.totalorder %s217, %s218
      %p230 = scmp.eq.s32.totalorder %s83, 1
      %p231 = por %p229, %p230
      %p233 = scmp.ne.s32.totalorder %s218, %s232
      %p234 = scmp.eq.s32.totalorder %s83, 0
      %p235 = por %p233, %p234
      %s237 = sadd.s32 %s236, 1
      %p240 = scmp.eq.s32.totalorder %s77, 1
      %p241 = scmp.ne.s32.totalorder %s236, %s238
      %p242 = scmp.eq.s32.totalorder %s77, 0
      %p243 = por %p241, %p242
      %p244 = scmp.ne.s32.totalorder %s236, %s238
      %p245 = scmp.eq.s32.totalorder %s82, 1
      %p246 = por %p244, %p245
      %p247 = scmp.ne.s32.totalorder %s238, %s239
      %p248 = scmp.eq.s32.totalorder %s82, 0
      %p249 = por %p247, %p248
      %p250 = scmp.ne.s32.totalorder %s238, %s239
      %p251 = scmp.eq.s32.totalorder %s83, 1
      %p252 = por %p250, %p251
      %p254 = scmp.ne.s32.totalorder %s239, %s253
      %p255 = scmp.eq.s32.totalorder %s83, 0
      %p256 = por %p254, %p255
      %s258 = sadd.s32 %s257, 1
      %p261 = scmp.eq.s32.totalorder %s77, 1
      %p262 = scmp.ne.s32.totalorder %s257, %s259
      %p263 = scmp.eq.s32.totalorder %s77, 0
      %p264 = por %p262, %p263
      %p265 = scmp.ne.s32.totalorder %s257, %s259
      %p266 = scmp.eq.s32.totalorder %s82, 1
      %p267 = por %p265, %p266
      %p268 = scmp.ne.s32.totalorder %s259, %s260
      %p269 = scmp.eq.s32.totalorder %s82, 0
      %p270 = por %p268, %p269
      %p271 = scmp.ne.s32.totalorder %s259, %s260
      %p272 = scmp.eq.s32.totalorder %s83, 1
      %p273 = por %p271, %p272
      %p275 = scmp.ne.s32.totalorder %s260, %s274
      %p276 = scmp.eq.s32.totalorder %s83, 0
      %p277 = por %p275, %p276
      %s279 = sadd.s32 %s278, 1
      %p282 = scmp.eq.s32.totalorder %s77, 1
      %p283 = scmp.ne.s32.totalorder %s278, %s280
      %p284 = scmp.eq.s32.totalorder %s77, 0
      %p285 = por %p283, %p284
      %p286 = scmp.ne.s32.totalorder %s278, %s280
      %p287 = scmp.eq.s32.totalorder %s82, 1
      %p288 = por %p286, %p287
      %p289 = scmp.ne.s32.totalorder %s280, %s281
      %p290 = scmp.eq.s32.totalorder %s82, 0
      %p291 = por %p289, %p290
      %p292 = scmp.ne.s32.totalorder %s280, %s281
      %p293 = scmp.eq.s32.totalorder %s83, 1
      %p294 = por %p292, %p293
      %p296 = scmp.ne.s32.totalorder %s281, %s295
      %p297 = scmp.eq.s32.totalorder %s83, 0
      %p298 = por %p296, %p297
      %s300 = sadd.s32 %s299, 1
      %p303 = scmp.eq.s32.totalorder %s77, 1
      %p304 = scmp.ne.s32.totalorder %s299, %s301
      %p305 = scmp.eq.s32.totalorder %s77, 0
      %p306 = por %p304, %p305
      %p307 = scmp.ne.s32.totalorder %s299, %s301
      %p308 = scmp.eq.s32.totalorder %s82, 1
      %p309 = por %p307, %p308
      %p310 = scmp.ne.s32.totalorder %s301, %s302
      %p311 = scmp.eq.s32.totalorder %s82, 0
      %p312 = por %p310, %p311
      %p313 = scmp.ne.s32.totalorder %s301, %s302
      %p314 = scmp.eq.s32.totalorder %s83, 1
      %p315 = por %p313, %p314
      %p317 = scmp.ne.s32.totalorder %s302, %s316
      %p318 = scmp.eq.s32.totalorder %s83, 0
      %p319 = por %p317, %p318
      %s321 = sadd.s32 %s320, 1
      %p324 = scmp.eq.s32.totalorder %s77, 1
      %p325 = scmp.ne.s32.totalorder %s320, %s322
      %p326 = scmp.eq.s32.totalorder %s77, 0
      %p327 = por %p325, %p326
      %p328 = scmp.ne.s32.totalorder %s320, %s322
      %p329 = scmp.eq.s32.totalorder %s82, 1
      %p330 = por %p328, %p329
      %p331 = scmp.ne.s32.totalorder %s322, %s323
      %p332 = scmp.eq.s32.totalorder %s82, 0
      %p333 = por %p331, %p332
      %p334 = scmp.ne.s32.totalorder %s322, %s323
      %p335 = scmp.eq.s32.totalorder %s83, 1
      %p336 = por %p334, %p335
      %p338 = scmp.ne.s32.totalorder %s323, %s337
      %p339 = scmp.eq.s32.totalorder %s83, 0
      %p340 = por %p338, %p339
      %s342 = sadd.s32 %s341, 1
      %p345 = scmp.eq.s32.totalorder %s77, 1
      %p346 = scmp.ne.s32.totalorder %s341, %s343
      %p347 = scmp.eq.s32.totalorder %s77, 0
      %p348 = por %p346, %p347
      %p349 = scmp.ne.s32.totalorder %s341, %s343
      %p350 = scmp.eq.s32.totalorder %s82, 1
      %p351 = por %p349, %p350
      %p352 = scmp.ne.s32.totalorder %s343, %s344
      %p353 = scmp.eq.s32.totalorder %s82, 0
      %p354 = por %p352, %p353
      %p355 = scmp.ne.s32.totalorder %s343, %s344
      %p356 = scmp.eq.s32.totalorder %s83, 1
      %p357 = por %p355, %p356
      %p359 = scmp.ne.s32.totalorder %s344, %s358
      %p360 = scmp.eq.s32.totalorder %s83, 0
      %p361 = por %p359, %p360
      %s363 = sadd.s32 %s362, 1
      %p366 = scmp.eq.s32.totalorder %s77, 1
      %p367 = scmp.ne.s32.totalorder %s362, %s364
      %p368 = scmp.eq.s32.totalorder %s77, 0
      %p369 = por %p367, %p368
      %p370 = scmp.ne.s32.totalorder %s362, %s364
      %p371 = scmp.eq.s32.totalorder %s82, 1
      %p372 = por %p370, %p371
      %p373 = scmp.ne.s32.totalorder %s364, %s365
      %p374 = scmp.eq.s32.totalorder %s82, 0
      %p375 = por %p373, %p374
      %p376 = scmp.ne.s32.totalorder %s364, %s365
      %p377 = scmp.eq.s32.totalorder %s83, 1
      %p378 = por %p376, %p377
      %p380 = scmp.ne.s32.totalorder %s365, %s379
      %p381 = scmp.eq.s32.totalorder %s83, 0
      %p382 = por %p380, %p381
      %s384 = sadd.s32 %s383, 1
      %p387 = scmp.eq.s32.totalorder %s77, 1
      %p388 = scmp.ne.s32.totalorder %s383, %s385
      %p389 = scmp.eq.s32.totalorder %s77, 0
      %p390 = por %p388, %p389
      %p391 = scmp.ne.s32.totalorder %s383, %s385
      %p392 = scmp.eq.s32.totalorder %s82, 1
      %p393 = por %p391, %p392
      %p394 = scmp.ne.s32.totalorder %s385, %s386
      %p395 = scmp.eq.s32.totalorder %s82, 0
      %p396 = por %p394, %p395
      %p397 = scmp.ne.s32.totalorder %s385, %s386
      %p398 = scmp.eq.s32.totalorder %s83, 1
      %p399 = por %p397, %p398
      %p401 = scmp.ne.s32.totalorder %s386, %s400
      %p402 = scmp.eq.s32.totalorder %s83, 0
      %p403 = por %p401, %p402
      %s405 = sadd.s32 %s404, 1
      %p408 = scmp.eq.s32.totalorder %s77, 1
      %p409 = scmp.ne.s32.totalorder %s404, %s406
      %p410 = scmp.eq.s32.totalorder %s77, 0
      %p411 = por %p409, %p410
      %p412 = scmp.ne.s32.totalorder %s404, %s406
      %p413 = scmp.eq.s32.totalorder %s82, 1
      %p414 = por %p412, %p413
      %p415 = scmp.ne.s32.totalorder %s406, %s407
      %p416 = scmp.eq.s32.totalorder %s82, 0
      %p417 = por %p415, %p416
      %p418 = scmp.ne.s32.totalorder %s406, %s407
      %p419 = scmp.eq.s32.totalorder %s83, 1
      %p420 = por %p418, %p419
      %p422 = scmp.ne.s32.totalorder %s407, %s421
      %p423 = scmp.eq.s32.totalorder %s83, 0
      %p424 = por %p422, %p423
      %s426 = sadd.s32 %s425, 1
      %p429 = scmp.eq.s32.totalorder %s77, 1
      %p430 = scmp.ne.s32.totalorder %s425, %s427
      %p431 = scmp.eq.s32.totalorder %s77, 0
      %p432 = por %p430, %p431
      %p433 = scmp.ne.s32.totalorder %s425, %s427
      %p434 = scmp.eq.s32.totalorder %s82, 1
      %p435 = por %p433, %p434
      %p436 = scmp.ne.s32.totalorder %s427, %s428
      %p437 = scmp.eq.s32.totalorder %s82, 0
      %p438 = por %p436, %p437
      %p439 = scmp.ne.s32.totalorder %s427, %s428
      %p440 = scmp.eq.s32.totalorder %s83, 1
      %p441 = por %p439, %p440
      %p443 = scmp.ne.s32.totalorder %s428, %s442
      %p444 = scmp.eq.s32.totalorder %s83, 0
      %p445 = por %p443, %p444
      %s447 = sadd.s32 %s446, 1
      %p450 = scmp.eq.s32.totalorder %s77, 1
      %p451 = scmp.ne.s32.totalorder %s446, %s448
      %p452 = scmp.eq.s32.totalorder %s77, 0
      %p453 = por %p451, %p452
      %p454 = scmp.ne.s32.totalorder %s446, %s448
      %p455 = scmp.eq.s32.totalorder %s82, 1
      %p456 = por %p454, %p455
      %p457 = scmp.ne.s32.totalorder %s448, %s449
      %p458 = scmp.eq.s32.totalorder %s82, 0
      %p459 = por %p457, %p458
      %p460 = scmp.ne.s32.totalorder %s448, %s449
      %p461 = scmp.eq.s32.totalorder %s83, 1
      %p462 = por %p460, %p461
      %p464 = scmp.ne.s32.totalorder %s449, %s463
      %p465 = scmp.eq.s32.totalorder %s83, 0
      %p466 = por %p464, %p465
      %s468 = sadd.s32 %s467, 1
      %p471 = scmp.eq.s32.totalorder %s77, 1
      %p472 = scmp.ne.s32.totalorder %s467, %s469
      %p473 = scmp.eq.s32.totalorder %s77, 0
      %p474 = por %p472, %p473
      %p475 = scmp.ne.s32.totalorder %s467, %s469
      %p476 = scmp.eq.s32.totalorder %s82, 1
      %p477 = por %p475, %p476
      %p478 = scmp.ne.s32.totalorder %s469, %s470
      %p479 = scmp.eq.s32.totalorder %s82, 0
      %p480 = por %p478, %p479
      %p481 = scmp.ne.s32.totalorder %s469, %s470
      %p482 = scmp.eq.s32.totalorder %s83, 1
      %p483 = por %p481, %p482
      %p485 = scmp.ne.s32.totalorder %s470, %s484
      %p486 = scmp.eq.s32.totalorder %s83, 0
      %p487 = por %p485, %p486
      %s489 = sadd.s32 %s488, 1
      %p492 = scmp.eq.s32.totalorder %s77, 1
      %p493 = scmp.ne.s32.totalorder %s488, %s490
      %p494 = scmp.eq.s32.totalorder %s77, 0
      %p495 = por %p493, %p494
      %p496 = scmp.ne.s32.totalorder %s488, %s490
      %p497 = scmp.eq.s32.totalorder %s82, 1
      %p498 = por %p496, %p497
      %p499 = scmp.ne.s32.totalorder %s490, %s491
      %p500 = scmp.eq.s32.totalorder %s82, 0
      %p501 = por %p499, %p500
      %p502 = scmp.ne.s32.totalorder %s490, %s491
      %p503 = scmp.eq.s32.totalorder %s83, 1
      %p504 = por %p502, %p503
      %p506 = scmp.ne.s32.totalorder %s491, %s505
      %p507 = scmp.eq.s32.totalorder %s83, 0
      %p508 = por %p506, %p507
      %s510 = sadd.s32 %s509, 1
      %p513 = scmp.eq.s32.totalorder %s77, 1
      %p514 = scmp.ne.s32.totalorder %s509, %s511
      %p515 = scmp.eq.s32.totalorder %s77, 0
      %p516 = por %p514, %p515
      %p517 = scmp.ne.s32.totalorder %s509, %s511
      %p518 = scmp.eq.s32.totalorder %s82, 1
      %p519 = por %p517, %p518
      %p520 = scmp.ne.s32.totalorder %s511, %s512
      %p521 = scmp.eq.s32.totalorder %s82, 0
      %p522 = por %p520, %p521
      %p523 = scmp.ne.s32.totalorder %s511, %s512
      %p524 = scmp.eq.s32.totalorder %s83, 1
      %p525 = por %p523, %p524
      %p527 = scmp.ne.s32.totalorder %s512, %s526
      %p528 = scmp.eq.s32.totalorder %s83, 0
      %p529 = por %p527, %p528
      %s531 = sadd.s32 %s530, 1
      %p534 = scmp.eq.s32.totalorder %s77, 1
      %p535 = scmp.ne.s32.totalorder %s530, %s532
      %p536 = scmp.eq.s32.totalorder %s77, 0
      %p537 = por %p535, %p536
      %p538 = scmp.ne.s32.totalorder %s530, %s532
      %p539 = scmp.eq.s32.totalorder %s82, 1
      %p540 = por %p538, %p539
      %p541 = scmp.ne.s32.totalorder %s532, %s533
      %p542 = scmp.eq.s32.totalorder %s82, 0
      %p543 = por %p541, %p542
      %p544 = scmp.ne.s32.totalorder %s532, %s533
      %p545 = scmp.eq.s32.totalorder %s83, 1
      %p546 = por %p544, %p545
      %p548 = scmp.ne.s32.totalorder %s533, %s547
      %p549 = scmp.eq.s32.totalorder %s83, 0
      %p550 = por %p548, %p549
      %s552 = sadd.s32 %s551, 1
      %p555 = scmp.eq.s32.totalorder %s77, 1
      %p556 = scmp.ne.s32.totalorder %s551, %s553
      %p557 = scmp.eq.s32.totalorder %s77, 0
      %p558 = por %p556, %p557
      %p559 = scmp.ne.s32.totalorder %s551, %s553
      %p560 = scmp.eq.s32.totalorder %s82, 1
      %p561 = por %p559, %p560
      %p562 = scmp.ne.s32.totalorder %s553, %s554
      %p563 = scmp.eq.s32.totalorder %s82, 0
      %p564 = por %p562, %p563
      %p565 = scmp.ne.s32.totalorder %s553, %s554
      %p566 = scmp.eq.s32.totalorder %s83, 1
      %p567 = por %p565, %p566
      %p569 = scmp.ne.s32.totalorder %s554, %s568
      %p570 = scmp.eq.s32.totalorder %s83, 0
      %p571 = por %p569, %p570
      %s573 = sadd.s32 %s572, 1
      %p576 = scmp.eq.s32.totalorder %s77, 1
      %p577 = scmp.ne.s32.totalorder %s572, %s574
      %p578 = scmp.eq.s32.totalorder %s77, 0
      %p579 = por %p577, %p578
      %p580 = scmp.ne.s32.totalorder %s572, %s574
      %p581 = scmp.eq.s32.totalorder %s82, 1
      %p582 = por %p580, %p581
      %p583 = scmp.ne.s32.totalorder %s574, %s575
      %p584 = scmp.eq.s32.totalorder %s82, 0
      %p585 = por %p583, %p584
      %p586 = scmp.ne.s32.totalorder %s574, %s575
      %p587 = scmp.eq.s32.totalorder %s83, 1
      %p588 = por %p586, %p587
      %p590 = scmp.ne.s32.totalorder %s575, %s589
      %p591 = scmp.eq.s32.totalorder %s83, 0
      %p592 = por %p590, %p591
      %s594 = sadd.s32 %s593, 1
      %p597 = scmp.eq.s32.totalorder %s77, 1
      %p598 = scmp.ne.s32.totalorder %s593, %s595
      %p599 = scmp.eq.s32.totalorder %s77, 0
      %p600 = por %p598, %p599
      %p601 = scmp.ne.s32.totalorder %s593, %s595
      %p602 = scmp.eq.s32.totalorder %s82, 1
      %p603 = por %p601, %p602
      %p604 = scmp.ne.s32.totalorder %s595, %s596
      %p605 = scmp.eq.s32.totalorder %s82, 0
      %p606 = por %p604, %p605
      %p607 = scmp.ne.s32.totalorder %s595, %s596
      %p608 = scmp.eq.s32.totalorder %s83, 1
      %p609 = por %p607, %p608
      %p611 = scmp.ne.s32.totalorder %s596, %s610
      %p612 = scmp.eq.s32.totalorder %s83, 0
      %p613 = por %p611, %p612
      %s615 = sadd.s32 %s614, 1
      %p618 = scmp.eq.s32.totalorder %s77, 1
      %p619 = scmp.ne.s32.totalorder %s614, %s616
      %p620 = scmp.eq.s32.totalorder %s77, 0
      %p621 = por %p619, %p620
      %p622 = scmp.ne.s32.totalorder %s614, %s616
      %p623 = scmp.eq.s32.totalorder %s82, 1
      %p624 = por %p622, %p623
      %p625 = scmp.ne.s32.totalorder %s616, %s617
      %p626 = scmp.eq.s32.totalorder %s82, 0
      %p627 = por %p625, %p626
      %p628 = scmp.ne.s32.totalorder %s616, %s617
      %p629 = scmp.eq.s32.totalorder %s83, 1
      %p630 = por %p628, %p629
      %p632 = scmp.ne.s32.totalorder %s617, %s631
      %p633 = scmp.eq.s32.totalorder %s83, 0
      %p634 = por %p632, %p633
      %s636 = sadd.s32 %s635, 1
      %p639 = scmp.eq.s32.totalorder %s77, 1
      %p640 = scmp.ne.s32.totalorder %s635, %s637
      %p641 = scmp.eq.s32.totalorder %s77, 0
      %p642 = por %p640, %p641
      %p643 = scmp.ne.s32.totalorder %s635, %s637
      %p644 = scmp.eq.s32.totalorder %s82, 1
      %p645 = por %p643, %p644
      %p646 = scmp.ne.s32.totalorder %s637, %s638
      %p647 = scmp.eq.s32.totalorder %s82, 0
      %p648 = por %p646, %p647
      %p649 = scmp.ne.s32.totalorder %s637, %s638
      %p650 = scmp.eq.s32.totalorder %s83, 1
      %p651 = por %p649, %p650
      %p653 = scmp.ne.s32.totalorder %s638, %s652
      %p654 = scmp.eq.s32.totalorder %s83, 0
      %p655 = por %p653, %p654
      %s657 = sadd.s32 %s656, 1
      %p660 = scmp.eq.s32.totalorder %s77, 1
      %p661 = scmp.ne.s32.totalorder %s656, %s658
      %p662 = scmp.eq.s32.totalorder %s77, 0
      %p663 = por %p661, %p662
      %p664 = scmp.ne.s32.totalorder %s656, %s658
      %p665 = scmp.eq.s32.totalorder %s82, 1
      %p666 = por %p664, %p665
      %p667 = scmp.ne.s32.totalorder %s658, %s659
      %p668 = scmp.eq.s32.totalorder %s82, 0
      %p669 = por %p667, %p668
      %p670 = scmp.ne.s32.totalorder %s658, %s659
      %p671 = scmp.eq.s32.totalorder %s83, 1
      %p672 = por %p670, %p671
      %p674 = scmp.ne.s32.totalorder %s659, %s673
      %p675 = scmp.eq.s32.totalorder %s83, 0
      %p676 = por %p674, %p675
      %s678 = sadd.s32 %s677, 1
      %p681 = scmp.eq.s32.totalorder %s77, 1
      %p682 = scmp.ne.s32.totalorder %s677, %s679
      %p683 = scmp.eq.s32.totalorder %s77, 0
      %p684 = por %p682, %p683
      %p685 = scmp.ne.s32.totalorder %s677, %s679
      %p686 = scmp.eq.s32.totalorder %s82, 1
      %p687 = por %p685, %p686
      %p688 = scmp.ne.s32.totalorder %s679, %s680
      %p689 = scmp.eq.s32.totalorder %s82, 0
      %p690 = por %p688, %p689
      %p691 = scmp.ne.s32.totalorder %s679, %s680
      %p692 = scmp.eq.s32.totalorder %s83, 1
      %p693 = por %p691, %p692
      %p695 = scmp.ne.s32.totalorder %s680, %s694
      %p696 = scmp.eq.s32.totalorder %s83, 0
      %p697 = por %p695, %p696
      %s699 = sadd.s32 %s698, 1
      %p702 = scmp.eq.s32.totalorder %s77, 1
      %p703 = scmp.ne.s32.totalorder %s698, %s700
      %p704 = scmp.eq.s32.totalorder %s77, 0
      %p705 = por %p703, %p704
      %p706 = scmp.ne.s32.totalorder %s698, %s700
      %p707 = scmp.eq.s32.totalorder %s82, 1
      %p708 = por %p706, %p707
      %p709 = scmp.ne.s32.totalorder %s700, %s701
      %p710 = scmp.eq.s32.totalorder %s82, 0
      %p711 = por %p709, %p710
      %p712 = scmp.ne.s32.totalorder %s700, %s701
      %p713 = scmp.eq.s32.totalorder %s83, 1
      %p714 = por %p712, %p713
      %p716 = scmp.ne.s32.totalorder %s701, %s715
      %p717 = scmp.eq.s32.totalorder %s83, 0
      %p718 = por %p716, %p717
      %s720 = sadd.s32 %s719, 1
      %p723 = scmp.eq.s32.totalorder %s77, 1
      %p724 = scmp.ne.s32.totalorder %s719, %s721
      %p725 = scmp.eq.s32.totalorder %s77, 0
      %p726 = por %p724, %p725
      %p727 = scmp.ne.s32.totalorder %s719, %s721
      %p728 = scmp.eq.s32.totalorder %s82, 1
      %p729 = por %p727, %p728
      %p730 = scmp.ne.s32.totalorder %s721, %s722
      %p731 = scmp.eq.s32.totalorder %s82, 0
      %p732 = por %p730, %p731
      %p733 = scmp.ne.s32.totalorder %s721, %s722
      %p734 = scmp.eq.s32.totalorder %s83, 1
      %p735 = por %p733, %p734
      %p737 = scmp.ne.s32.totalorder %s722, %s736
      %p738 = scmp.eq.s32.totalorder %s83, 0
      %p739 = por %p737, %p738
      %s741 = sadd.s32 %s740, 1
      %p744 = scmp.eq.s32.totalorder %s77, 1
      %p745 = scmp.ne.s32.totalorder %s740, %s742
      %p746 = scmp.eq.s32.totalorder %s77, 0
      %p747 = por %p745, %p746
      %p748 = scmp.ne.s32.totalorder %s740, %s742
      %p749 = scmp.eq.s32.totalorder %s82, 1
      %p750 = por %p748, %p749
      %p751 = scmp.ne.s32.totalorder %s742, %s743
      %p752 = scmp.eq.s32.totalorder %s82, 0
      %p753 = por %p751, %p752
      %p754 = scmp.ne.s32.totalorder %s742, %s743
      %p755 = scmp.eq.s32.totalorder %s83, 1
      %p756 = por %p754, %p755
      %p758 = scmp.ne.s32.totalorder %s743, %s757
      %p759 = scmp.eq.s32.totalorder %s83, 0
      %p760 = por %p758, %p759
      %s762 = sadd.s32 %s761, 1
      %p765 = scmp.eq.s32.totalorder %s77, 1
      %p766 = scmp.ne.s32.totalorder %s761, %s763
      %p767 = scmp.eq.s32.totalorder %s77, 0
      %p768 = por %p766, %p767
      %p769 = scmp.ne.s32.totalorder %s761, %s763
      %p770 = scmp.eq.s32.totalorder %s82, 1
      %p771 = por %p769, %p770
      %p772 = scmp.ne.s32.totalorder %s763, %s764
      %p773 = scmp.eq.s32.totalorder %s82, 0
      %p774 = por %p772, %p773
      %p775 = scmp.ne.s32.totalorder %s763, %s764
      %p776 = scmp.eq.s32.totalorder %s83, 1
      %p777 = por %p775, %p776
      %p779 = scmp.ne.s32.totalorder %s764, %s778
      %p780 = scmp.eq.s32.totalorder %s83, 0
      %p781 = por %p779, %p780
      %s783 = sadd.s32 %s782, 1
      %p786 = scmp.eq.s32.totalorder %s77, 1
      %p787 = scmp.ne.s32.totalorder %s782, %s784
      %p788 = scmp.eq.s32.totalorder %s77, 0
      %p789 = por %p787, %p788
      %p790 = scmp.ne.s32.totalorder %s782, %s784
      %p791 = scmp.eq.s32.totalorder %s82, 1
      %p792 = por %p790, %p791
      %p793 = scmp.ne.s32.totalorder %s784, %s785
      %p794 = scmp.eq.s32.totalorder %s82, 0
      %p795 = por %p793, %p794
      %p796 = scmp.ne.s32.totalorder %s784, %s785
      %p797 = scmp.eq.s32.totalorder %s83, 1
      %p798 = por %p796, %p797
      %p800 = scmp.ne.s32.totalorder %s785, %s799
      %p801 = scmp.eq.s32.totalorder %s83, 0
      %p802 = por %p800, %p801
      %s803 = ssub.s32 %s77, %s84
      %p804 = scmp.eq.s32.totalorder %s803, 0
      %s806 = sadd.s32 %s805, 1
      %s807 = scalar_select %p804, %s805, %s806
      %p810 = pneg %p804
      %p811 = scmp.eq.s32.totalorder %s77, 1
      %p812 = por %p810, %p811
      %p813 = scmp.ne.s32.totalorder %s805, %s808
      %p814 = scmp.eq.s32.totalorder %s77, 0
      %p815 = por %p813, %p814
      %p816 = scmp.ne.s32.totalorder %s805, %s808
      %p817 = scmp.eq.s32.totalorder %s82, 1
      %p818 = por %p816, %p817
      %p819 = scmp.ne.s32.totalorder %s808, %s809
      %p820 = scmp.eq.s32.totalorder %s82, 0
      %p821 = por %p819, %p820
      %p822 = scmp.ne.s32.totalorder %s808, %s809
      %p823 = scmp.eq.s32.totalorder %s83, 1
      %p824 = por %p822, %p823
      %p826 = scmp.ne.s32.totalorder %s809, %s825
      %p827 = scmp.eq.s32.totalorder %s83, 0
      %p828 = por %p826, %p827
      %s829 = ssub.s32 %s77, %s84
      %p830 = scmp.eq.s32.totalorder %s829, 0
      %s832 = sadd.s32 %s831, 1
      %s833 = scalar_select %p830, %s831, %s832
      %p836 = pneg %p830
      %p837 = scmp.eq.s32.totalorder %s77, 1
      %p838 = por %p836, %p837
      %p839 = scmp.ne.s32.totalorder %s831, %s834
      %p840 = scmp.eq.s32.totalorder %s77, 0
      %p841 = por %p839, %p840
      %p842 = scmp.ne.s32.totalorder %s831, %s834
      %p843 = scmp.eq.s32.totalorder %s82, 1
      %p844 = por %p842, %p843
      %p845 = scmp.ne.s32.totalorder %s834, %s835
      %p846 = scmp.eq.s32.totalorder %s82, 0
      %p847 = por %p845, %p846
      %p848 = scmp.ne.s32.totalorder %s834, %s835
      %p849 = scmp.eq.s32.totalorder %s83, 1
      %p850 = por %p848, %p849
      %p852 = scmp.ne.s32.totalorder %s835, %s851
      %p853 = scmp.eq.s32.totalorder %s83, 0
      %p854 = por %p852, %p853
      %p855 = scmp.le.s32.totalorder 1, %s77
      %p856 = scmp.lt.s32.totalorder %s77, 3
      %p857 = pnand %p855, %p856
      %p858 = pneg %p857
      // Predicated region
      $region9: #{fc_charnet_forward.1} parent=5 // pred_check
        _
      $region10: #{fc_charnet_forward.1} parent=5 // pred_check_branch
        %860 = sbr.rel (%p857) target = $region12
      $region11: #{fc_charnet_forward.1} parent=5 // pred_region
        %s861 = ssub.s32 %s77, 1
        // Predicated region
        $region13: #{fc_charnet_forward.1} parent=11 // pred_check
          %p862 = pneg %p228
        $region14: #{fc_charnet_forward.1} parent=11 // pred_check_branch
          %864 = sbr.rel (%p862) target = $region16
        $region15: #{fc_charnet_forward.1} parent=11 // pred_region
          _
        $region16: #{fc_charnet_forward.1} parent=11 // pred_fallthru
          _
        // Predicated region
        $region17: #{fc_charnet_forward.1} parent=11 // pred_check
          %p865 = pneg %p249
        $region18: #{fc_charnet_forward.1} parent=11 // pred_check_branch
          %867 = sbr.rel (%p865) target = $region20
        $region19: #{fc_charnet_forward.1} parent=11 // pred_region
          _
        $region20: #{fc_charnet_forward.1} parent=11 // pred_fallthru
          _
        // Predicated region
        $region21: #{fc_charnet_forward.1} parent=11 // pred_check
          %p868 = pneg %p270
        $region22: #{fc_charnet_forward.1} parent=11 // pred_check_branch
          %870 = sbr.rel (%p868) target = $region24
        $region23: #{fc_charnet_forward.1} parent=11 // pred_region
          %872 = vsyncadd [#allocation3], 0
          %s873 = sshll.u32 %s15, 4
          %s874 = int_to_ptr.hbm [resolvable:$true] %s873
          %s875 = sshll.u32 [#allocation2], 4
          %s876 = int_to_ptr.vmem [resolvable:$true] %s875
          %881 = dma.hbm_to_vmem [thread:$0]  %s874, 16384, %s876, [#allocation3], 128, 128, 8
        $region24: #{fc_charnet_forward.1} parent=11 // pred_fallthru
          _
        // Predicated region
        $region25: #{fc_charnet_forward.1} parent=11 // pred_check
          %p882 = pneg %p291
        $region26: #{fc_charnet_forward.1} parent=11 // pred_check_branch
          %884 = sbr.rel (%p882) target = $region28
        $region27: #{fc_charnet_forward.1} parent=11 // pred_region
          _
        $region28: #{fc_charnet_forward.1} parent=11 // pred_fallthru
          _
        // Predicated region
        $region29: #{fc_charnet_forward.1} parent=11 // pred_check
          %p885 = pneg %p312
        $region30: #{fc_charnet_forward.1} parent=11 // pred_check_branch
          %887 = sbr.rel (%p885) target = $region32
        $region31: #{fc_charnet_forward.1} parent=11 // pred_region
          _
        $region32: #{fc_charnet_forward.1} parent=11 // pred_fallthru
          _
        // Predicated region
        $region33: #{fc_charnet_forward.1} parent=11 // pred_check
          %p888 = pneg %p333
        $region34: #{fc_charnet_forward.1} parent=11 // pred_check_branch
          %890 = sbr.rel (%p888) target = $region36
        $region35: #{fc_charnet_forward.1} parent=11 // pred_region
          _
        $region36: #{fc_charnet_forward.1} parent=11 // pred_fallthru
          _
        // Predicated region
        $region37: #{fc_charnet_forward.1} parent=11 // pred_check
          %p891 = pneg %p354
        $region38: #{fc_charnet_forward.1} parent=11 // pred_check_branch
          %893 = sbr.rel (%p891) target = $region40
        $region39: #{fc_charnet_forward.1} parent=11 // pred_region
          _
        $region40: #{fc_charnet_forward.1} parent=11 // pred_fallthru
          _
        // Predicated region
        $region41: #{fc_charnet_forward.1} parent=11 // pred_check
          %p894 = pneg %p375
        $region42: #{fc_charnet_forward.1} parent=11 // pred_check_branch
          %896 = sbr.rel (%p894) target = $region44
        $region43: #{fc_charnet_forward.1} parent=11 // pred_region
          _
        $region44: #{fc_charnet_forward.1} parent=11 // pred_fallthru
          _
        // Predicated region
        $region45: #{fc_charnet_forward.1} parent=11 // pred_check
          %p897 = pneg %p396
        $region46: #{fc_charnet_forward.1} parent=11 // pred_check_branch
          %899 = sbr.rel (%p897) target = $region48
        $region47: #{fc_charnet_forward.1} parent=11 // pred_region
          _
        $region48: #{fc_charnet_forward.1} parent=11 // pred_fallthru
          _
        // Predicated region
        $region49: #{fc_charnet_forward.1} parent=11 // pred_check
          %p900 = pneg %p417
        $region50: #{fc_charnet_forward.1} parent=11 // pred_check_branch
          %902 = sbr.rel (%p900) target = $region52
        $region51: #{fc_charnet_forward.1} parent=11 // pred_region
          _
        $region52: #{fc_charnet_forward.1} parent=11 // pred_fallthru
          _
        // Predicated region
        $region53: #{fc_charnet_forward.1} parent=11 // pred_check
          %p903 = pneg %p438
        $region54: #{fc_charnet_forward.1} parent=11 // pred_check_branch
          %905 = sbr.rel (%p903) target = $region56
        $region55: #{fc_charnet_forward.1} parent=11 // pred_region
          _
        $region56: #{fc_charnet_forward.1} parent=11 // pred_fallthru
          _
        // Predicated region
        $region57: #{fc_charnet_forward.1} parent=11 // pred_check
          %p906 = pneg %p459
        $region58: #{fc_charnet_forward.1} parent=11 // pred_check_branch
          %908 = sbr.rel (%p906) target = $region60
        $region59: #{fc_charnet_forward.1} parent=11 // pred_region
          _
        $region60: #{fc_charnet_forward.1} parent=11 // pred_fallthru
          _
        // Predicated region
        $region61: #{fc_charnet_forward.1} parent=11 // pred_check
          %p909 = pneg %p480
        $region62: #{fc_charnet_forward.1} parent=11 // pred_check_branch
          %911 = sbr.rel (%p909) target = $region64
        $region63: #{fc_charnet_forward.1} parent=11 // pred_region
          _
        $region64: #{fc_charnet_forward.1} parent=11 // pred_fallthru
          _
        // Predicated region
        $region65: #{fc_charnet_forward.1} parent=11 // pred_check
          %p912 = pneg %p501
        $region66: #{fc_charnet_forward.1} parent=11 // pred_check_branch
          %914 = sbr.rel (%p912) target = $region68
        $region67: #{fc_charnet_forward.1} parent=11 // pred_region
          _
        $region68: #{fc_charnet_forward.1} parent=11 // pred_fallthru
          _
        // Predicated region
        $region69: #{fc_charnet_forward.1} parent=11 // pred_check
          %p915 = pneg %p522
        $region70: #{fc_charnet_forward.1} parent=11 // pred_check_branch
          %917 = sbr.rel (%p915) target = $region72
        $region71: #{fc_charnet_forward.1} parent=11 // pred_region
          _
        $region72: #{fc_charnet_forward.1} parent=11 // pred_fallthru
          _
        // Predicated region
        $region73: #{fc_charnet_forward.1} parent=11 // pred_check
          %p918 = pneg %p543
        $region74: #{fc_charnet_forward.1} parent=11 // pred_check_branch
          %920 = sbr.rel (%p918) target = $region76
        $region75: #{fc_charnet_forward.1} parent=11 // pred_region
          _
        $region76: #{fc_charnet_forward.1} parent=11 // pred_fallthru
          _
        // Predicated region
        $region77: #{fc_charnet_forward.1} parent=11 // pred_check
          %p921 = pneg %p564
        $region78: #{fc_charnet_forward.1} parent=11 // pred_check_branch
          %923 = sbr.rel (%p921) target = $region80
        $region79: #{fc_charnet_forward.1} parent=11 // pred_region
          _
        $region80: #{fc_charnet_forward.1} parent=11 // pred_fallthru
          _
        // Predicated region
        $region81: #{fc_charnet_forward.1} parent=11 // pred_check
          %p924 = pneg %p585
        $region82: #{fc_charnet_forward.1} parent=11 // pred_check_branch
          %926 = sbr.rel (%p924) target = $region84
        $region83: #{fc_charnet_forward.1} parent=11 // pred_region
          _
        $region84: #{fc_charnet_forward.1} parent=11 // pred_fallthru
          _
        // Predicated region
        $region85: #{fc_charnet_forward.1} parent=11 // pred_check
          %p927 = pneg %p606
        $region86: #{fc_charnet_forward.1} parent=11 // pred_check_branch
          %929 = sbr.rel (%p927) target = $region88
        $region87: #{fc_charnet_forward.1} parent=11 // pred_region
          _
        $region88: #{fc_charnet_forward.1} parent=11 // pred_fallthru
          _
        // Predicated region
        $region89: #{fc_charnet_forward.1} parent=11 // pred_check
          %p930 = pneg %p627
        $region90: #{fc_charnet_forward.1} parent=11 // pred_check_branch
          %932 = sbr.rel (%p930) target = $region92
        $region91: #{fc_charnet_forward.1} parent=11 // pred_region
          _
        $region92: #{fc_charnet_forward.1} parent=11 // pred_fallthru
          _
        // Predicated region
        $region93: #{fc_charnet_forward.1} parent=11 // pred_check
          %p933 = pneg %p648
        $region94: #{fc_charnet_forward.1} parent=11 // pred_check_branch
          %935 = sbr.rel (%p933) target = $region96
        $region95: #{fc_charnet_forward.1} parent=11 // pred_region
          _
        $region96: #{fc_charnet_forward.1} parent=11 // pred_fallthru
          _
        // Predicated region
        $region97: #{fc_charnet_forward.1} parent=11 // pred_check
          %p936 = pneg %p669
        $region98: #{fc_charnet_forward.1} parent=11 // pred_check_branch
          %938 = sbr.rel (%p936) target = $region100
        $region99: #{fc_charnet_forward.1} parent=11 // pred_region
          _
        $region100: #{fc_charnet_forward.1} parent=11 // pred_fallthru
          _
        // Predicated region
        $region101: #{fc_charnet_forward.1} parent=11 // pred_check
          %p939 = pneg %p690
        $region102: #{fc_charnet_forward.1} parent=11 // pred_check_branch
          %941 = sbr.rel (%p939) target = $region104
        $region103: #{fc_charnet_forward.1} parent=11 // pred_region
          _
        $region104: #{fc_charnet_forward.1} parent=11 // pred_fallthru
          _
        // Predicated region
        $region105: #{fc_charnet_forward.1} parent=11 // pred_check
          %p942 = pneg %p711
        $region106: #{fc_charnet_forward.1} parent=11 // pred_check_branch
          %944 = sbr.rel (%p942) target = $region108
        $region107: #{fc_charnet_forward.1} parent=11 // pred_region
          _
        $region108: #{fc_charnet_forward.1} parent=11 // pred_fallthru
          _
        // Predicated region
        $region109: #{fc_charnet_forward.1} parent=11 // pred_check
          %p945 = pneg %p732
        $region110: #{fc_charnet_forward.1} parent=11 // pred_check_branch
          %947 = sbr.rel (%p945) target = $region112
        $region111: #{fc_charnet_forward.1} parent=11 // pred_region
          _
        $region112: #{fc_charnet_forward.1} parent=11 // pred_fallthru
          _
        // Predicated region
        $region113: #{fc_charnet_forward.1} parent=11 // pred_check
          %p948 = pneg %p753
        $region114: #{fc_charnet_forward.1} parent=11 // pred_check_branch
          %950 = sbr.rel (%p948) target = $region116
        $region115: #{fc_charnet_forward.1} parent=11 // pred_region
          _
        $region116: #{fc_charnet_forward.1} parent=11 // pred_fallthru
          _
        // Predicated region
        $region117: #{fc_charnet_forward.1} parent=11 // pred_check
          %p951 = pneg %p774
        $region118: #{fc_charnet_forward.1} parent=11 // pred_check_branch
          %953 = sbr.rel (%p951) target = $region120
        $region119: #{fc_charnet_forward.1} parent=11 // pred_region
          _
        $region120: #{fc_charnet_forward.1} parent=11 // pred_fallthru
          _
        // Predicated region
        $region121: #{fc_charnet_forward.1} parent=11 // pred_check
          %p954 = pneg %p795
        $region122: #{fc_charnet_forward.1} parent=11 // pred_check_branch
          %956 = sbr.rel (%p954) target = $region124
        $region123: #{fc_charnet_forward.1} parent=11 // pred_region
          _
        $region124: #{fc_charnet_forward.1} parent=11 // pred_fallthru
          _
      $region12: #{fc_charnet_forward.1} parent=5 // pred_fallthru
        _
      %p957 = scmp.lt.s32.totalorder %s77, 2
      // Predicated region
      $region125: #{fc_charnet_forward.1} parent=5 // pred_check
        %p958 = pneg %p957
      $region126: #{fc_charnet_forward.1} parent=5 // pred_check_branch
        %960 = sbr.rel (%p958) target = $region128
      $region127: #{fc_charnet_forward.1} parent=5 // pred_region
        // Predicated region
        $region129: #{fc_charnet_forward.1} parent=127 // pred_check
          %p961 = pneg %p97
        $region130: #{fc_charnet_forward.1} parent=127 // pred_check_branch
          %963 = sbr.rel (%p961) target = $region132
        $region131: #{fc_charnet_forward.1} parent=127 // pred_region
          %p964 = scmp.lt.s32.totalorder %s77, 1
          %s965 = scalar_select %p964, %s77, 1
          %s966 = smul.addr %s965, 2
          %s967 = smul.addr %s966, 8
          %s968 = scalar_lea.vmem %s1, %s967
        $region132: #{fc_charnet_forward.1} parent=127 // pred_fallthru
          _
        // Predicated region
        $region133: #{fc_charnet_forward.1} parent=127 // pred_check
          %p969 = pneg %p123
        $region134: #{fc_charnet_forward.1} parent=127 // pred_check_branch
          %971 = sbr.rel (%p969) target = $region136
        $region135: #{fc_charnet_forward.1} parent=127 // pred_region
          %p972 = scmp.lt.s32.totalorder %s77, 1
          %s973 = scalar_select %p972, %s77, 1
          %s974 = smul.addr %s973, 2
          %s975 = smul.addr %s974, 8
          %s976 = scalar_lea.vmem %s3, %s975
        $region136: #{fc_charnet_forward.1} parent=127 // pred_fallthru
          _
        // Predicated region
        $region137: #{fc_charnet_forward.1} parent=127 // pred_check
          %p977 = pneg %p149
        $region138: #{fc_charnet_forward.1} parent=127 // pred_check_branch
          %979 = sbr.rel (%p977) target = $region140
        $region139: #{fc_charnet_forward.1} parent=127 // pred_region
          %p980 = scmp.lt.s32.totalorder %s77, 1
          %s981 = scalar_select %p980, %s77, 1
          %s982 = smul.addr %s981, 2
          %s983 = smul.addr %s982, 8
          %s984 = scalar_lea.vmem %s5, %s983
        $region140: #{fc_charnet_forward.1} parent=127 // pred_fallthru
          _
        // Predicated region
        $region141: #{fc_charnet_forward.1} parent=127 // pred_check
          %p985 = pneg %p175
        $region142: #{fc_charnet_forward.1} parent=127 // pred_check_branch
          %987 = sbr.rel (%p985) target = $region144
        $region143: #{fc_charnet_forward.1} parent=127 // pred_region
          %p988 = scmp.lt.s32.totalorder %s77, 1
          %s989 = scalar_select %p988, %s77, 1
          %s990 = smul.addr %s989, 2
          %s991 = scalar_lea.vmem %s7, %s990
        $region144: #{fc_charnet_forward.1} parent=127 // pred_fallthru
          _
        // Predicated region
        $region145: #{fc_charnet_forward.1} parent=127 // pred_check
          %p992 = pneg %p201
        $region146: #{fc_charnet_forward.1} parent=127 // pred_check_branch
          %994 = sbr.rel (%p992) target = $region148
        $region147: #{fc_charnet_forward.1} parent=127 // pred_region
          %p995 = scmp.lt.s32.totalorder %s77, 1
          %s996 = scalar_select %p995, %s77, 1
          %s997 = smul.addr %s996, 2
          %s998 = scalar_lea.vmem %s9, %s997
        $region148: #{fc_charnet_forward.1} parent=127 // pred_fallthru
          _
      $region128: #{fc_charnet_forward.1} parent=5 // pred_fallthru
        _
      %p999 = scmp.le.s32.totalorder 1, %s77
      %p1000 = scmp.lt.s32.totalorder %s77, 3
      %p1001 = pnand %p999, %p1000
      %p1002 = pneg %p1001
      // Predicated region
      $region149: #{fc_charnet_forward.1} parent=5 // pred_check
        _
      $region150: #{fc_charnet_forward.1} parent=5 // pred_check_branch
        %1004 = sbr.rel (%p1001) target = $region152
      $region151: #{fc_charnet_forward.1} parent=5 // pred_region
        %s1005 = ssub.s32 %s77, 1
        // Predicated region
        $region153: #{fc_charnet_forward.1} parent=151 // pred_check
          %p1006 = pneg %p270
        $region154: #{fc_charnet_forward.1} parent=151 // pred_check_branch
          %1008 = sbr.rel (%p1006) target = $region156
        $region155: #{fc_charnet_forward.1} parent=151 // pred_region
          %1010 = dma.done [#allocation3], 16384
        $region156: #{fc_charnet_forward.1} parent=151 // pred_fallthru
          _
        %p1011 = scmp.lt.s32.totalorder %s82, 1
        %s1012 = scalar_select %p1011, %s82, 1
        %s1013 = smul.addr %s1012, 2
        %s1014 = smul.addr %s1013, 8
        %s1015 = scalar_lea.vmem %s1, %s1014
        %p1016 = pneg %p103
        %p1017 = pneg %p100
        %p1018 = scmp.lt.s32.totalorder %s82, 1
        %s1019 = scalar_select %p1018, %s82, 1
        %s1020 = smul.addr %s1019, 2
        %s1021 = smul.addr %s1020, 8
        %s1022 = scalar_lea.vmem %s3, %s1021
        %p1023 = pneg %p129
        %p1024 = pneg %p126
        %p1025 = scmp.lt.s32.totalorder %s82, 1
        %s1026 = scalar_select %p1025, %s82, 1
        %s1027 = smul.addr %s1026, 2
        %s1028 = smul.addr %s1027, 8
        %s1029 = scalar_lea.vmem %s5, %s1028
        %p1030 = pneg %p155
        %p1031 = pneg %p152
        %p1032 = scmp.lt.s32.totalorder %s82, 1
        %s1033 = scalar_select %p1032, %s82, 1
        %s1034 = smul.addr %s1033, 2
        %s1035 = scalar_lea.vmem %s7, %s1034
        %p1036 = pneg %p181
        %p1037 = pneg %p178
        %p1038 = scmp.lt.s32.totalorder %s82, 1
        %s1039 = scalar_select %p1038, %s82, 1
        %s1040 = smul.addr %s1039, 2
        %s1041 = scalar_lea.vmem %s9, %s1040
        %p1042 = pneg %p207
        %p1043 = pneg %p204
        %p1044 = pneg %p228
        %p1045 = pneg %p225
        %p1046 = pneg %p249
        %p1047 = pneg %p246
        %p1048 = pneg %p270
        %p1049 = pneg %p267
        %p1050 = pneg %p291
        %p1051 = pneg %p288
        %p1052 = pneg %p312
        %p1053 = pneg %p309
        %p1054 = pneg %p333
        %p1055 = pneg %p330
        %p1056 = pneg %p354
        %p1057 = pneg %p351
        %p1058 = pneg %p375
        %p1059 = pneg %p372
        %p1060 = pneg %p396
        %p1061 = pneg %p393
        %p1062 = pneg %p417
        %p1063 = pneg %p414
        %p1064 = pneg %p438
        %p1065 = pneg %p435
        %p1066 = pneg %p459
        %p1067 = pneg %p456
        %p1068 = pneg %p480
        %p1069 = pneg %p477
        %p1070 = pneg %p501
        %p1071 = pneg %p498
        %p1072 = pneg %p522
        %p1073 = pneg %p519
        %p1074 = pneg %p543
        %p1075 = pneg %p540
        %p1076 = pneg %p564
        %p1077 = pneg %p561
        %p1078 = pneg %p585
        %p1079 = pneg %p582
        %p1080 = pneg %p606
        %p1081 = pneg %p603
        %p1082 = pneg %p627
        %p1083 = pneg %p624
        %p1084 = pneg %p648
        %p1085 = pneg %p645
        %p1086 = pneg %p669
        %p1087 = pneg %p666
        %p1088 = pneg %p690
        %p1089 = pneg %p687
        %p1090 = pneg %p711
        %p1091 = pneg %p708
        %p1092 = pneg %p732
        %p1093 = pneg %p729
        %p1094 = pneg %p753
        %p1095 = pneg %p750
        %p1096 = pneg %p774
        %p1097 = pneg %p771
        %p1098 = pneg %p795
        %p1099 = pneg %p792
        %p1100 = pneg %p821
        %p1101 = pneg %p818
        %p1102 = scmp.lt.s32.totalorder %s82, 1
        %s1103 = scalar_select %p1102, %s82, 1
        %s1104 = smul.addr %s1103, 2
        %s1105 = scalar_lea.vmem %s67, %s1104
        %p1106 = pneg %p847
        %p1107 = pneg %p844
        %p1108 = scmp.lt.s32.totalorder %s82, 1
        %s1109 = scalar_select %p1108, %s82, 1
        %s1110 = smul.addr %s1109, 2
        %s1111 = smul.addr %s1110, 8
        %s1112 = scalar_lea.vmem %s69, %s1111
        %p1113 = scmp.lt.s32.totalorder %s82, 1
        %s1114 = scalar_select %p1113, %s82, 1
        %s1115 = smul.addr %s1114, 2
        %s1116 = smul.addr %s1115, 8
        %s1117 = scalar_lea.vmem %s1, %s1116
        %p1118 = scmp.lt.s32.totalorder %s82, 1
        %s1119 = scalar_select %p1118, %s82, 1
        %s1120 = smul.addr %s1119, 2
        %s1121 = smul.addr %s1120, 8
        %s1122 = scalar_lea.vmem %s3, %s1121
        %p1123 = scmp.lt.s32.totalorder %s82, 1
        %s1124 = scalar_select %p1123, %s82, 1
        %s1125 = smul.addr %s1124, 2
        %s1126 = smul.addr %s1125, 8
        %s1127 = scalar_lea.vmem %s5, %s1126
        %p1128 = scmp.lt.s32.totalorder %s82, 1
        %s1129 = scalar_select %p1128, %s82, 1
        %s1130 = smul.addr %s1129, 2
        %s1131 = scalar_lea.vmem %s7, %s1130
        %p1132 = scmp.lt.s32.totalorder %s82, 1
        %s1133 = scalar_select %p1132, %s82, 1
        %s1134 = smul.addr %s1133, 2
        %s1135 = scalar_lea.vmem %s9, %s1134
        %p1136 = scmp.lt.s32.totalorder %s82, 1
        %s1137 = scalar_select %p1136, %s82, 1
        %s1138 = smul.addr %s1137, 2
        %s1139 = scalar_lea.vmem %s67, %s1138
        %p1140 = scmp.lt.s32.totalorder %s82, 1
        %s1141 = scalar_select %p1140, %s82, 1
        %s1142 = smul.addr %s1141, 2
        %s1143 = smul.addr %s1142, 8
        %s1144 = scalar_lea.vmem %s69, %s1143
        %v1146 = vld [vmem:[%s1117] sm:$0xff]
        %v1147 = vld [vmem:[%s1117 + $0x8] sm:$0xff]
        %v1148 = vpack.c.bf16 %v1147, %v1146
        %v1149 = vld [vmem:[%s11] sm:$0xff]
        %v1150 = vld [vmem:[%s11 + $0x8] sm:$0xff]
        %v1151 = vld [vmem:[%s11 + $0x10] sm:$0xff]
        %v1152 = vld [vmem:[%s11 + $0x18] sm:$0xff]
        %v1153 = vld [vmem:[%s11 + $0x20] sm:$0xff]
        %v1154 = vld [vmem:[%s11 + $0x28] sm:$0xff]
        %v1155 = vld [vmem:[%s11 + $0x30] sm:$0xff]
        %v1156 = vld [vmem:[%s11 + $0x38] sm:$0xff]
        %v1157 = vld [vmem:[%s11 + $0x40] sm:$0xff]
        %v1158 = vld [vmem:[%s11 + $0x48] sm:$0xff]
        %v1159 = vld [vmem:[%s11 + $0x50] sm:$0xff]
        %v1160 = vld [vmem:[%s11 + $0x58] sm:$0xff]
        %v1161 = vld [vmem:[%s11 + $0x60] sm:$0xff]
        %v1162 = vld [vmem:[%s11 + $0x68] sm:$0xff]
        %v1163 = vld [vmem:[%s11 + $0x70] sm:$0xff]
        %v1164 = vld [vmem:[%s11 + $0x78] sm:$0xff]
        %v1165 = vld [vmem:[%s13] sm:$0xff]
        %v1167 = vperm.slane %v1165, 0
        %v1168 = vperm.slane %v1165, 1
        %v1169 = vperm.slane %v1165, 2
        %v1170 = vperm.slane %v1165, 3
        %v1171 = vperm.slane %v1165, 4
        %v1172 = vperm.slane %v1165, 5
        %v1173 = vperm.slane %v1165, 6
        %v1174 = vperm.slane %v1165, 7
        %v1199 = vunpack.c.l.b16 %v1149
        %v1200 = vunpack.c.h.b16 %v1149
        %v1201 = vunpack.c.l.b16 %v1150
        %v1202 = vunpack.c.h.b16 %v1150
        %v1203 = vunpack.c.l.b16 %v1151
        %v1204 = vunpack.c.h.b16 %v1151
        %v1205 = vunpack.c.l.b16 %v1152
        %v1206 = vunpack.c.h.b16 %v1152
        %v1207 = vunpack.c.l.b16 %v1153
        %v1208 = vunpack.c.h.b16 %v1153
        %v1209 = vunpack.c.l.b16 %v1154
        %v1210 = vunpack.c.h.b16 %v1154
        %v1211 = vunpack.c.l.b16 %v1155
        %v1212 = vunpack.c.h.b16 %v1155
        %v1213 = vunpack.c.l.b16 %v1156
        %v1214 = vunpack.c.h.b16 %v1156
        %v1215 = vunpack.c.l.b16 %v1157
        %v1216 = vunpack.c.h.b16 %v1157
        %v1217 = vunpack.c.l.b16 %v1158
        %v1218 = vunpack.c.h.b16 %v1158
        %v1219 = vunpack.c.l.b16 %v1159
        %v1220 = vunpack.c.h.b16 %v1159
        %v1221 = vunpack.c.l.b16 %v1160
        %v1222 = vunpack.c.h.b16 %v1160
        %v1223 = vunpack.c.l.b16 %v1161
        %v1224 = vunpack.c.h.b16 %v1161
        %v1225 = vunpack.c.l.b16 %v1162
        %v1226 = vunpack.c.h.b16 %v1162
        %v1227 = vunpack.c.l.b16 %v1163
        %v1228 = vunpack.c.h.b16 %v1163
        %v1229 = vunpack.c.l.b16 %v1164
        %v1230 = vunpack.c.h.b16 %v1164
        %v1231 = vpack.c.b16 %v1207, %v1199
        %v1232 = vpack.c.b16 %v1208, %v1200
        %v1233 = vpack.c.b16 %v1209, %v1201
        %v1234 = vpack.c.b16 %v1210, %v1202
        %v1235 = vpack.c.b16 %v1211, %v1203
        %v1236 = vpack.c.b16 %v1212, %v1204
        %v1237 = vpack.c.b16 %v1213, %v1205
        %v1238 = vpack.c.b16 %v1214, %v1206
        %v1239 = vpack.c.b16 %v1223, %v1215
        %v1240 = vpack.c.b16 %v1224, %v1216
        %v1241 = vpack.c.b16 %v1225, %v1217
        %v1242 = vpack.c.b16 %v1226, %v1218
        %v1243 = vpack.c.b16 %v1227, %v1219
        %v1244 = vpack.c.b16 %v1228, %v1220
        %v1245 = vpack.c.b16 %v1229, %v1221
        %v1246 = vpack.c.b16 %v1230, %v1222
        %vm1263 = vcmask 261120
        %v1265 = vsel %vm1263, %v1148, 0
        %1267 = vmatpush.bf16.msra.mxu0 0
        %1268 = vmatpush.bf16.msra.mxu0 0
        %1269 = vmatpush.bf16.msra.mxu0 0
        %1270 = vmatpush.bf16.msra.mxu0 0
        %1271 = vmatpush.bf16.msra.mxu0 0
        %1272 = vmatpush.bf16.msra.mxu0 0
        %1273 = vmatpush.bf16.msra.mxu0 %v1239
        %1274 = vmatpush.bf16.msra.mxu0 %v1231
        %1275 = vmatmul.bf16.gmra.mxu0 %v1265
        %v1276 = vpop.f32.mrf.mxu0
        %v1277 = vadd.f32 %v1167, %v1276
        %v1278 = vpop.f32.mrf.mxu0
        %v1279 = vadd.f32 %v1167, %v1278
        %1280 = vdwg.mxu0
        %1281 = vmatpush.bf16.msra.mxu0 0
        %1282 = vmatpush.bf16.msra.mxu0 0
        %1283 = vmatpush.bf16.msra.mxu0 0
        %1284 = vmatpush.bf16.msra.mxu0 0
        %1285 = vmatpush.bf16.msra.mxu0 0
        %1286 = vmatpush.bf16.msra.mxu0 0
        %1287 = vmatpush.bf16.msra.mxu0 %v1240
        %1288 = vmatpush.bf16.msra.mxu0 %v1232
        %1289 = vmatmul.bf16.gmra.mxu0 %v1265
        %v1290 = vpop.f32.mrf.mxu0
        %v1291 = vadd.f32 %v1168, %v1290
        %v1292 = vpop.f32.mrf.mxu0
        %v1293 = vadd.f32 %v1168, %v1292
        %1294 = vdwg.mxu0
        %1295 = vmatpush.bf16.msra.mxu0 0
        %1296 = vmatpush.bf16.msra.mxu0 0
        %1297 = vmatpush.bf16.msra.mxu0 0
        %1298 = vmatpush.bf16.msra.mxu0 0
        %1299 = vmatpush.bf16.msra.mxu0 0
        %1300 = vmatpush.bf16.msra.mxu0 0
        %1301 = vmatpush.bf16.msra.mxu0 %v1241
        %1302 = vmatpush.bf16.msra.mxu0 %v1233
        %1303 = vmatmul.bf16.gmra.mxu0 %v1265
        %v1304 = vpop.f32.mrf.mxu0
        %v1305 = vadd.f32 %v1169, %v1304
        %v1306 = vpop.f32.mrf.mxu0
        %v1307 = vadd.f32 %v1169, %v1306
        %1308 = vdwg.mxu0
        %1309 = vmatpush.bf16.msra.mxu0 0
        %1310 = vmatpush.bf16.msra.mxu0 0
        %1311 = vmatpush.bf16.msra.mxu0 0
        %1312 = vmatpush.bf16.msra.mxu0 0
        %1313 = vmatpush.bf16.msra.mxu0 0
        %1314 = vmatpush.bf16.msra.mxu0 0
        %1315 = vmatpush.bf16.msra.mxu0 %v1242
        %1316 = vmatpush.bf16.msra.mxu0 %v1234
        %1317 = vmatmul.bf16.gmra.mxu0 %v1265
        %v1318 = vpop.f32.mrf.mxu0
        %v1319 = vadd.f32 %v1170, %v1318
        %v1320 = vpop.f32.mrf.mxu0
        %v1321 = vadd.f32 %v1170, %v1320
        %1322 = vdwg.mxu0
        %1323 = vmatpush.bf16.msra.mxu0 0
        %1324 = vmatpush.bf16.msra.mxu0 0
        %1325 = vmatpush.bf16.msra.mxu0 0
        %1326 = vmatpush.bf16.msra.mxu0 0
        %1327 = vmatpush.bf16.msra.mxu0 0
        %1328 = vmatpush.bf16.msra.mxu0 0
        %1329 = vmatpush.bf16.msra.mxu0 %v1243
        %1330 = vmatpush.bf16.msra.mxu0 %v1235
        %1331 = vmatmul.bf16.gmra.mxu0 %v1265
        %v1332 = vpop.f32.mrf.mxu0
        %v1333 = vadd.f32 %v1171, %v1332
        %v1334 = vpop.f32.mrf.mxu0
        %v1335 = vadd.f32 %v1171, %v1334
        %1336 = vdwg.mxu0
        %1337 = vmatpush.bf16.msra.mxu0 0
        %1338 = vmatpush.bf16.msra.mxu0 0
        %1339 = vmatpush.bf16.msra.mxu0 0
        %1340 = vmatpush.bf16.msra.mxu0 0
        %1341 = vmatpush.bf16.msra.mxu0 0
        %1342 = vmatpush.bf16.msra.mxu0 0
        %1343 = vmatpush.bf16.msra.mxu0 %v1244
        %1344 = vmatpush.bf16.msra.mxu0 %v1236
        %1345 = vmatmul.bf16.gmra.mxu0 %v1265
        %v1346 = vpop.f32.mrf.mxu0
        %v1347 = vadd.f32 %v1172, %v1346
        %v1348 = vpop.f32.mrf.mxu0
        %v1349 = vadd.f32 %v1172, %v1348
        %1350 = vdwg.mxu0
        %1351 = vmatpush.bf16.msra.mxu0 0
        %1352 = vmatpush.bf16.msra.mxu0 0
        %1353 = vmatpush.bf16.msra.mxu0 0
        %1354 = vmatpush.bf16.msra.mxu0 0
        %1355 = vmatpush.bf16.msra.mxu0 0
        %1356 = vmatpush.bf16.msra.mxu0 0
        %1357 = vmatpush.bf16.msra.mxu0 %v1245
        %1358 = vmatpush.bf16.msra.mxu0 %v1237
        %1359 = vmatmul.bf16.gmra.mxu0 %v1265
        %v1360 = vpop.f32.mrf.mxu0
        %v1361 = vadd.f32 %v1173, %v1360
        %v1362 = vpop.f32.mrf.mxu0
        %v1363 = vadd.f32 %v1173, %v1362
        %1364 = vdwg.mxu0
        %1365 = vmatpush.bf16.msra.mxu0 0
        %1366 = vmatpush.bf16.msra.mxu0 0
        %1367 = vmatpush.bf16.msra.mxu0 0
        %1368 = vmatpush.bf16.msra.mxu0 0
        %1369 = vmatpush.bf16.msra.mxu0 0
        %1370 = vmatpush.bf16.msra.mxu0 0
        %1371 = vmatpush.bf16.msra.mxu0 %v1246
        %1372 = vmatpush.bf16.msra.mxu0 %v1238
        %1373 = vmatmul.bf16.gmra.mxu0 %v1265
        %v1374 = vpop.f32.mrf.mxu0
        %v1375 = vadd.f32 %v1174, %v1374
        %v1376 = vpop.f32.mrf.mxu0
        %v1377 = vadd.f32 %v1174, %v1376
        %1378 = vdwg.mxu0
        %v1379 = vmax.f32 %v1277, 0.0
        %v1380 = vmax.f32 %v1291, 0.0
        %v1381 = vmax.f32 %v1305, 0.0
        %v1382 = vmax.f32 %v1319, 0.0
        %v1383 = vmax.f32 %v1333, 0.0
        %v1384 = vmax.f32 %v1347, 0.0
        %v1385 = vmax.f32 %v1361, 0.0
        %v1386 = vmax.f32 %v1375, 0.0
        %v1387 = vmax.f32 %v1279, 0.0
        %v1388 = vmax.f32 %v1293, 0.0
        %v1389 = vmax.f32 %v1307, 0.0
        %v1390 = vmax.f32 %v1321, 0.0
        %v1391 = vmax.f32 %v1335, 0.0
        %v1392 = vmax.f32 %v1349, 0.0
        %v1393 = vmax.f32 %v1363, 0.0
        %v1394 = vmax.f32 %v1377, 0.0
        %v1395 = vpack.c.bf16 %v1387, %v1379
        %v1396 = vpack.c.bf16 %v1388, %v1380
        %v1397 = vpack.c.bf16 %v1389, %v1381
        %v1398 = vpack.c.bf16 %v1390, %v1382
        %v1399 = vpack.c.bf16 %v1391, %v1383
        %v1400 = vpack.c.bf16 %v1392, %v1384
        %v1401 = vpack.c.bf16 %v1393, %v1385
        %v1402 = vpack.c.bf16 %v1394, %v1386
        %v1403 = vld [vmem:[#allocation2] sm:$0xff]
        %v1404 = vld [vmem:[#allocation2 + $0x8] sm:$0xff]
        %v1405 = vld [vmem:[#allocation2 + $0x10] sm:$0xff]
        %v1406 = vld [vmem:[#allocation2 + $0x18] sm:$0xff]
        %v1407 = vld [vmem:[#allocation2 + $0x20] sm:$0xff]
        %v1408 = vld [vmem:[#allocation2 + $0x28] sm:$0xff]
        %v1409 = vld [vmem:[#allocation2 + $0x30] sm:$0xff]
        %v1410 = vld [vmem:[#allocation2 + $0x38] sm:$0xff]
        %v1411 = vld [vmem:[#allocation2 + $0x40] sm:$0xff]
        %v1412 = vld [vmem:[#allocation2 + $0x48] sm:$0xff]
        %v1413 = vld [vmem:[#allocation2 + $0x50] sm:$0xff]
        %v1414 = vld [vmem:[#allocation2 + $0x58] sm:$0xff]
        %v1415 = vld [vmem:[#allocation2 + $0x60] sm:$0xff]
        %v1416 = vld [vmem:[#allocation2 + $0x68] sm:$0xff]
        %v1417 = vld [vmem:[#allocation2 + $0x70] sm:$0xff]
        %v1418 = vld [vmem:[#allocation2 + $0x78] sm:$0xff]
        %v1419 = vld [vmem:[#allocation2 + $0x80] sm:$0xff]
        %v1420 = vld [vmem:[#allocation2 + $0x88] sm:$0xff]
        %v1421 = vld [vmem:[#allocation2 + $0x90] sm:$0xff]
        %v1422 = vld [vmem:[#allocation2 + $0x98] sm:$0xff]
        %v1423 = vld [vmem:[#allocation2 + $0xa0] sm:$0xff]
        %v1424 = vld [vmem:[#allocation2 + $0xa8] sm:$0xff]
        %v1425 = vld [vmem:[#allocation2 + $0xb0] sm:$0xff]
        %v1426 = vld [vmem:[#allocation2 + $0xb8] sm:$0xff]
        %v1427 = vld [vmem:[#allocation2 + $0xc0] sm:$0xff]
        %v1428 = vld [vmem:[#allocation2 + $0xc8] sm:$0xff]
        %v1429 = vld [vmem:[#allocation2 + $0xd0] sm:$0xff]
        %v1430 = vld [vmem:[#allocation2 + $0xd8] sm:$0xff]
        %v1431 = vld [vmem:[#allocation2 + $0xe0] sm:$0xff]
        %v1432 = vld [vmem:[#allocation2 + $0xe8] sm:$0xff]
        %v1433 = vld [vmem:[#allocation2 + $0xf0] sm:$0xff]
        %v1434 = vld [vmem:[#allocation2 + $0xf8] sm:$0xff]
        %v1435 = vld [vmem:[#allocation2 + $0x100] sm:$0xff]
        %v1436 = vld [vmem:[#allocation2 + $0x108] sm:$0xff]
        %v1437 = vld [vmem:[#allocation2 + $0x110] sm:$0xff]
        %v1438 = vld [vmem:[#allocation2 + $0x118] sm:$0xff]
        %v1439 = vld [vmem:[#allocation2 + $0x120] sm:$0xff]
        %v1440 = vld [vmem:[#allocation2 + $0x128] sm:$0xff]
        %v1441 = vld [vmem:[#allocation2 + $0x130] sm:$0xff]
        %v1442 = vld [vmem:[#allocation2 + $0x138] sm:$0xff]
        %v1443 = vld [vmem:[#allocation2 + $0x140] sm:$0xff]
        %v1444 = vld [vmem:[#allocation2 + $0x148] sm:$0xff]
        %v1445 = vld [vmem:[#allocation2 + $0x150] sm:$0xff]
        %v1446 = vld [vmem:[#allocation2 + $0x158] sm:$0xff]
        %v1447 = vld [vmem:[#allocation2 + $0x160] sm:$0xff]
        %v1448 = vld [vmem:[#allocation2 + $0x168] sm:$0xff]
        %v1449 = vld [vmem:[#allocation2 + $0x170] sm:$0xff]
        %v1450 = vld [vmem:[#allocation2 + $0x178] sm:$0xff]
        %v1451 = vld [vmem:[#allocation2 + $0x180] sm:$0xff]
        %v1452 = vld [vmem:[#allocation2 + $0x188] sm:$0xff]
        %v1453 = vld [vmem:[#allocation2 + $0x190] sm:$0xff]
        %v1454 = vld [vmem:[#allocation2 + $0x198] sm:$0xff]
        %v1455 = vld [vmem:[#allocation2 + $0x1a0] sm:$0xff]
        %v1456 = vld [vmem:[#allocation2 + $0x1a8] sm:$0xff]
        %v1457 = vld [vmem:[#allocation2 + $0x1b0] sm:$0xff]
        %v1458 = vld [vmem:[#allocation2 + $0x1b8] sm:$0xff]
        %v1459 = vld [vmem:[#allocation2 + $0x1c0] sm:$0xff]
        %v1460 = vld [vmem:[#allocation2 + $0x1c8] sm:$0xff]
        %v1461 = vld [vmem:[#allocation2 + $0x1d0] sm:$0xff]
        %v1462 = vld [vmem:[#allocation2 + $0x1d8] sm:$0xff]
        %v1463 = vld [vmem:[#allocation2 + $0x1e0] sm:$0xff]
        %v1464 = vld [vmem:[#allocation2 + $0x1e8] sm:$0xff]
        %v1465 = vld [vmem:[#allocation2 + $0x1f0] sm:$0xff]
        %v1466 = vld [vmem:[#allocation2 + $0x1f8] sm:$0xff]
        %v1467 = vld [vmem:[#allocation2 + $0x200] sm:$0xff]
        %v1468 = vld [vmem:[#allocation2 + $0x208] sm:$0xff]
        %v1469 = vld [vmem:[#allocation2 + $0x210] sm:$0xff]
        %v1470 = vld [vmem:[#allocation2 + $0x218] sm:$0xff]
        %v1471 = vld [vmem:[#allocation2 + $0x220] sm:$0xff]
        %v1472 = vld [vmem:[#allocation2 + $0x228] sm:$0xff]
        %v1473 = vld [vmem:[#allocation2 + $0x230] sm:$0xff]
        %v1474 = vld [vmem:[#allocation2 + $0x238] sm:$0xff]
        %v1475 = vld [vmem:[#allocation2 + $0x240] sm:$0xff]
        %v1476 = vld [vmem:[#allocation2 + $0x248] sm:$0xff]
        %v1477 = vld [vmem:[#allocation2 + $0x250] sm:$0xff]
        %v1478 = vld [vmem:[#allocation2 + $0x258] sm:$0xff]
        %v1479 = vld [vmem:[#allocation2 + $0x260] sm:$0xff]
        %v1480 = vld [vmem:[#allocation2 + $0x268] sm:$0xff]
        %v1481 = vld [vmem:[#allocation2 + $0x270] sm:$0xff]
        %v1482 = vld [vmem:[#allocation2 + $0x278] sm:$0xff]
        %v1483 = vld [vmem:[#allocation2 + $0x280] sm:$0xff]
        %v1484 = vld [vmem:[#allocation2 + $0x288] sm:$0xff]
        %v1485 = vld [vmem:[#allocation2 + $0x290] sm:$0xff]
        %v1486 = vld [vmem:[#allocation2 + $0x298] sm:$0xff]
        %v1487 = vld [vmem:[#allocation2 + $0x2a0] sm:$0xff]
        %v1488 = vld [vmem:[#allocation2 + $0x2a8] sm:$0xff]
        %v1489 = vld [vmem:[#allocation2 + $0x2b0] sm:$0xff]
        %v1490 = vld [vmem:[#allocation2 + $0x2b8] sm:$0xff]
        %v1491 = vld [vmem:[#allocation2 + $0x2c0] sm:$0xff]
        %v1492 = vld [vmem:[#allocation2 + $0x2c8] sm:$0xff]
        %v1493 = vld [vmem:[#allocation2 + $0x2d0] sm:$0xff]
        %v1494 = vld [vmem:[#allocation2 + $0x2d8] sm:$0xff]
        %v1495 = vld [vmem:[#allocation2 + $0x2e0] sm:$0xff]
        %v1496 = vld [vmem:[#allocation2 + $0x2e8] sm:$0xff]
        %v1497 = vld [vmem:[#allocation2 + $0x2f0] sm:$0xff]
        %v1498 = vld [vmem:[#allocation2 + $0x2f8] sm:$0xff]
        %v1499 = vld [vmem:[#allocation2 + $0x300] sm:$0xff]
        %v1500 = vld [vmem:[#allocation2 + $0x308] sm:$0xff]
        %v1501 = vld [vmem:[#allocation2 + $0x310] sm:$0xff]
        %v1502 = vld [vmem:[#allocation2 + $0x318] sm:$0xff]
        %v1503 = vld [vmem:[#allocation2 + $0x320] sm:$0xff]
        %v1504 = vld [vmem:[#allocation2 + $0x328] sm:$0xff]
        %v1505 = vld [vmem:[#allocation2 + $0x330] sm:$0xff]
        %v1506 = vld [vmem:[#allocation2 + $0x338] sm:$0xff]
        %v1507 = vld [vmem:[#allocation2 + $0x340] sm:$0xff]
        %v1508 = vld [vmem:[#allocation2 + $0x348] sm:$0xff]
        %v1509 = vld [vmem:[#allocation2 + $0x350] sm:$0xff]
        %v1510 = vld [vmem:[#allocation2 + $0x358] sm:$0xff]
        %v1511 = vld [vmem:[#allocation2 + $0x360] sm:$0xff]
        %v1512 = vld [vmem:[#allocation2 + $0x368] sm:$0xff]
        %v1513 = vld [vmem:[#allocation2 + $0x370] sm:$0xff]
        %v1514 = vld [vmem:[#allocation2 + $0x378] sm:$0xff]
        %v1515 = vld [vmem:[#allocation2 + $0x380] sm:$0xff]
        %v1516 = vld [vmem:[#allocation2 + $0x388] sm:$0xff]
        %v1517 = vld [vmem:[#allocation2 + $0x390] sm:$0xff]
        %v1518 = vld [vmem:[#allocation2 + $0x398] sm:$0xff]
        %v1519 = vld [vmem:[#allocation2 + $0x3a0] sm:$0xff]
        %v1520 = vld [vmem:[#allocation2 + $0x3a8] sm:$0xff]
        %v1521 = vld [vmem:[#allocation2 + $0x3b0] sm:$0xff]
        %v1522 = vld [vmem:[#allocation2 + $0x3b8] sm:$0xff]
        %v1523 = vld [vmem:[#allocation2 + $0x3c0] sm:$0xff]
        %v1524 = vld [vmem:[#allocation2 + $0x3c8] sm:$0xff]
        %v1525 = vld [vmem:[#allocation2 + $0x3d0] sm:$0xff]
        %v1526 = vld [vmem:[#allocation2 + $0x3d8] sm:$0xff]
        %v1527 = vld [vmem:[#allocation2 + $0x3e0] sm:$0xff]
        %v1528 = vld [vmem:[#allocation2 + $0x3e8] sm:$0xff]
        %v1529 = vld [vmem:[#allocation2 + $0x3f0] sm:$0xff]
        %v1530 = vld [vmem:[#allocation2 + $0x3f8] sm:$0xff]
        %v1531 = vld [vmem:[%s17] sm:$0x3]
        %v1533 = vperm.slane %v1531, 0
        %v1534 = vperm.slane %v1531, 1
        %v1665 = vunpack.c.l.b16 %v1403
        %v1666 = vunpack.c.h.b16 %v1403
        %v1667 = vunpack.c.l.b16 %v1404
        %v1668 = vunpack.c.h.b16 %v1404
        %v1669 = vunpack.c.l.b16 %v1405
        %v1670 = vunpack.c.h.b16 %v1405
        %v1671 = vunpack.c.l.b16 %v1406
        %v1672 = vunpack.c.h.b16 %v1406
        %v1673 = vunpack.c.l.b16 %v1407
        %v1674 = vunpack.c.h.b16 %v1407
        %v1675 = vunpack.c.l.b16 %v1408
        %v1676 = vunpack.c.h.b16 %v1408
        %v1677 = vunpack.c.l.b16 %v1409
        %v1678 = vunpack.c.h.b16 %v1409
        %v1679 = vunpack.c.l.b16 %v1410
        %v1680 = vunpack.c.h.b16 %v1410
        %v1681 = vunpack.c.l.b16 %v1411
        %v1682 = vunpack.c.h.b16 %v1411
        %v1683 = vunpack.c.l.b16 %v1412
        %v1684 = vunpack.c.h.b16 %v1412
        %v1685 = vunpack.c.l.b16 %v1413
        %v1686 = vunpack.c.h.b16 %v1413
        %v1687 = vunpack.c.l.b16 %v1414
        %v1688 = vunpack.c.h.b16 %v1414
        %v1689 = vunpack.c.l.b16 %v1415
        %v1690 = vunpack.c.h.b16 %v1415
        %v1691 = vunpack.c.l.b16 %v1416
        %v1692 = vunpack.c.h.b16 %v1416
        %v1693 = vunpack.c.l.b16 %v1417
        %v1694 = vunpack.c.h.b16 %v1417
        %v1695 = vunpack.c.l.b16 %v1418
        %v1696 = vunpack.c.h.b16 %v1418
        %v1697 = vunpack.c.l.b16 %v1419
        %v1698 = vunpack.c.h.b16 %v1419
        %v1699 = vunpack.c.l.b16 %v1420
        %v1700 = vunpack.c.h.b16 %v1420
        %v1701 = vunpack.c.l.b16 %v1421
        %v1702 = vunpack.c.h.b16 %v1421
        %v1703 = vunpack.c.l.b16 %v1422
        %v1704 = vunpack.c.h.b16 %v1422
        %v1705 = vunpack.c.l.b16 %v1423
        %v1706 = vunpack.c.h.b16 %v1423
        %v1707 = vunpack.c.l.b16 %v1424
        %v1708 = vunpack.c.h.b16 %v1424
        %v1709 = vunpack.c.l.b16 %v1425
        %v1710 = vunpack.c.h.b16 %v1425
        %v1711 = vunpack.c.l.b16 %v1426
        %v1712 = vunpack.c.h.b16 %v1426
        %v1713 = vunpack.c.l.b16 %v1427
        %v1714 = vunpack.c.h.b16 %v1427
        %v1715 = vunpack.c.l.b16 %v1428
        %v1716 = vunpack.c.h.b16 %v1428
        %v1717 = vunpack.c.l.b16 %v1429
        %v1718 = vunpack.c.h.b16 %v1429
        %v1719 = vunpack.c.l.b16 %v1430
        %v1720 = vunpack.c.h.b16 %v1430
        %v1721 = vunpack.c.l.b16 %v1431
        %v1722 = vunpack.c.h.b16 %v1431
        %v1723 = vunpack.c.l.b16 %v1432
        %v1724 = vunpack.c.h.b16 %v1432
        %v1725 = vunpack.c.l.b16 %v1433
        %v1726 = vunpack.c.h.b16 %v1433
        %v1727 = vunpack.c.l.b16 %v1434
        %v1728 = vunpack.c.h.b16 %v1434
        %v1729 = vunpack.c.l.b16 %v1435
        %v1730 = vunpack.c.h.b16 %v1435
        %v1731 = vunpack.c.l.b16 %v1436
        %v1732 = vunpack.c.h.b16 %v1436
        %v1733 = vunpack.c.l.b16 %v1437
        %v1734 = vunpack.c.h.b16 %v1437
        %v1735 = vunpack.c.l.b16 %v1438
        %v1736 = vunpack.c.h.b16 %v1438
        %v1737 = vunpack.c.l.b16 %v1439
        %v1738 = vunpack.c.h.b16 %v1439
        %v1739 = vunpack.c.l.b16 %v1440
        %v1740 = vunpack.c.h.b16 %v1440
        %v1741 = vunpack.c.l.b16 %v1441
        %v1742 = vunpack.c.h.b16 %v1441
        %v1743 = vunpack.c.l.b16 %v1442
        %v1744 = vunpack.c.h.b16 %v1442
        %v1745 = vunpack.c.l.b16 %v1443
        %v1746 = vunpack.c.h.b16 %v1443
        %v1747 = vunpack.c.l.b16 %v1444
        %v1748 = vunpack.c.h.b16 %v1444
        %v1749 = vunpack.c.l.b16 %v1445
        %v1750 = vunpack.c.h.b16 %v1445
        %v1751 = vunpack.c.l.b16 %v1446
        %v1752 = vunpack.c.h.b16 %v1446
        %v1753 = vunpack.c.l.b16 %v1447
        %v1754 = vunpack.c.h.b16 %v1447
        %v1755 = vunpack.c.l.b16 %v1448
        %v1756 = vunpack.c.h.b16 %v1448
        %v1757 = vunpack.c.l.b16 %v1449
        %v1758 = vunpack.c.h.b16 %v1449
        %v1759 = vunpack.c.l.b16 %v1450
        %v1760 = vunpack.c.h.b16 %v1450
        %v1761 = vunpack.c.l.b16 %v1451
        %v1762 = vunpack.c.h.b16 %v1451
        %v1763 = vunpack.c.l.b16 %v1452
        %v1764 = vunpack.c.h.b16 %v1452
        %v1765 = vunpack.c.l.b16 %v1453
        %v1766 = vunpack.c.h.b16 %v1453
        %v1767 = vunpack.c.l.b16 %v1454
        %v1768 = vunpack.c.h.b16 %v1454
        %v1769 = vunpack.c.l.b16 %v1455
        %v1770 = vunpack.c.h.b16 %v1455
        %v1771 = vunpack.c.l.b16 %v1456
        %v1772 = vunpack.c.h.b16 %v1456
        %v1773 = vunpack.c.l.b16 %v1457
        %v1774 = vunpack.c.h.b16 %v1457
        %v1775 = vunpack.c.l.b16 %v1458
        %v1776 = vunpack.c.h.b16 %v1458
        %v1777 = vunpack.c.l.b16 %v1459
        %v1778 = vunpack.c.h.b16 %v1459
        %v1779 = vunpack.c.l.b16 %v1460
        %v1780 = vunpack.c.h.b16 %v1460
        %v1781 = vunpack.c.l.b16 %v1461
        %v1782 = vunpack.c.h.b16 %v1461
        %v1783 = vunpack.c.l.b16 %v1462
        %v1784 = vunpack.c.h.b16 %v1462
        %v1785 = vunpack.c.l.b16 %v1463
        %v1786 = vunpack.c.h.b16 %v1463
        %v1787 = vunpack.c.l.b16 %v1464
        %v1788 = vunpack.c.h.b16 %v1464
        %v1789 = vunpack.c.l.b16 %v1465
        %v1790 = vunpack.c.h.b16 %v1465
        %v1791 = vunpack.c.l.b16 %v1466
        %v1792 = vunpack.c.h.b16 %v1466
        %v1793 = vunpack.c.l.b16 %v1467
        %v1794 = vunpack.c.h.b16 %v1467
        %v1795 = vunpack.c.l.b16 %v1468
        %v1796 = vunpack.c.h.b16 %v1468
        %v1797 = vunpack.c.l.b16 %v1469
        %v1798 = vunpack.c.h.b16 %v1469
        %v1799 = vunpack.c.l.b16 %v1470
        %v1800 = vunpack.c.h.b16 %v1470
        %v1801 = vunpack.c.l.b16 %v1471
        %v1802 = vunpack.c.h.b16 %v1471
        %v1803 = vunpack.c.l.b16 %v1472
        %v1804 = vunpack.c.h.b16 %v1472
        %v1805 = vunpack.c.l.b16 %v1473
        %v1806 = vunpack.c.h.b16 %v1473
        %v1807 = vunpack.c.l.b16 %v1474
        %v1808 = vunpack.c.h.b16 %v1474
        %v1809 = vunpack.c.l.b16 %v1475
        %v1810 = vunpack.c.h.b16 %v1475
        %v1811 = vunpack.c.l.b16 %v1476
        %v1812 = vunpack.c.h.b16 %v1476
        %v1813 = vunpack.c.l.b16 %v1477
        %v1814 = vunpack.c.h.b16 %v1477
        %v1815 = vunpack.c.l.b16 %v1478
        %v1816 = vunpack.c.h.b16 %v1478
        %v1817 = vunpack.c.l.b16 %v1479
        %v1818 = vunpack.c.h.b16 %v1479
        %v1819 = vunpack.c.l.b16 %v1480
        %v1820 = vunpack.c.h.b16 %v1480
        %v1821 = vunpack.c.l.b16 %v1481
        %v1822 = vunpack.c.h.b16 %v1481
        %v1823 = vunpack.c.l.b16 %v1482
        %v1824 = vunpack.c.h.b16 %v1482
        %v1825 = vunpack.c.l.b16 %v1483
        %v1826 = vunpack.c.h.b16 %v1483
        %v1827 = vunpack.c.l.b16 %v1484
        %v1828 = vunpack.c.h.b16 %v1484
        %v1829 = vunpack.c.l.b16 %v1485
        %v1830 = vunpack.c.h.b16 %v1485
        %v1831 = vunpack.c.l.b16 %v1486
        %v1832 = vunpack.c.h.b16 %v1486
        %v1833 = vunpack.c.l.b16 %v1487
        %v1834 = vunpack.c.h.b16 %v1487
        %v1835 = vunpack.c.l.b16 %v1488
        %v1836 = vunpack.c.h.b16 %v1488
        %v1837 = vunpack.c.l.b16 %v1489
        %v1838 = vunpack.c.h.b16 %v1489
        %v1839 = vunpack.c.l.b16 %v1490
        %v1840 = vunpack.c.h.b16 %v1490
        %v1841 = vunpack.c.l.b16 %v1491
        %v1842 = vunpack.c.h.b16 %v1491
        %v1843 = vunpack.c.l.b16 %v1492
        %v1844 = vunpack.c.h.b16 %v1492
        %v1845 = vunpack.c.l.b16 %v1493
        %v1846 = vunpack.c.h.b16 %v1493
        %v1847 = vunpack.c.l.b16 %v1494
        %v1848 = vunpack.c.h.b16 %v1494
        %v1849 = vunpack.c.l.b16 %v1495
        %v1850 = vunpack.c.h.b16 %v1495
        %v1851 = vunpack.c.l.b16 %v1496
        %v1852 = vunpack.c.h.b16 %v1496
        %v1853 = vunpack.c.l.b16 %v1497
        %v1854 = vunpack.c.h.b16 %v1497
        %v1855 = vunpack.c.l.b16 %v1498
        %v1856 = vunpack.c.h.b16 %v1498
        %v1857 = vunpack.c.l.b16 %v1499
        %v1858 = vunpack.c.h.b16 %v1499
        %v1859 = vunpack.c.l.b16 %v1500
        %v1860 = vunpack.c.h.b16 %v1500
        %v1861 = vunpack.c.l.b16 %v1501
        %v1862 = vunpack.c.h.b16 %v1501
        %v1863 = vunpack.c.l.b16 %v1502
        %v1864 = vunpack.c.h.b16 %v1502
        %v1865 = vunpack.c.l.b16 %v1503
        %v1866 = vunpack.c.h.b16 %v1503
        %v1867 = vunpack.c.l.b16 %v1504
        %v1868 = vunpack.c.h.b16 %v1504
        %v1869 = vunpack.c.l.b16 %v1505
        %v1870 = vunpack.c.h.b16 %v1505
        %v1871 = vunpack.c.l.b16 %v1506
        %v1872 = vunpack.c.h.b16 %v1506
        %v1873 = vunpack.c.l.b16 %v1507
        %v1874 = vunpack.c.h.b16 %v1507
        %v1875 = vunpack.c.l.b16 %v1508
        %v1876 = vunpack.c.h.b16 %v1508
        %v1877 = vunpack.c.l.b16 %v1509
        %v1878 = vunpack.c.h.b16 %v1509
        %v1879 = vunpack.c.l.b16 %v1510
        %v1880 = vunpack.c.h.b16 %v1510
        %v1881 = vunpack.c.l.b16 %v1511
        %v1882 = vunpack.c.h.b16 %v1511
        %v1883 = vunpack.c.l.b16 %v1512
        %v1884 = vunpack.c.h.b16 %v1512
        %v1885 = vunpack.c.l.b16 %v1513
        %v1886 = vunpack.c.h.b16 %v1513
        %v1887 = vunpack.c.l.b16 %v1514
        %v1888 = vunpack.c.h.b16 %v1514
        %v1889 = vunpack.c.l.b16 %v1515
        %v1890 = vunpack.c.h.b16 %v1515
        %v1891 = vunpack.c.l.b16 %v1516
        %v1892 = vunpack.c.h.b16 %v1516
        %v1893 = vunpack.c.l.b16 %v1517
        %v1894 = vunpack.c.h.b16 %v1517
        %v1895 = vunpack.c.l.b16 %v1518
        %v1896 = vunpack.c.h.b16 %v1518
        %v1897 = vunpack.c.l.b16 %v1519
        %v1898 = vunpack.c.h.b16 %v1519
        %v1899 = vunpack.c.l.b16 %v1520
        %v1900 = vunpack.c.h.b16 %v1520
        %v1901 = vunpack.c.l.b16 %v1521
        %v1902 = vunpack.c.h.b16 %v1521
        %v1903 = vunpack.c.l.b16 %v1522
        %v1904 = vunpack.c.h.b16 %v1522
        %v1905 = vunpack.c.l.b16 %v1523
        %v1906 = vunpack.c.h.b16 %v1523
        %v1907 = vunpack.c.l.b16 %v1524
        %v1908 = vunpack.c.h.b16 %v1524
        %v1909 = vunpack.c.l.b16 %v1525
        %v1910 = vunpack.c.h.b16 %v1525
        %v1911 = vunpack.c.l.b16 %v1526
        %v1912 = vunpack.c.h.b16 %v1526
        %v1913 = vunpack.c.l.b16 %v1527
        %v1914 = vunpack.c.h.b16 %v1527
        %v1915 = vunpack.c.l.b16 %v1528
        %v1916 = vunpack.c.h.b16 %v1528
        %v1917 = vunpack.c.l.b16 %v1529
        %v1918 = vunpack.c.h.b16 %v1529
        %v1919 = vunpack.c.l.b16 %v1530
        %v1920 = vunpack.c.h.b16 %v1530
        %v1921 = vpack.c.b16 %v1667, %v1665
        %v1922 = vpack.c.b16 %v1668, %v1666
        %v1923 = vpack.c.b16 %v1671, %v1669
        %v1924 = vpack.c.b16 %v1672, %v1670
        %v1925 = vpack.c.b16 %v1675, %v1673
        %v1926 = vpack.c.b16 %v1676, %v1674
        %v1927 = vpack.c.b16 %v1679, %v1677
        %v1928 = vpack.c.b16 %v1680, %v1678
        %v1929 = vpack.c.b16 %v1683, %v1681
        %v1930 = vpack.c.b16 %v1684, %v1682
        %v1931 = vpack.c.b16 %v1687, %v1685
        %v1932 = vpack.c.b16 %v1688, %v1686
        %v1933 = vpack.c.b16 %v1691, %v1689
        %v1934 = vpack.c.b16 %v1692, %v1690
        %v1935 = vpack.c.b16 %v1695, %v1693
        %v1936 = vpack.c.b16 %v1696, %v1694
        %v1937 = vpack.c.b16 %v1699, %v1697
        %v1938 = vpack.c.b16 %v1700, %v1698
        %v1939 = vpack.c.b16 %v1703, %v1701
        %v1940 = vpack.c.b16 %v1704, %v1702
        %v1941 = vpack.c.b16 %v1707, %v1705
        %v1942 = vpack.c.b16 %v1708, %v1706
        %v1943 = vpack.c.b16 %v1711, %v1709
        %v1944 = vpack.c.b16 %v1712, %v1710
        %v1945 = vpack.c.b16 %v1715, %v1713
        %v1946 = vpack.c.b16 %v1716, %v1714
        %v1947 = vpack.c.b16 %v1719, %v1717
        %v1948 = vpack.c.b16 %v1720, %v1718
        %v1949 = vpack.c.b16 %v1723, %v1721
        %v1950 = vpack.c.b16 %v1724, %v1722
        %v1951 = vpack.c.b16 %v1727, %v1725
        %v1952 = vpack.c.b16 %v1728, %v1726
        %v1953 = vpack.c.b16 %v1731, %v1729
        %v1954 = vpack.c.b16 %v1732, %v1730
        %v1955 = vpack.c.b16 %v1735, %v1733
        %v1956 = vpack.c.b16 %v1736, %v1734
        %v1957 = vpack.c.b16 %v1739, %v1737
        %v1958 = vpack.c.b16 %v1740, %v1738
        %v1959 = vpack.c.b16 %v1743, %v1741
        %v1960 = vpack.c.b16 %v1744, %v1742
        %v1961 = vpack.c.b16 %v1747, %v1745
        %v1962 = vpack.c.b16 %v1748, %v1746
        %v1963 = vpack.c.b16 %v1751, %v1749
        %v1964 = vpack.c.b16 %v1752, %v1750
        %v1965 = vpack.c.b16 %v1755, %v1753
        %v1966 = vpack.c.b16 %v1756, %v1754
        %v1967 = vpack.c.b16 %v1759, %v1757
        %v1968 = vpack.c.b16 %v1760, %v1758
        %v1969 = vpack.c.b16 %v1763, %v1761
        %v1970 = vpack.c.b16 %v1764, %v1762
        %v1971 = vpack.c.b16 %v1767, %v1765
        %v1972 = vpack.c.b16 %v1768, %v1766
        %v1973 = vpack.c.b16 %v1771, %v1769
        %v1974 = vpack.c.b16 %v1772, %v1770
        %v1975 = vpack.c.b16 %v1775, %v1773
        %v1976 = vpack.c.b16 %v1776, %v1774
        %v1977 = vpack.c.b16 %v1779, %v1777
        %v1978 = vpack.c.b16 %v1780, %v1778
        %v1979 = vpack.c.b16 %v1783, %v1781
        %v1980 = vpack.c.b16 %v1784, %v1782
        %v1981 = vpack.c.b16 %v1787, %v1785
        %v1982 = vpack.c.b16 %v1788, %v1786
        %v1983 = vpack.c.b16 %v1791, %v1789
        %v1984 = vpack.c.b16 %v1792, %v1790
        %v1985 = vpack.c.b16 %v1795, %v1793
        %v1986 = vpack.c.b16 %v1796, %v1794
        %v1987 = vpack.c.b16 %v1799, %v1797
        %v1988 = vpack.c.b16 %v1800, %v1798
        %v1989 = vpack.c.b16 %v1803, %v1801
        %v1990 = vpack.c.b16 %v1804, %v1802
        %v1991 = vpack.c.b16 %v1807, %v1805
        %v1992 = vpack.c.b16 %v1808, %v1806
        %v1993 = vpack.c.b16 %v1811, %v1809
        %v1994 = vpack.c.b16 %v1812, %v1810
        %v1995 = vpack.c.b16 %v1815, %v1813
        %v1996 = vpack.c.b16 %v1816, %v1814
        %v1997 = vpack.c.b16 %v1819, %v1817
        %v1998 = vpack.c.b16 %v1820, %v1818
        %v1999 = vpack.c.b16 %v1823, %v1821
        %v2000 = vpack.c.b16 %v1824, %v1822
        %v2001 = vpack.c.b16 %v1827, %v1825
        %v2002 = vpack.c.b16 %v1828, %v1826
        %v2003 = vpack.c.b16 %v1831, %v1829
        %v2004 = vpack.c.b16 %v1832, %v1830
        %v2005 = vpack.c.b16 %v1835, %v1833
        %v2006 = vpack.c.b16 %v1836, %v1834
        %v2007 = vpack.c.b16 %v1839, %v1837
        %v2008 = vpack.c.b16 %v1840, %v1838
        %v2009 = vpack.c.b16 %v1843, %v1841
        %v2010 = vpack.c.b16 %v1844, %v1842
        %v2011 = vpack.c.b16 %v1847, %v1845
        %v2012 = vpack.c.b16 %v1848, %v1846
        %v2013 = vpack.c.b16 %v1851, %v1849
        %v2014 = vpack.c.b16 %v1852, %v1850
        %v2015 = vpack.c.b16 %v1855, %v1853
        %v2016 = vpack.c.b16 %v1856, %v1854
        %v2017 = vpack.c.b16 %v1859, %v1857
        %v2018 = vpack.c.b16 %v1860, %v1858
        %v2019 = vpack.c.b16 %v1863, %v1861
        %v2020 = vpack.c.b16 %v1864, %v1862
        %v2021 = vpack.c.b16 %v1867, %v1865
        %v2022 = vpack.c.b16 %v1868, %v1866
        %v2023 = vpack.c.b16 %v1871, %v1869
        %v2024 = vpack.c.b16 %v1872, %v1870
        %v2025 = vpack.c.b16 %v1875, %v1873
        %v2026 = vpack.c.b16 %v1876, %v1874
        %v2027 = vpack.c.b16 %v1879, %v1877
        %v2028 = vpack.c.b16 %v1880, %v1878
        %v2029 = vpack.c.b16 %v1883, %v1881
        %v2030 = vpack.c.b16 %v1884, %v1882
        %v2031 = vpack.c.b16 %v1887, %v1885
        %v2032 = vpack.c.b16 %v1888, %v1886
        %v2033 = vpack.c.b16 %v1891, %v1889
        %v2034 = vpack.c.b16 %v1892, %v1890
        %v2035 = vpack.c.b16 %v1895, %v1893
        %v2036 = vpack.c.b16 %v1896, %v1894
        %v2037 = vpack.c.b16 %v1899, %v1897
        %v2038 = vpack.c.b16 %v1900, %v1898
        %v2039 = vpack.c.b16 %v1903, %v1901
        %v2040 = vpack.c.b16 %v1904, %v1902
        %v2041 = vpack.c.b16 %v1907, %v1905
        %v2042 = vpack.c.b16 %v1908, %v1906
        %v2043 = vpack.c.b16 %v1911, %v1909
        %v2044 = vpack.c.b16 %v1912, %v1910
        %v2045 = vpack.c.b16 %v1915, %v1913
        %v2046 = vpack.c.b16 %v1916, %v1914
        %v2047 = vpack.c.b16 %v1919, %v1917
        %v2048 = vpack.c.b16 %v1920, %v1918
        %2177 = vmatpush.bf16.msra.mxu0 %v1935
        %2178 = vmatpush.bf16.msra.mxu0 %v1933
        %2179 = vmatpush.bf16.msra.mxu0 %v1931
        %2180 = vmatpush.bf16.msra.mxu0 %v1929
        %2181 = vmatpush.bf16.msra.mxu0 %v1927
        %2182 = vmatpush.bf16.msra.mxu0 %v1925
        %2183 = vmatpush.bf16.msra.mxu0 %v1923
        %2184 = vmatpush.bf16.msra.mxu0 %v1921
        %2185 = vmatmul.bf16.gmra.mxu0 %v1395
        %v2186 = vpop.f32.mrf.mxu0
        %v2187 = vadd.f32 %v1533, %v2186
        %v2188 = vpop.f32.mrf.mxu0
        %v2189 = vadd.f32 %v1533, %v2188
        %2190 = vdwg.mxu0
        %2191 = vmatpush.bf16.msra.mxu0 %v1951
        %2192 = vmatpush.bf16.msra.mxu0 %v1949
        %2193 = vmatpush.bf16.msra.mxu0 %v1947
        %2194 = vmatpush.bf16.msra.mxu0 %v1945
        %2195 = vmatpush.bf16.msra.mxu0 %v1943
        %2196 = vmatpush.bf16.msra.mxu0 %v1941
        %2197 = vmatpush.bf16.msra.mxu0 %v1939
        %2198 = vmatpush.bf16.msra.mxu0 %v1937
        %2199 = vmatmul.bf16.gmra.mxu0 %v1396
        %v2200 = vpop.f32.mrf.mxu0
        %v2201 = vadd.f32 %v2187, %v2200
        %v2202 = vpop.f32.mrf.mxu0
        %v2203 = vadd.f32 %v2189, %v2202
        %2204 = vdwg.mxu0
        %2205 = vmatpush.bf16.msra.mxu0 %v1967
        %2206 = vmatpush.bf16.msra.mxu0 %v1965
        %2207 = vmatpush.bf16.msra.mxu0 %v1963
        %2208 = vmatpush.bf16.msra.mxu0 %v1961
        %2209 = vmatpush.bf16.msra.mxu0 %v1959
        %2210 = vmatpush.bf16.msra.mxu0 %v1957
        %2211 = vmatpush.bf16.msra.mxu0 %v1955
        %2212 = vmatpush.bf16.msra.mxu0 %v1953
        %2213 = vmatmul.bf16.gmra.mxu0 %v1397
        %v2214 = vpop.f32.mrf.mxu0
        %v2215 = vadd.f32 %v2201, %v2214
        %v2216 = vpop.f32.mrf.mxu0
        %v2217 = vadd.f32 %v2203, %v2216
        %2218 = vdwg.mxu0
        %2219 = vmatpush.bf16.msra.mxu0 %v1983
        %2220 = vmatpush.bf16.msra.mxu0 %v1981
        %2221 = vmatpush.bf16.msra.mxu0 %v1979
        %2222 = vmatpush.bf16.msra.mxu0 %v1977
        %2223 = vmatpush.bf16.msra.mxu0 %v1975
        %2224 = vmatpush.bf16.msra.mxu0 %v1973
        %2225 = vmatpush.bf16.msra.mxu0 %v1971
        %2226 = vmatpush.bf16.msra.mxu0 %v1969
        %2227 = vmatmul.bf16.gmra.mxu0 %v1398
        %v2228 = vpop.f32.mrf.mxu0
        %v2229 = vadd.f32 %v2215, %v2228
        %v2230 = vpop.f32.mrf.mxu0
        %v2231 = vadd.f32 %v2217, %v2230
        %2232 = vdwg.mxu0
        %2233 = vmatpush.bf16.msra.mxu0 %v1999
        %2234 = vmatpush.bf16.msra.mxu0 %v1997
        %2235 = vmatpush.bf16.msra.mxu0 %v1995
        %2236 = vmatpush.bf16.msra.mxu0 %v1993
        %2237 = vmatpush.bf16.msra.mxu0 %v1991
        %2238 = vmatpush.bf16.msra.mxu0 %v1989
        %2239 = vmatpush.bf16.msra.mxu0 %v1987
        %2240 = vmatpush.bf16.msra.mxu0 %v1985
        %2241 = vmatmul.bf16.gmra.mxu0 %v1399
        %v2242 = vpop.f32.mrf.mxu0
        %v2243 = vadd.f32 %v2229, %v2242
        %v2244 = vpop.f32.mrf.mxu0
        %v2245 = vadd.f32 %v2231, %v2244
        %2246 = vdwg.mxu0
        %2247 = vmatpush.bf16.msra.mxu0 %v2015
        %2248 = vmatpush.bf16.msra.mxu0 %v2013
        %2249 = vmatpush.bf16.msra.mxu0 %v2011
        %2250 = vmatpush.bf16.msra.mxu0 %v2009
        %2251 = vmatpush.bf16.msra.mxu0 %v2007
        %2252 = vmatpush.bf16.msra.mxu0 %v2005
        %2253 = vmatpush.bf16.msra.mxu0 %v2003
        %2254 = vmatpush.bf16.msra.mxu0 %v2001
        %2255 = vmatmul.bf16.gmra.mxu0 %v1400
        %v2256 = vpop.f32.mrf.mxu0
        %v2257 = vadd.f32 %v2243, %v2256
        %v2258 = vpop.f32.mrf.mxu0
        %v2259 = vadd.f32 %v2245, %v2258
        %2260 = vdwg.mxu0
        %2261 = vmatpush.bf16.msra.mxu0 %v2031
        %2262 = vmatpush.bf16.msra.mxu0 %v2029
        %2263 = vmatpush.bf16.msra.mxu0 %v2027
        %2264 = vmatpush.bf16.msra.mxu0 %v2025
        %2265 = vmatpush.bf16.msra.mxu0 %v2023
        %2266 = vmatpush.bf16.msra.mxu0 %v2021
        %2267 = vmatpush.bf16.msra.mxu0 %v2019
        %2268 = vmatpush.bf16.msra.mxu0 %v2017
        %2269 = vmatmul.bf16.gmra.mxu0 %v1401
        %v2270 = vpop.f32.mrf.mxu0
        %v2271 = vadd.f32 %v2257, %v2270
        %v2272 = vpop.f32.mrf.mxu0
        %v2273 = vadd.f32 %v2259, %v2272
        %2274 = vdwg.mxu0
        %2275 = vmatpush.bf16.msra.mxu0 %v2047
        %2276 = vmatpush.bf16.msra.mxu0 %v2045
        %2277 = vmatpush.bf16.msra.mxu0 %v2043
        %2278 = vmatpush.bf16.msra.mxu0 %v2041
        %2279 = vmatpush.bf16.msra.mxu0 %v2039
        %2280 = vmatpush.bf16.msra.mxu0 %v2037
        %2281 = vmatpush.bf16.msra.mxu0 %v2035
        %2282 = vmatpush.bf16.msra.mxu0 %v2033
        %2283 = vmatmul.bf16.gmra.mxu0 %v1402
        %v2284 = vpop.f32.mrf.mxu0
        %v2285 = vadd.f32 %v2271, %v2284
        %v2286 = vpop.f32.mrf.mxu0
        %v2287 = vadd.f32 %v2273, %v2286
        %2288 = vdwg.mxu0
        %2289 = vmatpush.bf16.msra.mxu0 %v1936
        %2290 = vmatpush.bf16.msra.mxu0 %v1934
        %2291 = vmatpush.bf16.msra.mxu0 %v1932
        %2292 = vmatpush.bf16.msra.mxu0 %v1930
        %2293 = vmatpush.bf16.msra.mxu0 %v1928
        %2294 = vmatpush.bf16.msra.mxu0 %v1926
        %2295 = vmatpush.bf16.msra.mxu0 %v1924
        %2296 = vmatpush.bf16.msra.mxu0 %v1922
        %2297 = vmatmul.bf16.gmra.mxu0 %v1395
        %v2298 = vpop.f32.mrf.mxu0
        %v2299 = vadd.f32 %v1534, %v2298
        %v2300 = vpop.f32.mrf.mxu0
        %v2301 = vadd.f32 %v1534, %v2300
        %2302 = vdwg.mxu0
        %2303 = vmatpush.bf16.msra.mxu0 %v1952
        %2304 = vmatpush.bf16.msra.mxu0 %v1950
        %2305 = vmatpush.bf16.msra.mxu0 %v1948
        %2306 = vmatpush.bf16.msra.mxu0 %v1946
        %2307 = vmatpush.bf16.msra.mxu0 %v1944
        %2308 = vmatpush.bf16.msra.mxu0 %v1942
        %2309 = vmatpush.bf16.msra.mxu0 %v1940
        %2310 = vmatpush.bf16.msra.mxu0 %v1938
        %2311 = vmatmul.bf16.gmra.mxu0 %v1396
        %v2312 = vpop.f32.mrf.mxu0
        %v2313 = vadd.f32 %v2299, %v2312
        %v2314 = vpop.f32.mrf.mxu0
        %v2315 = vadd.f32 %v2301, %v2314
        %2316 = vdwg.mxu0
        %2317 = vmatpush.bf16.msra.mxu0 %v1968
        %2318 = vmatpush.bf16.msra.mxu0 %v1966
        %2319 = vmatpush.bf16.msra.mxu0 %v1964
        %2320 = vmatpush.bf16.msra.mxu0 %v1962
        %2321 = vmatpush.bf16.msra.mxu0 %v1960
        %2322 = vmatpush.bf16.msra.mxu0 %v1958
        %2323 = vmatpush.bf16.msra.mxu0 %v1956
        %2324 = vmatpush.bf16.msra.mxu0 %v1954
        %2325 = vmatmul.bf16.gmra.mxu0 %v1397
        %v2326 = vpop.f32.mrf.mxu0
        %v2327 = vadd.f32 %v2313, %v2326
        %v2328 = vpop.f32.mrf.mxu0
        %v2329 = vadd.f32 %v2315, %v2328
        %2330 = vdwg.mxu0
        %2331 = vmatpush.bf16.msra.mxu0 %v1984
        %2332 = vmatpush.bf16.msra.mxu0 %v1982
        %2333 = vmatpush.bf16.msra.mxu0 %v1980
        %2334 = vmatpush.bf16.msra.mxu0 %v1978
        %2335 = vmatpush.bf16.msra.mxu0 %v1976
        %2336 = vmatpush.bf16.msra.mxu0 %v1974
        %2337 = vmatpush.bf16.msra.mxu0 %v1972
        %2338 = vmatpush.bf16.msra.mxu0 %v1970
        %2339 = vmatmul.bf16.gmra.mxu0 %v1398
        %v2340 = vpop.f32.mrf.mxu0
        %v2341 = vadd.f32 %v2327, %v2340
        %v2342 = vpop.f32.mrf.mxu0
        %v2343 = vadd.f32 %v2329, %v2342
        %2344 = vdwg.mxu0
        %2345 = vmatpush.bf16.msra.mxu0 %v2000
        %2346 = vmatpush.bf16.msra.mxu0 %v1998
        %2347 = vmatpush.bf16.msra.mxu0 %v1996
        %2348 = vmatpush.bf16.msra.mxu0 %v1994
        %2349 = vmatpush.bf16.msra.mxu0 %v1992
        %2350 = vmatpush.bf16.msra.mxu0 %v1990
        %2351 = vmatpush.bf16.msra.mxu0 %v1988
        %2352 = vmatpush.bf16.msra.mxu0 %v1986
        %2353 = vmatmul.bf16.gmra.mxu0 %v1399
        %v2354 = vpop.f32.mrf.mxu0
        %v2355 = vadd.f32 %v2341, %v2354
        %v2356 = vpop.f32.mrf.mxu0
        %v2357 = vadd.f32 %v2343, %v2356
        %2358 = vdwg.mxu0
        %2359 = vmatpush.bf16.msra.mxu0 %v2016
        %2360 = vmatpush.bf16.msra.mxu0 %v2014
        %2361 = vmatpush.bf16.msra.mxu0 %v2012
        %2362 = vmatpush.bf16.msra.mxu0 %v2010
        %2363 = vmatpush.bf16.msra.mxu0 %v2008
        %2364 = vmatpush.bf16.msra.mxu0 %v2006
        %2365 = vmatpush.bf16.msra.mxu0 %v2004
        %2366 = vmatpush.bf16.msra.mxu0 %v2002
        %2367 = vmatmul.bf16.gmra.mxu0 %v1400
        %v2368 = vpop.f32.mrf.mxu0
        %v2369 = vadd.f32 %v2355, %v2368
        %v2370 = vpop.f32.mrf.mxu0
        %v2371 = vadd.f32 %v2357, %v2370
        %2372 = vdwg.mxu0
        %2373 = vmatpush.bf16.msra.mxu0 %v2032
        %2374 = vmatpush.bf16.msra.mxu0 %v2030
        %2375 = vmatpush.bf16.msra.mxu0 %v2028
        %2376 = vmatpush.bf16.msra.mxu0 %v2026
        %2377 = vmatpush.bf16.msra.mxu0 %v2024
        %2378 = vmatpush.bf16.msra.mxu0 %v2022
        %2379 = vmatpush.bf16.msra.mxu0 %v2020
        %2380 = vmatpush.bf16.msra.mxu0 %v2018
        %2381 = vmatmul.bf16.gmra.mxu0 %v1401
        %v2382 = vpop.f32.mrf.mxu0
        %v2383 = vadd.f32 %v2369, %v2382
        %v2384 = vpop.f32.mrf.mxu0
        %v2385 = vadd.f32 %v2371, %v2384
        %2386 = vdwg.mxu0
        %2387 = vmatpush.bf16.msra.mxu0 %v2048
        %2388 = vmatpush.bf16.msra.mxu0 %v2046
        %2389 = vmatpush.bf16.msra.mxu0 %v2044
        %2390 = vmatpush.bf16.msra.mxu0 %v2042
        %2391 = vmatpush.bf16.msra.mxu0 %v2040
        %2392 = vmatpush.bf16.msra.mxu0 %v2038
        %2393 = vmatpush.bf16.msra.mxu0 %v2036
        %2394 = vmatpush.bf16.msra.mxu0 %v2034
        %2395 = vmatmul.bf16.gmra.mxu0 %v1402
        %v2396 = vpop.f32.mrf.mxu0
        %v2397 = vadd.f32 %v2383, %v2396
        %v2398 = vpop.f32.mrf.mxu0
        %v2399 = vadd.f32 %v2385, %v2398
        %2400 = vdwg.mxu0
        %v2401 = vmax.f32 %v2285, 0.0
        %v2402 = vmax.f32 %v2397, 0.0
        %v2403 = vmax.f32 %v2287, 0.0
        %v2404 = vmax.f32 %v2399, 0.0
        %v2405 = vpack.c.bf16 %v2403, %v2401
        %v2406 = vpack.c.bf16 %v2404, %v2402
        %v2407 = vld [vmem:[%s19] sm:$0xf]
        %v2408 = vld [vmem:[%s19 + $0x4] sm:$0xf]
        %v2409 = vld [vmem:[%s19 + $0x8] sm:$0xf]
        %v2410 = vld [vmem:[%s19 + $0xc] sm:$0xf]
        %v2411 = vld [vmem:[%s19 + $0x10] sm:$0xf]
        %v2412 = vld [vmem:[%s19 + $0x14] sm:$0xf]
        %v2413 = vld [vmem:[%s19 + $0x18] sm:$0xf]
        %v2414 = vld [vmem:[%s19 + $0x1c] sm:$0xf]
        %v2415 = vld [vmem:[%s19 + $0x20] sm:$0xf]
        %v2416 = vld [vmem:[%s19 + $0x24] sm:$0xf]
        %v2417 = vld [vmem:[%s19 + $0x28] sm:$0xf]
        %v2418 = vld [vmem:[%s19 + $0x2c] sm:$0xf]
        %v2419 = vld [vmem:[%s19 + $0x30] sm:$0xf]
        %v2420 = vld [vmem:[%s19 + $0x34] sm:$0xf]
        %v2421 = vld [vmem:[%s19 + $0x38] sm:$0xf]
        %v2422 = vld [vmem:[%s19 + $0x3c] sm:$0xf]
        %v2423 = vld [vmem:[%s19 + $0x40] sm:$0xf]
        %v2424 = vld [vmem:[%s19 + $0x44] sm:$0xf]
        %v2425 = vld [vmem:[%s19 + $0x48] sm:$0xf]
        %v2426 = vld [vmem:[%s19 + $0x4c] sm:$0xf]
        %v2427 = vld [vmem:[%s19 + $0x50] sm:$0xf]
        %v2428 = vld [vmem:[%s19 + $0x54] sm:$0xf]
        %v2429 = vld [vmem:[%s19 + $0x58] sm:$0xf]
        %v2430 = vld [vmem:[%s19 + $0x5c] sm:$0xf]
        %v2431 = vld [vmem:[%s19 + $0x60] sm:$0xf]
        %v2432 = vld [vmem:[%s19 + $0x64] sm:$0xf]
        %v2433 = vld [vmem:[%s19 + $0x68] sm:$0xf]
        %v2434 = vld [vmem:[%s19 + $0x6c] sm:$0xf]
        %v2435 = vld [vmem:[%s19 + $0x70] sm:$0xf]
        %v2436 = vld [vmem:[%s19 + $0x74] sm:$0xf]
        %v2437 = vld [vmem:[%s19 + $0x78] sm:$0xf]
        %v2438 = vld [vmem:[%s19 + $0x7c] sm:$0xf]
        %v2439 = vld [vmem:[%s21] sm:$0x1]
        %v2441 = vperm.slane %v2439, 0
        %v2475 = vunpack.c.l.b16 %v2407
        %v2476 = vunpack.c.l.b16 %v2408
        %v2477 = vunpack.c.l.b16 %v2409
        %v2478 = vunpack.c.l.b16 %v2410
        %v2479 = vunpack.c.l.b16 %v2411
        %v2480 = vunpack.c.l.b16 %v2412
        %v2481 = vunpack.c.l.b16 %v2413
        %v2482 = vunpack.c.l.b16 %v2414
        %v2483 = vunpack.c.l.b16 %v2415
        %v2484 = vunpack.c.l.b16 %v2416
        %v2485 = vunpack.c.l.b16 %v2417
        %v2486 = vunpack.c.l.b16 %v2418
        %v2487 = vunpack.c.l.b16 %v2419
        %v2488 = vunpack.c.l.b16 %v2420
        %v2489 = vunpack.c.l.b16 %v2421
        %v2490 = vunpack.c.l.b16 %v2422
        %v2491 = vunpack.c.l.b16 %v2423
        %v2492 = vunpack.c.l.b16 %v2424
        %v2493 = vunpack.c.l.b16 %v2425
        %v2494 = vunpack.c.l.b16 %v2426
        %v2495 = vunpack.c.l.b16 %v2427
        %v2496 = vunpack.c.l.b16 %v2428
        %v2497 = vunpack.c.l.b16 %v2429
        %v2498 = vunpack.c.l.b16 %v2430
        %v2499 = vunpack.c.l.b16 %v2431
        %v2500 = vunpack.c.l.b16 %v2432
        %v2501 = vunpack.c.l.b16 %v2433
        %v2502 = vunpack.c.l.b16 %v2434
        %v2503 = vunpack.c.l.b16 %v2435
        %v2504 = vunpack.c.l.b16 %v2436
        %v2505 = vunpack.c.l.b16 %v2437
        %v2506 = vunpack.c.l.b16 %v2438
        %v2507 = vpack.c.b16 %v2476, %v2475
        %v2508 = vpack.c.b16 %v2478, %v2477
        %v2509 = vpack.c.b16 %v2480, %v2479
        %v2510 = vpack.c.b16 %v2482, %v2481
        %v2511 = vpack.c.b16 %v2484, %v2483
        %v2512 = vpack.c.b16 %v2486, %v2485
        %v2513 = vpack.c.b16 %v2488, %v2487
        %v2514 = vpack.c.b16 %v2490, %v2489
        %v2515 = vpack.c.b16 %v2492, %v2491
        %v2516 = vpack.c.b16 %v2494, %v2493
        %v2517 = vpack.c.b16 %v2496, %v2495
        %v2518 = vpack.c.b16 %v2498, %v2497
        %v2519 = vpack.c.b16 %v2500, %v2499
        %v2520 = vpack.c.b16 %v2502, %v2501
        %v2521 = vpack.c.b16 %v2504, %v2503
        %v2522 = vpack.c.b16 %v2506, %v2505
        %2539 = vmatpush.bf16.msra.mxu0 %v2514
        %2540 = vmatpush.bf16.msra.mxu0 %v2513
        %2541 = vmatpush.bf16.msra.mxu0 %v2512
        %2542 = vmatpush.bf16.msra.mxu0 %v2511
        %2543 = vmatpush.bf16.msra.mxu0 %v2510
        %2544 = vmatpush.bf16.msra.mxu0 %v2509
        %2545 = vmatpush.bf16.msra.mxu0 %v2508
        %2546 = vmatpush.bf16.msra.mxu0 %v2507
        %2547 = vmatmul.bf16.gmra.mxu0 %v2405
        %v2548 = vpop.f32.mrf.mxu0
        %v2549 = vadd.f32 %v2441, %v2548
        %v2550 = vpop.f32.mrf.mxu0
        %v2551 = vadd.f32 %v2441, %v2550
        %2552 = vdwg.mxu0
        %2553 = vmatpush.bf16.msra.mxu0 %v2522
        %2554 = vmatpush.bf16.msra.mxu0 %v2521
        %2555 = vmatpush.bf16.msra.mxu0 %v2520
        %2556 = vmatpush.bf16.msra.mxu0 %v2519
        %2557 = vmatpush.bf16.msra.mxu0 %v2518
        %2558 = vmatpush.bf16.msra.mxu0 %v2517
        %2559 = vmatpush.bf16.msra.mxu0 %v2516
        %2560 = vmatpush.bf16.msra.mxu0 %v2515
        %2561 = vmatmul.bf16.gmra.mxu0 %v2406
        %v2562 = vpop.f32.mrf.mxu0
        %v2563 = vadd.f32 %v2549, %v2562
        %v2564 = vpop.f32.mrf.mxu0
        %v2565 = vadd.f32 %v2551, %v2564
        %2566 = vdwg.mxu0
        %v2567 = vmax.f32 %v2563, 0.0
        %v2568 = vmax.f32 %v2565, 0.0
        %v2569 = vld [vmem:[%s1122] sm:$0xff]
        %v2570 = vld [vmem:[%s1122 + $0x8] sm:$0xff]
        %v2571 = vpack.c.bf16 %v2570, %v2569
        %v2572 = vld [vmem:[%s23] sm:$0xf]
        %v2573 = vld [vmem:[%s25] sm:$0x1]
        %v2575 = vperm.slane %v2573, 0
        %vm2577 = vcmask 64512
        %v2579 = vsel %vm2577, %v2571, 0
        %vm2581 = vcmask 1043456
        %v2583 = vsel %vm2581, %v2572, 0
        %2585 = vmatpush.bf16.msra.mxu0 0
        %2586 = vmatpush.bf16.msra.mxu0 0
        %2587 = vmatpush.bf16.msra.mxu0 0
        %2588 = vmatpush.bf16.msra.mxu0 0
        %2589 = vmatpush.bf16.msra.mxu0 0
        %2590 = vmatpush.bf16.msra.mxu0 0
        %2591 = vmatpush.bf16.msra.mxu0 0
        %2592 = vmatpush.bf16.msra.mxu0 %v2583
        %2593 = vmatmul.bf16.gmra.mxu0 %v2579
        %v2594 = vpop.f32.mrf.mxu0
        %v2595 = vadd.f32 %v2575, %v2594
        %v2596 = vpop.f32.mrf.mxu0
        %v2597 = vadd.f32 %v2575, %v2596
        %2598 = vdwg.mxu0
        %v2599 = vmax.f32 %v2595, 0.0
        %v2600 = vmax.f32 %v2597, 0.0
        %v2601 = vpack.c.bf16 %v2600, %v2599
        %v2602 = vld [vmem:[%s27] sm:$0xf]
        %v2603 = vld [vmem:[%s27 + $0x4] sm:$0xf]
        %v2604 = vld [vmem:[%s27 + $0x8] sm:$0xf]
        %v2605 = vld [vmem:[%s27 + $0xc] sm:$0xf]
        %v2606 = vld [vmem:[%s27 + $0x10] sm:$0xf]
        %v2607 = vld [vmem:[%s27 + $0x14] sm:$0xf]
        %v2608 = vld [vmem:[%s27 + $0x18] sm:$0xf]
        %v2609 = vld [vmem:[%s27 + $0x1c] sm:$0xf]
        %v2610 = vld [vmem:[%s27 + $0x20] sm:$0xf]
        %v2611 = vld [vmem:[%s27 + $0x24] sm:$0xf]
        %v2612 = vld [vmem:[%s27 + $0x28] sm:$0xf]
        %v2613 = vld [vmem:[%s27 + $0x2c] sm:$0xf]
        %v2614 = vld [vmem:[%s27 + $0x30] sm:$0xf]
        %v2615 = vld [vmem:[%s27 + $0x34] sm:$0xf]
        %v2616 = vld [vmem:[%s27 + $0x38] sm:$0xf]
        %v2617 = vld [vmem:[%s27 + $0x3c] sm:$0xf]
        %v2618 = vld [vmem:[%s29] sm:$0x1]
        %v2620 = vperm.slane %v2618, 0
        %v2638 = vunpack.c.l.b16 %v2602
        %v2639 = vunpack.c.l.b16 %v2603
        %v2640 = vunpack.c.l.b16 %v2604
        %v2641 = vunpack.c.l.b16 %v2605
        %v2642 = vunpack.c.l.b16 %v2606
        %v2643 = vunpack.c.l.b16 %v2607
        %v2644 = vunpack.c.l.b16 %v2608
        %v2645 = vunpack.c.l.b16 %v2609
        %v2646 = vunpack.c.l.b16 %v2610
        %v2647 = vunpack.c.l.b16 %v2611
        %v2648 = vunpack.c.l.b16 %v2612
        %v2649 = vunpack.c.l.b16 %v2613
        %v2650 = vunpack.c.l.b16 %v2614
        %v2651 = vunpack.c.l.b16 %v2615
        %v2652 = vunpack.c.l.b16 %v2616
        %v2653 = vunpack.c.l.b16 %v2617
        %v2654 = vpack.c.b16 %v2639, %v2638
        %v2655 = vpack.c.b16 %v2641, %v2640
        %v2656 = vpack.c.b16 %v2643, %v2642
        %v2657 = vpack.c.b16 %v2645, %v2644
        %v2658 = vpack.c.b16 %v2647, %v2646
        %v2659 = vpack.c.b16 %v2649, %v2648
        %v2660 = vpack.c.b16 %v2651, %v2650
        %v2661 = vpack.c.b16 %v2653, %v2652
        %2670 = vmatpush.bf16.msra.mxu0 %v2661
        %2671 = vmatpush.bf16.msra.mxu0 %v2660
        %2672 = vmatpush.bf16.msra.mxu0 %v2659
        %2673 = vmatpush.bf16.msra.mxu0 %v2658
        %2674 = vmatpush.bf16.msra.mxu0 %v2657
        %2675 = vmatpush.bf16.msra.mxu0 %v2656
        %2676 = vmatpush.bf16.msra.mxu0 %v2655
        %2677 = vmatpush.bf16.msra.mxu0 %v2654
        %2678 = vmatmul.bf16.gmra.mxu0 %v2601
        %v2679 = vpop.f32.mrf.mxu0
        %v2680 = vadd.f32 %v2620, %v2679
        %v2681 = vpop.f32.mrf.mxu0
        %v2682 = vadd.f32 %v2620, %v2681
        %2683 = vdwg.mxu0
        %v2684 = vmax.f32 %v2680, 0.0
        %v2685 = vmax.f32 %v2682, 0.0
        %v2686 = vld [vmem:[%s1127] sm:$0xff]
        %v2687 = vld [vmem:[%s1127 + $0x8] sm:$0xff]
        %v2688 = vpack.c.bf16 %v2687, %v2686
        %v2689 = vld [vmem:[%s31] sm:$0xf]
        %v2690 = vld [vmem:[%s31 + $0x4] sm:$0xf]
        %v2691 = vld [vmem:[%s33] sm:$0x1]
        %v2693 = vperm.slane %v2691, 0
        %v2697 = vunpack.c.l.b16 %v2689
        %v2698 = vunpack.c.l.b16 %v2690
        %v2699 = vpack.c.b16 %v2698, %v2697
        %vm2701 = vcmask 130048
        %v2703 = vsel %vm2701, %v2688, 0
        %2705 = vmatpush.bf16.msra.mxu0 0
        %2706 = vmatpush.bf16.msra.mxu0 0
        %2707 = vmatpush.bf16.msra.mxu0 0
        %2708 = vmatpush.bf16.msra.mxu0 0
        %2709 = vmatpush.bf16.msra.mxu0 0
        %2710 = vmatpush.bf16.msra.mxu0 0
        %2711 = vmatpush.bf16.msra.mxu0 0
        %2712 = vmatpush.bf16.msra.mxu0 %v2699
        %2713 = vmatmul.bf16.gmra.mxu0 %v2703
        %v2714 = vpop.f32.mrf.mxu0
        %v2715 = vadd.f32 %v2693, %v2714
        %v2716 = vpop.f32.mrf.mxu0
        %v2717 = vadd.f32 %v2693, %v2716
        %2718 = vdwg.mxu0
        %v2719 = vmax.f32 %v2715, 0.0
        %v2720 = vmax.f32 %v2717, 0.0
        %v2721 = vpack.c.bf16 %v2720, %v2719
        %v2722 = vld [vmem:[%s35] sm:$0xf]
        %v2723 = vld [vmem:[%s35 + $0x4] sm:$0xf]
        %v2724 = vld [vmem:[%s35 + $0x8] sm:$0xf]
        %v2725 = vld [vmem:[%s35 + $0xc] sm:$0xf]
        %v2726 = vld [vmem:[%s35 + $0x10] sm:$0xf]
        %v2727 = vld [vmem:[%s35 + $0x14] sm:$0xf]
        %v2728 = vld [vmem:[%s35 + $0x18] sm:$0xf]
        %v2729 = vld [vmem:[%s35 + $0x1c] sm:$0xf]
        %v2730 = vld [vmem:[%s37] sm:$0x1]
        %v2732 = vperm.slane %v2730, 0
        %v2742 = vunpack.c.l.b16 %v2722
        %v2743 = vunpack.c.l.b16 %v2723
        %v2744 = vunpack.c.l.b16 %v2724
        %v2745 = vunpack.c.l.b16 %v2725
        %v2746 = vunpack.c.l.b16 %v2726
        %v2747 = vunpack.c.l.b16 %v2727
        %v2748 = vunpack.c.l.b16 %v2728
        %v2749 = vunpack.c.l.b16 %v2729
        %v2750 = vpack.c.b16 %v2743, %v2742
        %v2751 = vpack.c.b16 %v2745, %v2744
        %v2752 = vpack.c.b16 %v2747, %v2746
        %v2753 = vpack.c.b16 %v2749, %v2748
        %vm2758 = vcmask 523264
        %v2760 = vsel %vm2758, %v2721, 0
        %2762 = vmatpush.bf16.msra.mxu0 0
        %2763 = vmatpush.bf16.msra.mxu0 0
        %2764 = vmatpush.bf16.msra.mxu0 0
        %2765 = vmatpush.bf16.msra.mxu0 0
        %2766 = vmatpush.bf16.msra.mxu0 %v2753
        %2767 = vmatpush.bf16.msra.mxu0 %v2752
        %2768 = vmatpush.bf16.msra.mxu0 %v2751
        %2769 = vmatpush.bf16.msra.mxu0 %v2750
        %2770 = vmatmul.bf16.gmra.mxu0 %v2760
        %v2771 = vpop.f32.mrf.mxu0
        %v2772 = vadd.f32 %v2732, %v2771
        %v2773 = vpop.f32.mrf.mxu0
        %v2774 = vadd.f32 %v2732, %v2773
        %2775 = vdwg.mxu0
        %v2776 = vmax.f32 %v2772, 0.0
        %v2777 = vmax.f32 %v2774, 0.0
        %v2778 = vpack.c.bf16 %v2568, %v2567
        %v2779 = vld [vmem:[%s39] sm:$0xf]
        %v2780 = vld [vmem:[%s39 + $0x4] sm:$0xf]
        %v2781 = vld [vmem:[%s39 + $0x8] sm:$0xf]
        %v2782 = vld [vmem:[%s39 + $0xc] sm:$0xf]
        %v2783 = vld [vmem:[%s41] sm:$0x1]
        %v2785 = vperm.slane %v2783, 0
        %v2791 = vunpack.c.l.b16 %v2779
        %v2792 = vunpack.c.l.b16 %v2780
        %v2793 = vunpack.c.l.b16 %v2781
        %v2794 = vunpack.c.l.b16 %v2782
        %v2795 = vpack.c.b16 %v2792, %v2791
        %v2796 = vpack.c.b16 %v2794, %v2793
        %v2800 = vsel %vm1263, %v2778, 0
        %2802 = vmatpush.bf16.msra.mxu0 0
        %2803 = vmatpush.bf16.msra.mxu0 0
        %2804 = vmatpush.bf16.msra.mxu0 0
        %2805 = vmatpush.bf16.msra.mxu0 0
        %2806 = vmatpush.bf16.msra.mxu0 0
        %2807 = vmatpush.bf16.msra.mxu0 0
        %2808 = vmatpush.bf16.msra.mxu0 %v2796
        %2809 = vmatpush.bf16.msra.mxu0 %v2795
        %2810 = vmatmul.bf16.gmra.mxu0 %v2800
        %v2811 = vpop.f32.mrf.mxu0
        %v2812 = vadd.f32 %v2785, %v2811
        %v2813 = vpop.f32.mrf.mxu0
        %v2814 = vadd.f32 %v2785, %v2813
        %2815 = vdwg.mxu0
        %v2816 = vpack.c.bf16 %v2777, %v2776
        %v2817 = vld [vmem:[%s43] sm:$0xf]
        %v2818 = vld [vmem:[%s43 + $0x4] sm:$0xf]
        %v2819 = vld [vmem:[%s43 + $0x8] sm:$0xf]
        %v2820 = vld [vmem:[%s43 + $0xc] sm:$0xf]
        %v2821 = vld [vmem:[%s45] sm:$0x1]
        %v2823 = vperm.slane %v2821, 0
        %v2829 = vunpack.c.l.b16 %v2817
        %v2830 = vunpack.c.l.b16 %v2818
        %v2831 = vunpack.c.l.b16 %v2819
        %v2832 = vunpack.c.l.b16 %v2820
        %v2833 = vpack.c.b16 %v2830, %v2829
        %v2834 = vpack.c.b16 %v2832, %v2831
        %v2838 = vsel %vm1263, %v2816, 0
        %2840 = vmatpush.bf16.msra.mxu0 0
        %2841 = vmatpush.bf16.msra.mxu0 0
        %2842 = vmatpush.bf16.msra.mxu0 0
        %2843 = vmatpush.bf16.msra.mxu0 0
        %2844 = vmatpush.bf16.msra.mxu0 0
        %2845 = vmatpush.bf16.msra.mxu0 0
        %2846 = vmatpush.bf16.msra.mxu0 %v2834
        %2847 = vmatpush.bf16.msra.mxu0 %v2833
        %2848 = vmatmul.bf16.gmra.mxu0 %v2838
        %v2849 = vpop.f32.mrf.mxu0
        %v2850 = vadd.f32 %v2823, %v2849
        %v2851 = vpop.f32.mrf.mxu0
        %v2852 = vadd.f32 %v2823, %v2851
        %2853 = vdwg.mxu0
        %v2854 = vpack.c.bf16 %v2685, %v2684
        %v2855 = vld [vmem:[%s47] sm:$0xf]
        %v2856 = vld [vmem:[%s47 + $0x4] sm:$0xf]
        %v2857 = vld [vmem:[%s47 + $0x8] sm:$0xf]
        %v2858 = vld [vmem:[%s47 + $0xc] sm:$0xf]
        %v2859 = vld [vmem:[%s49] sm:$0x1]
        %v2861 = vperm.slane %v2859, 0
        %v2867 = vunpack.c.l.b16 %v2855
        %v2868 = vunpack.c.l.b16 %v2856
        %v2869 = vunpack.c.l.b16 %v2857
        %v2870 = vunpack.c.l.b16 %v2858
        %v2871 = vpack.c.b16 %v2868, %v2867
        %v2872 = vpack.c.b16 %v2870, %v2869
        %v2876 = vsel %vm1263, %v2854, 0
        %2878 = vmatpush.bf16.msra.mxu0 0
        %2879 = vmatpush.bf16.msra.mxu0 0
        %2880 = vmatpush.bf16.msra.mxu0 0
        %2881 = vmatpush.bf16.msra.mxu0 0
        %2882 = vmatpush.bf16.msra.mxu0 0
        %2883 = vmatpush.bf16.msra.mxu0 0
        %2884 = vmatpush.bf16.msra.mxu0 %v2872
        %2885 = vmatpush.bf16.msra.mxu0 %v2871
        %2886 = vmatmul.bf16.gmra.mxu0 %v2876
        %v2887 = vpop.f32.mrf.mxu0
        %v2888 = vadd.f32 %v2861, %v2887
        %v2889 = vpop.f32.mrf.mxu0
        %v2890 = vadd.f32 %v2861, %v2889
        %2891 = vdwg.mxu0
        %v2892 = vpack.c.bf16 %v2812, %v2812
        %v2893 = vpack.c.bf16 %v2814, %v2814
        %v2894 = vpack.c.bf16 %v2850, %v2850
        %v2895 = vpack.c.bf16 %v2852, %v2852
        %v2897 = vsel %vm2701, %v2892, 0
        %v2900 = vsel %vm2701, %v2894, 0
        %2902 = vmatpush.bf16.xpose.msra.mxu0 0
        %2903 = vmatpush.bf16.xpose.msra.mxu0 0
        %2904 = vmatpush.bf16.xpose.msra.mxu0 0
        %2905 = vmatpush.bf16.xpose.msra.mxu0 0
        %2906 = vmatpush.bf16.xpose.msra.mxu0 0
        %2907 = vmatpush.bf16.xpose.msra.mxu0 0
        %2908 = vmatpush.bf16.xpose.msra.mxu0 0
        %2909 = vmatpush.bf16.xpose.msra.mxu0 %v2900
        %2910 = vmatmul.bf16.gmra.mxu0 %v2897
        %v2911 = vpop.f32.mrf.mxu0
        %v2912 = vadd.f32 0.0, %v2911
        %v2913 = vpop.f32.mrf.mxu0
        %2914 = vdwg.mxu0
        %v2916 = vsel %vm2701, %v2893, 0
        %v2919 = vsel %vm2701, %v2895, 0
        %2921 = vmatpush.bf16.xpose.msra.mxu0 0
        %2922 = vmatpush.bf16.xpose.msra.mxu0 0
        %2923 = vmatpush.bf16.xpose.msra.mxu0 0
        %2924 = vmatpush.bf16.xpose.msra.mxu0 0
        %2925 = vmatpush.bf16.xpose.msra.mxu0 0
        %2926 = vmatpush.bf16.xpose.msra.mxu0 0
        %2927 = vmatpush.bf16.xpose.msra.mxu0 0
        %2928 = vmatpush.bf16.xpose.msra.mxu0 %v2919
        %2929 = vmatmul.bf16.gmra.mxu0 %v2916
        %v2930 = vpop.f32.mrf.mxu0
        %v2931 = vadd.f32 0.0, %v2930
        %v2932 = vpop.f32.mrf.mxu0
        %2933 = vdwg.mxu0
        %v2934 = vmul.f32 %v2912, 0.25
        %v2935 = vmul.f32 %v2931, 0.25
        %v2936 = vsel %vm2577, %v2934, -inf
        %2937 = vmax.xlane.f32.xlu0 %v2936
        %v2938 = vpop.xlane.xlu0 %2937
        %v2939 = vsel %vm2577, %v2935, -inf
        %2940 = vmax.xlane.f32.xlu0 %v2939
        %v2941 = vpop.xlane.xlu0 %2940
        %v2942 = vsub.f32 %v2934, %v2938
        %v2943 = vsub.f32 %v2935, %v2941
        %v2944 = vmul.f32 %v2942, 1.442695
        %v2945 = vpow.pop %v2944
        %v2946 = vmul.f32 %v2943, 1.442695
        %v2947 = vpow.pop %v2946
        %v2948 = vsel %vm2577, %v2945, 0.0
        %2949 = vadd.xlane.f32.xlu0 %v2948
        %v2950 = vpop.xlane.xlu0 %2949
        %v2951 = vsel %vm2577, %v2947, 0.0
        %2952 = vadd.xlane.f32.xlu0 %v2951
        %v2953 = vpop.xlane.xlu0 %2952
        %v2954 = vrcp.pop %v2950
        %v2955 = vrcp.pop %v2953
        %v2956 = vmul.f32 %v2945, %v2954
        %v2957 = vmul.f32 %v2947, %v2955
        %v2958 = vpack.c.bf16 %v2956, %v2956
        %v2959 = vpack.c.bf16 %v2957, %v2957
        %v2960 = vpack.c.bf16 %v2888, %v2888
        %v2961 = vpack.c.bf16 %v2890, %v2890
        %v2963 = vsel %vm2577, %v2958, 0
        %v2966 = vsel %vm2581, %v2960, 0
        %2968 = vmatpush.bf16.msra.mxu0 0
        %2969 = vmatpush.bf16.msra.mxu0 0
        %2970 = vmatpush.bf16.msra.mxu0 0
        %2971 = vmatpush.bf16.msra.mxu0 0
        %2972 = vmatpush.bf16.msra.mxu0 0
        %2973 = vmatpush.bf16.msra.mxu0 0
        %2974 = vmatpush.bf16.msra.mxu0 0
        %2975 = vmatpush.bf16.msra.mxu0 %v2966
        %2976 = vmatmul.bf16.gmra.mxu0 %v2963
        %v2977 = vpop.f32.mrf.mxu0
        %v2978 = vadd.f32 0.0, %v2977
        %v2979 = vpop.f32.mrf.mxu0
        %2980 = vdwg.mxu0
        %v2982 = vsel %vm2577, %v2959, 0
        %v2985 = vsel %vm2581, %v2961, 0
        %2987 = vmatpush.bf16.msra.mxu0 0
        %2988 = vmatpush.bf16.msra.mxu0 0
        %2989 = vmatpush.bf16.msra.mxu0 0
        %2990 = vmatpush.bf16.msra.mxu0 0
        %2991 = vmatpush.bf16.msra.mxu0 0
        %2992 = vmatpush.bf16.msra.mxu0 0
        %2993 = vmatpush.bf16.msra.mxu0 0
        %2994 = vmatpush.bf16.msra.mxu0 %v2985
        %2995 = vmatmul.bf16.gmra.mxu0 %v2982
        %v2996 = vpop.f32.mrf.mxu0
        %v2997 = vadd.f32 0.0, %v2996
        %v2998 = vpop.f32.mrf.mxu0
        %2999 = vdwg.mxu0
        %v3000 = vsel %vm2701, %v2978, 0.0
        %v3001 = vrot.slane %v3000, 4
        %v3002 = vadd.f32 %v3000, %v3001
        %v3003 = vrot.slane %v3002, 2
        %v3004 = vadd.f32 %v3002, %v3003
        %v3005 = vrot.slane %v3004, 1
        %v3006 = vadd.f32 %v3004, %v3005
        %v3007 = vsel %vm2701, %v2997, 0.0
        %v3008 = vrot.slane %v3007, 4
        %v3009 = vadd.f32 %v3007, %v3008
        %v3010 = vrot.slane %v3009, 2
        %v3011 = vadd.f32 %v3009, %v3010
        %v3012 = vrot.slane %v3011, 1
        %v3013 = vadd.f32 %v3011, %v3012
        %v3014 = vpack.c.bf16 %v3006, %v3006
        %v3015 = vpack.c.bf16 %v3013, %v3013
        %v3016 = vld [vmem:[%s51] sm:$0xf]
        %v3017 = vld [vmem:[%s51 + $0x4] sm:$0xf]
        %v3019 = vunpack.c.l.b16 %v2892
        %v3020 = vpack.c.b16 %v3019, %v3019
        %3021 = vrot.lane.b32.xlu0 %v3020, 112
        %v3022 = vpop.permute.xlu0 %3021
        %v3024 = vunpack.c.l.b16 %v2894
        %v3025 = vpack.c.b16 %v3024, %v3024
        %3026 = vrot.lane.b32.xlu0 %v3025, 112
        %v3027 = vpop.permute.xlu0 %3026
        %v3029 = vsel %vm2701, %v3022, 0
        %v3032 = vsel %vm2701, %v3027, 0
        %3034 = vmatpush.bf16.xpose.msra.mxu0 0
        %3035 = vmatpush.bf16.xpose.msra.mxu0 0
        %3036 = vmatpush.bf16.xpose.msra.mxu0 0
        %3037 = vmatpush.bf16.xpose.msra.mxu0 0
        %3038 = vmatpush.bf16.xpose.msra.mxu0 0
        %3039 = vmatpush.bf16.xpose.msra.mxu0 0
        %3040 = vmatpush.bf16.xpose.msra.mxu0 0
        %3041 = vmatpush.bf16.xpose.msra.mxu0 %v3032
        %3042 = vmatmul.bf16.gmra.mxu0 %v3029
        %v3043 = vpop.f32.mrf.mxu0
        %v3044 = vadd.f32 0.0, %v3043
        %v3045 = vpop.f32.mrf.mxu0
        %3046 = vdwg.mxu0
        %v3048 = vunpack.c.l.b16 %v2893
        %v3049 = vpack.c.b16 %v3048, %v3048
        %3050 = vrot.lane.b32.xlu0 %v3049, 112
        %v3051 = vpop.permute.xlu0 %3050
        %v3053 = vunpack.c.l.b16 %v2895
        %v3054 = vpack.c.b16 %v3053, %v3053
        %3055 = vrot.lane.b32.xlu0 %v3054, 112
        %v3056 = vpop.permute.xlu0 %3055
        %v3058 = vsel %vm2701, %v3051, 0
        %v3061 = vsel %vm2701, %v3056, 0
        %3063 = vmatpush.bf16.xpose.msra.mxu0 0
        %3064 = vmatpush.bf16.xpose.msra.mxu0 0
        %3065 = vmatpush.bf16.xpose.msra.mxu0 0
        %3066 = vmatpush.bf16.xpose.msra.mxu0 0
        %3067 = vmatpush.bf16.xpose.msra.mxu0 0
        %3068 = vmatpush.bf16.xpose.msra.mxu0 0
        %3069 = vmatpush.bf16.xpose.msra.mxu0 0
        %3070 = vmatpush.bf16.xpose.msra.mxu0 %v3061
        %3071 = vmatmul.bf16.gmra.mxu0 %v3058
        %v3072 = vpop.f32.mrf.mxu0
        %v3073 = vadd.f32 0.0, %v3072
        %v3074 = vpop.f32.mrf.mxu0
        %3075 = vdwg.mxu0
        %v3076 = vmul.f32 %v3044, 0.25
        %v3077 = vmul.f32 %v3073, 0.25
        %v3078 = vsel %vm2577, %v3076, -inf
        %3079 = vmax.xlane.f32.xlu0 %v3078
        %v3080 = vpop.xlane.xlu0 %3079
        %v3081 = vsel %vm2577, %v3077, -inf
        %3082 = vmax.xlane.f32.xlu0 %v3081
        %v3083 = vpop.xlane.xlu0 %3082
        %v3084 = vsub.f32 %v3076, %v3080
        %v3085 = vsub.f32 %v3077, %v3083
        %v3086 = vmul.f32 %v3084, 1.442695
        %v3087 = vpow.pop %v3086
        %v3088 = vmul.f32 %v3085, 1.442695
        %v3089 = vpow.pop %v3088
        %v3090 = vsel %vm2577, %v3087, 0.0
        %3091 = vadd.xlane.f32.xlu0 %v3090
        %v3092 = vpop.xlane.xlu0 %3091
        %v3093 = vsel %vm2577, %v3089, 0.0
        %3094 = vadd.xlane.f32.xlu0 %v3093
        %v3095 = vpop.xlane.xlu0 %3094
        %v3096 = vrcp.pop %v3092
        %v3097 = vrcp.pop %v3095
        %v3098 = vmul.f32 %v3087, %v3096
        %v3099 = vmul.f32 %v3089, %v3097
        %v3100 = vadd.f32 %v2956, %v3098
        %v3101 = vadd.f32 %v2957, %v3099
        %v3102 = vpack.c.bf16 %v3098, %v3098
        %v3103 = vpack.c.bf16 %v3099, %v3099
        %v3105 = vunpack.c.l.b16 %v2960
        %v3106 = vpack.c.b16 %v3105, %v3105
        %3107 = vrot.lane.b32.xlu0 %v3106, 112
        %v3108 = vpop.permute.xlu0 %3107
        %v3110 = vsel %vm2577, %v3102, 0
        %v3113 = vsel %vm2581, %v3108, 0
        %3115 = vmatpush.bf16.msra.mxu0 0
        %3116 = vmatpush.bf16.msra.mxu0 0
        %3117 = vmatpush.bf16.msra.mxu0 0
        %3118 = vmatpush.bf16.msra.mxu0 0
        %3119 = vmatpush.bf16.msra.mxu0 0
        %3120 = vmatpush.bf16.msra.mxu0 0
        %3121 = vmatpush.bf16.msra.mxu0 0
        %3122 = vmatpush.bf16.msra.mxu0 %v3113
        %3123 = vmatmul.bf16.gmra.mxu0 %v3110
        %v3124 = vpop.f32.mrf.mxu0
        %v3125 = vadd.f32 0.0, %v3124
        %v3126 = vpop.f32.mrf.mxu0
        %3127 = vdwg.mxu0
        %v3129 = vunpack.c.l.b16 %v2961
        %v3130 = vpack.c.b16 %v3129, %v3129
        %3131 = vrot.lane.b32.xlu0 %v3130, 112
        %v3132 = vpop.permute.xlu0 %3131
        %v3134 = vsel %vm2577, %v3103, 0
        %v3137 = vsel %vm2581, %v3132, 0
        %3139 = vmatpush.bf16.msra.mxu0 0
        %3140 = vmatpush.bf16.msra.mxu0 0
        %3141 = vmatpush.bf16.msra.mxu0 0
        %3142 = vmatpush.bf16.msra.mxu0 0
        %3143 = vmatpush.bf16.msra.mxu0 0
        %3144 = vmatpush.bf16.msra.mxu0 0
        %3145 = vmatpush.bf16.msra.mxu0 0
        %3146 = vmatpush.bf16.msra.mxu0 %v3137
        %3147 = vmatmul.bf16.gmra.mxu0 %v3134
        %v3148 = vpop.f32.mrf.mxu0
        %v3149 = vadd.f32 0.0, %v3148
        %v3150 = vpop.f32.mrf.mxu0
        %3151 = vdwg.mxu0
        %v3152 = vsel %vm2701, %v3125, 0.0
        %v3153 = vrot.slane %v3152, 4
        %v3154 = vadd.f32 %v3152, %v3153
        %v3155 = vrot.slane %v3154, 2
        %v3156 = vadd.f32 %v3154, %v3155
        %v3157 = vrot.slane %v3156, 1
        %v3158 = vadd.f32 %v3156, %v3157
        %v3159 = vsel %vm2701, %v3149, 0.0
        %v3160 = vrot.slane %v3159, 4
        %v3161 = vadd.f32 %v3159, %v3160
        %v3162 = vrot.slane %v3161, 2
        %v3163 = vadd.f32 %v3161, %v3162
        %v3164 = vrot.slane %v3163, 1
        %v3165 = vadd.f32 %v3163, %v3164
        %v3166 = vpack.c.bf16 %v3158, %v3158
        %v3167 = vpack.c.bf16 %v3165, %v3165
        %v3168 = vld [vmem:[%s51 + $0x8] sm:$0xf]
        %v3169 = vld [vmem:[%s51 + $0xc] sm:$0xf]
        %v3172 = vunpack.c.l.b16 %v3166
        %v3173 = vunpack.c.l.b16 %v3167
        %vm3174 = vcmask 1041409
        %v3175 = vsel %vm3174, %v3173, %v3172
        %v3176 = vpack.c.b16 %v3175, %v3175
        %v3179 = vunpack.c.l.b16 %v3168
        %v3180 = vunpack.c.l.b16 %v3169
        %v3181 = vpack.c.b16 %v3180, %v3179
        %v3184 = vsel %vm2701, %v3176, 0
        %3186 = vmatpush.bf16.msra.mxu0 0
        %3187 = vmatpush.bf16.msra.mxu0 0
        %3188 = vmatpush.bf16.msra.mxu0 0
        %3189 = vmatpush.bf16.msra.mxu0 0
        %3190 = vmatpush.bf16.msra.mxu0 0
        %3191 = vmatpush.bf16.msra.mxu0 0
        %3192 = vmatpush.bf16.msra.mxu0 0
        %3193 = vmatpush.bf16.msra.mxu0 %v3181
        %3194 = vmatmul.bf16.gmra.mxu0 %v3184
        %v3195 = vpop.f32.mrf.mxu0
        %v3196 = vadd.f32 0.0, %v3195
        %v3197 = vpop.f32.mrf.mxu0
        %3198 = vdwg.mxu0
        %v3201 = vunpack.c.l.b16 %v3014
        %v3202 = vunpack.c.l.b16 %v3015
        %v3203 = vsel %vm3174, %v3202, %v3201
        %v3204 = vpack.c.b16 %v3203, %v3203
        %v3207 = vunpack.c.l.b16 %v3016
        %v3208 = vunpack.c.l.b16 %v3017
        %v3209 = vpack.c.b16 %v3208, %v3207
        %v3212 = vsel %vm2701, %v3204, 0
        %3214 = vmatpush.bf16.msra.mxu0 0
        %3215 = vmatpush.bf16.msra.mxu0 0
        %3216 = vmatpush.bf16.msra.mxu0 0
        %3217 = vmatpush.bf16.msra.mxu0 0
        %3218 = vmatpush.bf16.msra.mxu0 0
        %3219 = vmatpush.bf16.msra.mxu0 0
        %3220 = vmatpush.bf16.msra.mxu0 0
        %3221 = vmatpush.bf16.msra.mxu0 %v3209
        %3222 = vmatmul.bf16.gmra.mxu0 %v3212
        %v3223 = vpop.f32.mrf.mxu0
        %v3224 = vadd.f32 %v3196, %v3223
        %v3225 = vpop.f32.mrf.mxu0
        %3226 = vdwg.mxu0
        %v3227 = vld [vmem:[%s53] sm:$0x1]
        %v3228 = vmul.f32 %v3227, 8.0
        %v3230 = vperm.slane %v3228, 0
        %v3232 = vadd.f32 %v3224, %v3230
        %v3233 = vld [vmem:[%s1131] sm:$0x3]
        %v3234 = vld [vmem:[%s1135] sm:$0x3]
        %v3235 = vpack.c.bf16 %v3232, %v3232
        %v3236 = vld [vmem:[%s55] sm:$0xf]
        %v3237 = vld [vmem:[%s55 + $0x4] sm:$0xf]
        %v3238 = vld [vmem:[%s55 + $0x8] sm:$0xf]
        %v3239 = vld [vmem:[%s55 + $0xc] sm:$0xf]
        %v3240 = vpack.c.bf16 %v3233, %v3233
        %v3241 = vld [vmem:[%s57] sm:$0x3]
        %vm3242 = vcmask 31744
        %v3244 = vsel %vm3242, %v3240, 0
        %vm3246 = vcmask 1041408
        %v3248 = vsel %vm3246, %v3241, 0
        %3250 = vmatpush.bf16.msra.mxu0 0
        %3251 = vmatpush.bf16.msra.mxu0 0
        %3252 = vmatpush.bf16.msra.mxu0 0
        %3253 = vmatpush.bf16.msra.mxu0 0
        %3254 = vmatpush.bf16.msra.mxu0 0
        %3255 = vmatpush.bf16.msra.mxu0 0
        %3256 = vmatpush.bf16.msra.mxu0 0
        %3257 = vmatpush.bf16.msra.mxu0 %v3248
        %3258 = vmatmul.bf16.gmra.mxu0 %v3244
        %v3259 = vpop.f32.mrf.mxu0
        %v3260 = vadd.f32 0.0, %v3259
        %v3261 = vpop.f32.mrf.mxu0
        %3262 = vdwg.mxu0
        %v3267 = vunpack.c.l.b16 %v3236
        %v3268 = vunpack.c.l.b16 %v3237
        %v3269 = vunpack.c.l.b16 %v3238
        %v3270 = vunpack.c.l.b16 %v3239
        %v3271 = vpack.c.b16 %v3268, %v3267
        %v3272 = vpack.c.b16 %v3270, %v3269
        %v3276 = vsel %vm1263, %v3235, 0
        %3278 = vmatpush.bf16.msra.mxu0 0
        %3279 = vmatpush.bf16.msra.mxu0 0
        %3280 = vmatpush.bf16.msra.mxu0 0
        %3281 = vmatpush.bf16.msra.mxu0 0
        %3282 = vmatpush.bf16.msra.mxu0 0
        %3283 = vmatpush.bf16.msra.mxu0 0
        %3284 = vmatpush.bf16.msra.mxu0 %v3272
        %3285 = vmatpush.bf16.msra.mxu0 %v3271
        %3286 = vmatmul.bf16.gmra.mxu0 %v3276
        %v3287 = vpop.f32.mrf.mxu0
        %v3288 = vadd.f32 %v3260, %v3287
        %v3289 = vpop.f32.mrf.mxu0
        %3290 = vdwg.mxu0
        %v3291 = vpack.c.bf16 %v3234, %v3234
        %v3292 = vld [vmem:[%s59] sm:$0x3]
        %v3294 = vsel %vm3242, %v3291, 0
        %v3297 = vsel %vm3246, %v3292, 0
        %3299 = vmatpush.bf16.msra.mxu0 0
        %3300 = vmatpush.bf16.msra.mxu0 0
        %3301 = vmatpush.bf16.msra.mxu0 0
        %3302 = vmatpush.bf16.msra.mxu0 0
        %3303 = vmatpush.bf16.msra.mxu0 0
        %3304 = vmatpush.bf16.msra.mxu0 0
        %3305 = vmatpush.bf16.msra.mxu0 0
        %3306 = vmatpush.bf16.msra.mxu0 %v3297
        %3307 = vmatmul.bf16.gmra.mxu0 %v3294
        %v3308 = vpop.f32.mrf.mxu0
        %v3309 = vadd.f32 0.0, %v3308
        %v3310 = vpop.f32.mrf.mxu0
        %3311 = vdwg.mxu0
        %v3312 = vadd.f32 %v3288, %v3309
        %v3313 = vld [vmem:[%s61] sm:$0x1]
        %v3315 = vperm.slane %v3313, 0
        %v3317 = vadd.f32 %v3312, %v3315
        %v3318 = vmax.f32 %v3317, 0.0
        %v3319 = vpack.c.bf16 %v3318, %v3318
        %v3320 = vld [vmem:[%s63] sm:$0xf]
        %v3321 = vld [vmem:[%s63 + $0x4] sm:$0xf]
        %v3322 = vld [vmem:[%s65] sm:$0x1]
        %v3324 = vperm.slane %v3322, 0
        %v3328 = vunpack.c.l.b16 %v3320
        %v3329 = vunpack.c.l.b16 %v3321
        %v3330 = vpack.c.b16 %v3329, %v3328
        %v3333 = vsel %vm2701, %v3319, 0
        %3335 = vmatpush.bf16.msra.mxu0 0
        %3336 = vmatpush.bf16.msra.mxu0 0
        %3337 = vmatpush.bf16.msra.mxu0 0
        %3338 = vmatpush.bf16.msra.mxu0 0
        %3339 = vmatpush.bf16.msra.mxu0 0
        %3340 = vmatpush.bf16.msra.mxu0 0
        %3341 = vmatpush.bf16.msra.mxu0 0
        %3342 = vmatpush.bf16.msra.mxu0 %v3330
        %3343 = vmatmul.bf16.gmra.mxu0 %v3333
        %v3344 = vpop.f32.mrf.mxu0
        %v3345 = vadd.f32 %v3324, %v3344
        %v3346 = vpop.f32.mrf.mxu0
        %3347 = vdwg.mxu0
        %vm3348 = vcmask 123904
        %3349 = vst.msk [vmem:[%s1139] sm:$0x3] %vm3348, %v3345
        %v3350 = vmul.f32 %v3100, 0.5
        %v3351 = vmul.f32 %v3101, 0.5
        %3352 = vst.msk [vmem:[%s1144] sm:$0xff] %vm2577, %v3350
        %3353 = vst.msk [vmem:[%s1144 + $0x8] sm:$0xff] %vm2577, %v3351
        %p3354 = scmp.lt.s32.totalorder %s82, 1
        %s3355 = scalar_select %p3354, %s82, 1
        %s3356 = smul.addr %s3355, 2
        %s3357 = scalar_lea.vmem %s67, %s3356
        %p3358 = scmp.lt.s32.totalorder %s82, 1
        %s3359 = scalar_select %p3358, %s82, 1
        %s3360 = smul.addr %s3359, 2
        %s3361 = smul.addr %s3360, 8
        %s3362 = scalar_lea.vmem %s69, %s3361
        // Predicated region
        $region157: #{fc_charnet_forward.1} parent=151 // pred_check
          %p3363 = pneg %p818
        $region158: #{fc_charnet_forward.1} parent=151 // pred_check_branch
          %3365 = sbr.rel (%p3363) target = $region160
        $region159: #{fc_charnet_forward.1} parent=151 // pred_region
          _
        $region160: #{fc_charnet_forward.1} parent=151 // pred_fallthru
          _
        // Predicated region
        $region161: #{fc_charnet_forward.1} parent=151 // pred_check
          %p3366 = pneg %p844
        $region162: #{fc_charnet_forward.1} parent=151 // pred_check_branch
          %3368 = sbr.rel (%p3366) target = $region164
        $region163: #{fc_charnet_forward.1} parent=151 // pred_region
          _
        $region164: #{fc_charnet_forward.1} parent=151 // pred_fallthru
          _
      $region152: #{fc_charnet_forward.1} parent=5 // pred_fallthru
        _
      %p3369 = scmp.le.s32.totalorder 2, %s77
      // Predicated region
      $region165: #{fc_charnet_forward.1} parent=5 // pred_check
        %p3370 = pneg %p3369
      $region166: #{fc_charnet_forward.1} parent=5 // pred_check_branch
        %3372 = sbr.rel (%p3370) target = $region168
      $region167: #{fc_charnet_forward.1} parent=5 // pred_region
        %s3373 = ssub.s32 %s77, 2
        // Predicated region
        $region169: #{fc_charnet_forward.1} parent=167 // pred_check
          %p3374 = pneg %p824
        $region170: #{fc_charnet_forward.1} parent=167 // pred_check_branch
          %3376 = sbr.rel (%p3374) target = $region172
        $region171: #{fc_charnet_forward.1} parent=167 // pred_region
          %p3377 = scmp.lt.s32.totalorder %s83, 1
          %s3378 = scalar_select %p3377, %s83, 1
          %s3379 = smul.addr %s3378, 2
          %s3380 = scalar_lea.vmem %s67, %s3379
        $region172: #{fc_charnet_forward.1} parent=167 // pred_fallthru
          _
        // Predicated region
        $region173: #{fc_charnet_forward.1} parent=167 // pred_check
          %p3381 = pneg %p850
        $region174: #{fc_charnet_forward.1} parent=167 // pred_check_branch
          %3383 = sbr.rel (%p3381) target = $region176
        $region175: #{fc_charnet_forward.1} parent=167 // pred_region
          %p3384 = scmp.lt.s32.totalorder %s83, 1
          %s3385 = scalar_select %p3384, %s83, 1
          %s3386 = smul.addr %s3385, 2
          %s3387 = smul.addr %s3386, 8
          %s3388 = scalar_lea.vmem %s69, %s3387
        $region176: #{fc_charnet_forward.1} parent=167 // pred_fallthru
          _
      $region168: #{fc_charnet_forward.1} parent=5 // pred_fallthru
        _
    $region6: #{fc_charnet_forward.1} parent=1 // loop_footer
      %s81 = sadd.s32 1, %s77
    $region7: #{fc_charnet_forward.1} parent=1 // loop_footer_branch
      %76 = sbr.rel target = $region3
    $region8: #{fc_charnet_forward.1} parent=1 // loop_exit
      _
    %3389 = vsyncpa [#allocation3], 1
    %s3390 = scalar_lea.sflag [#allocation3], 1
    %3391 = vsyncpa %s3390, 1

</llo_original>
